<compile_context>
chip_gen: v6e
topology: v6e:2x2x1
jax: 0.10.0
libtpu: 0.0.40
codegen_flags: <defaults>
</compile_context>

<pallas_src>
import jax
import jax.numpy as jnp
import numpy as np
from jax.experimental import pallas as pl
from jax.experimental.pallas import tpu as pltpu


# ----------------------------------------------------------------------------
# Fused kernel: attention (U/W/tanh/score/softmax) + weighted context +
#               one bidirectional LSTM step (both directions in one matmul) +
#               fc_out (three-slab matmul sum).
# ----------------------------------------------------------------------------
def decoder_fused_kernel(emb_ref, enc_ref, hid_ref, cell_ref,
                         Uw_ref, Ww_ref, attnb_ref, Aw_ref,
                         Wih_m_ref, Wih_e_ref, Whh_ref, b_ref,
                         fcw_out_ref, fcw_wt_ref, fcw_emb_ref, fcb_ref,
                         pred_ref, h_new_ref, c_new_ref, alpha_ref):
    B, S, E = enc_ref.shape
    A = Uw_ref.shape[-1]
    D = hid_ref.shape[-1]
    bf = jnp.bfloat16

    enc = enc_ref[...]                                   # (B, S, E) f32
    emb = emb_ref[...]                                   # (B, M)    f32
    h_last = hid_ref[1]                                  # (B, D) == hidden[-1]

    # ---- attention ----------------------------------------------------------
    # u_hs = U(encoder_outputs): one unbatched MXU matmul on (B*S, E).
    enc2d = enc.reshape(B * S, E)
    u = jnp.dot(enc2d.astype(bf), Uw_ref[...],
                preferred_element_type=jnp.float32)                    # (B*S, A)
    u = u.reshape(B, S, A)

    # w_ah = W(hidden[-1]); attnb already holds (U.bias + W.bias) pre-folded.
    w_ah = jnp.dot(h_last.astype(bf), Ww_ref[...],
                   preferred_element_type=jnp.float32) + attnb_ref[...]  # (B, A)

    combined = jnp.tanh(u + w_ah[:, None, :])                          # (B, S, A)

    # attention_scores = A(combined).squeeze(2)
    # (A-bias is a per-row constant -> softmax-invariant -> dropped host-side)
    scores = jnp.sum(combined * Aw_ref[...][None], axis=-1)            # (B, S)

    # softmax over the sequence dim
    m = jnp.max(scores, axis=1, keepdims=True)
    e = jnp.exp(scores - m)
    alpha = e * pl.reciprocal(jnp.sum(e, axis=1, keepdims=True), approx=False)
    alpha_ref[...] = alpha                                             # (B, S)

    # weighted = bmm(alpha.unsqueeze(1), encoder_outputs).squeeze(1)
    weighted = jnp.sum(alpha[:, :, None] * enc, axis=1)                # (B, E) f32

    # ---- bidirectional LSTM, single timestep, both directions fused ---------
    # rnn_input = concat(embedded, weighted)  ->  sum of two matmuls against the
    # pre-split input-weight slabs; gate width is 8D (4 gates x 2 directions).
    h_cat = jnp.concatenate([hid_ref[0], hid_ref[1]], axis=1)          # (B, 2D)
    gates = (jnp.dot(emb.astype(bf), Wih_m_ref[...],
                     preferred_element_type=jnp.float32)
             + jnp.dot(weighted.astype(bf), Wih_e_ref[...],
                       preferred_element_type=jnp.float32)
             + jnp.dot(h_cat.astype(bf), Whh_ref[...],
                       preferred_element_type=jnp.float32)
             + b_ref[...])                                             # (B, 8D)

    def lstm_dir(d):                     # PyTorch gate order: i, f, g, o
        g = gates[:, d * 4 * D:(d + 1) * 4 * D]
        i = jax.nn.sigmoid(g[:, 0:D])
        f = jax.nn.sigmoid(g[:, D:2 * D])
        gg = jnp.tanh(g[:, 2 * D:3 * D])
        o = jax.nn.sigmoid(g[:, 3 * D:4 * D])
        c_n = f * cell_ref[d] + i * gg
        h_n = o * jnp.tanh(c_n)
        return h_n, c_n

    h0, c0 = lstm_dir(0)
    h1, c1 = lstm_dir(1)
    h_new_ref[0] = h0
    h_new_ref[1] = h1
    c_new_ref[0] = c0
    c_new_ref[1] = c1
    out = jnp.concatenate([h0, h1], axis=1)                            # (B, 2D)

    # ---- fc_out: concat(out, weighted, emb) @ fc_w  ==  sum of 3 matmuls -----
    pred = (jnp.dot(out.astype(bf), fcw_out_ref[...],
                    preferred_element_type=jnp.float32)
            + jnp.dot(weighted.astype(bf), fcw_wt_ref[...],
                      preferred_element_type=jnp.float32)
            + jnp.dot(emb.astype(bf), fcw_emb_ref[...],
                      preferred_element_type=jnp.float32)
            + fcb_ref[...])                                            # (B, V)
    pred_ref[...] = pred


# ----------------------------------------------------------------------------
# Host-side weight preparation (done once): split / fuse / fold / bf16-cast.
# ----------------------------------------------------------------------------
def prepare_kernel_params(p):
    bf = jnp.bfloat16
    M = p["emb"].shape[1]
    D = p["Whh"].shape[1]
    E = p["Uw"].shape[0]
    Wih = p["Wih"]                                                     # (2, M+E, 4D)

    # split Wih into the embedded-part and weighted-part slabs and concat the two
    # directions along the gate axis  -> (M, 8D) and (E, 8D)
    Wih_m = jnp.concatenate([Wih[0, :M], Wih[1, :M]], axis=1).astype(bf)
    Wih_e = jnp.concatenate([Wih[0, M:], Wih[1, M:]], axis=1).astype(bf)

    # block-diagonal recurrent weights so h_cat @ Whh_bd = [h0@Whh0 | h1@Whh1]
    Whh_bd = jnp.zeros((2 * D, 8 * D), jnp.float32)
    Whh_bd = Whh_bd.at[:D, :4 * D].set(p["Whh"][0])
    Whh_bd = Whh_bd.at[D:, 4 * D:].set(p["Whh"][1])
    Whh_bd = Whh_bd.astype(bf)

    # pre-fold bih + bhh, concat directions  -> (1, 8D)
    b = jnp.concatenate([p["bih"][0, 0] + p["bhh"][0, 0],
                         p["bih"][1, 0] + p["bhh"][1, 0]])[None, :]

    # attention bias fold: U.bias + W.bias added once to w_ah.
    # A.bias is a per-row constant under softmax -> dropped entirely.
    attnb = p["Ub"] + p["Wb"]                                          # (1, A)

    # split fc_w into the (out, weighted, emb) row slabs
    fc_w = p["fc_w"]
    fcw_out = fc_w[:2 * D].astype(bf)
    fcw_wt = fc_w[2 * D:2 * D + E].astype(bf)
    fcw_emb = fc_w[2 * D + E:].astype(bf)

    return dict(
        Uw=p["Uw"].astype(bf), Ww=p["Ww"].astype(bf), attnb=attnb, Aw=p["Aw"],
        Wih_m=Wih_m, Wih_e=Wih_e, Whh_bd=Whh_bd, b=b,
        fcw_out=fcw_out, fcw_wt=fcw_wt, fcw_emb=fcw_emb,
        fcb=p["fc_b"][None, :],
    )


# ----------------------------------------------------------------------------
# Decoder forward (embedding gather in JAX glue, everything else in one kernel)
# ----------------------------------------------------------------------------
def decoder_forward(tokens, encoder_outputs, hidden, cell, emb_table, kp):
    # embedded = dropout(embedding(input.unsqueeze(0)))
    # TODO(synk): dropout is identity (eval mode); the B-row embedding gather stays
    # in JAX glue (an in-kernel scalar-prefetch gather is possible but negligible here).
    embedded = emb_table[tokens]                                       # (B, M)

    B, S, E = encoder_outputs.shape
    D = hidden.shape[-1]
    M = embedded.shape[1]
    A = kp["Uw"].shape[1]
    V = kp["fcb"].shape[1]

    pred, h_new, c_new, alpha = pl.pallas_call(
        decoder_fused_kernel,
        out_shape=(jax.ShapeDtypeStruct((B, V), jnp.float32),
                   jax.ShapeDtypeStruct((2, B, D), jnp.float32),
                   jax.ShapeDtypeStruct((2, B, D), jnp.float32),
                   jax.ShapeDtypeStruct((B, S), jnp.float32)),
        grid=(1,),
        in_specs=[
            pl.BlockSpec((B, M), lambda i: (0, 0)),
            pl.BlockSpec((B, S, E), lambda i: (0, 0, 0)),
            pl.BlockSpec((2, B, D), lambda i: (0, 0, 0)),
            pl.BlockSpec((2, B, D), lambda i: (0, 0, 0)),
            pl.BlockSpec((E, A), lambda i: (0, 0)),
            pl.BlockSpec((D, A), lambda i: (0, 0)),
            pl.BlockSpec((1, A), lambda i: (0, 0)),
            pl.BlockSpec((1, A), lambda i: (0, 0)),
            pl.BlockSpec((M, 8 * D), lambda i: (0, 0)),
            pl.BlockSpec((E, 8 * D), lambda i: (0, 0)),
            pl.BlockSpec((2 * D, 8 * D), lambda i: (0, 0)),
            pl.BlockSpec((1, 8 * D), lambda i: (0, 0)),
            pl.BlockSpec((2 * D, V), lambda i: (0, 0)),
            pl.BlockSpec((E, V), lambda i: (0, 0)),
            pl.BlockSpec((M, V), lambda i: (0, 0)),
            pl.BlockSpec((1, V), lambda i: (0, 0)),
        ],
        out_specs=(pl.BlockSpec((B, V), lambda i: (0, 0)),
                   pl.BlockSpec((2, B, D), lambda i: (0, 0, 0)),
                   pl.BlockSpec((2, B, D), lambda i: (0, 0, 0)),
                   pl.BlockSpec((B, S), lambda i: (0, 0))),
        compiler_params=pltpu.CompilerParams(dimension_semantics=("arbitrary",)),
    )(embedded, encoder_outputs, hidden, cell,
      kp["Uw"], kp["Ww"], kp["attnb"], kp["Aw"],
      kp["Wih_m"], kp["Wih_e"], kp["Whh_bd"], kp["b"],
      kp["fcw_out"], kp["fcw_wt"], kp["fcw_emb"], kp["fcb"])
    return pred, h_new, c_new, alpha


# ----------------------------------------------------------------------------
# Pure-JAX f32 reference (same math) for a sanity check
# ----------------------------------------------------------------------------
def reference_forward(tokens, enc, hidden, cell, p):
    D = hidden.shape[-1]
    emb = p["emb"][tokens]
    u = jnp.einsum("bse,ea->bsa", enc, p["Uw"]) + p["Ub"][0]
    w_ah = hidden[-1] @ p["Ww"] + p["Wb"][0]
    combined = jnp.tanh(u + w_ah[:, None, :])
    scores = jnp.einsum("bsa,a->bs", combined, p["Aw"][0]) + p["Ab"][0, 0]
    alpha = jax.nn.softmax(scores, axis=1)
    weighted = jnp.einsum("bs,bse->be", alpha, enc)
    x = jnp.concatenate([emb, weighted], axis=1)
    outs, hs, cs = [], [], []
    for d in range(2):
        gates = (x @ p["Wih"][d] + p["bih"][d, 0]
                 + hidden[d] @ p["Whh"][d] + p["bhh"][d, 0])
        i = jax.nn.sigmoid(gates[:, :D]); f = jax.nn.sigmoid(gates[:, D:2 * D])
        g = jnp.tanh(gates[:, 2 * D:3 * D]); o = jax.nn.sigmoid(gates[:, 3 * D:])
        c_n = f * cell[d] + i * g
        h_n = o * jnp.tanh(c_n)
        outs.append(h_n); hs.append(h_n); cs.append(c_n)
    out = jnp.concatenate(outs, axis=1)
    fc_in = jnp.concatenate([out, weighted, emb], axis=1)
    pred = fc_in @ p["fc_w"] + p["fc_b"]
    return pred, jnp.stack(hs), jnp.stack(cs), alpha


def init_params(key, V, M, E, D, A):
    ks = jax.random.split(key, 13)
    s = 0.02
    return dict(
        emb=jax.random.normal(ks[0], (V, M), jnp.float32) * 0.1,
        Uw=jax.random.normal(ks[1], (E, A), jnp.float32) * s,
        Ub=jax.random.normal(ks[2], (1, A), jnp.float32) * s,
        Ww=jax.random.normal(ks[3], (D, A), jnp.float32) * s,
        Wb=jax.random.normal(ks[4], (1, A), jnp.float32) * s,
        Aw=jax.random.normal(ks[5], (1, A), jnp.float32) * s,   # nn.Linear(A, 1).weight
        Ab=jax.random.normal(ks[6], (1, 1), jnp.float32) * s,
        Wih=jax.random.normal(ks[7], (2, M + E, 4 * D), jnp.float32) * s,
        Whh=jax.random.normal(ks[8], (2, D, 4 * D), jnp.float32) * s,
        bih=jax.random.normal(ks[9], (2, 1, 4 * D), jnp.float32) * s,
        bhh=jax.random.normal(ks[10], (2, 1, 4 * D), jnp.float32) * s,
        fc_w=jax.random.normal(ks[11], (2 * D + E + M, V), jnp.float32) * s,
        fc_b=jax.random.normal(ks[12], (V,), jnp.float32) * s,
    )


if __name__ == "__main__":
    B, S = 8, 8
    E, D, A, M, V = 256, 128, 128, 128, 512   # encoder/decoder/attention/embedding/output dims

    key = jax.random.PRNGKey(0)
    kp_, kt, ke, kh, kc = jax.random.split(key, 5)
    params = init_params(kp_, V, M, E, D, A)
    kparams = prepare_kernel_params(params)    # one-time host prep (split / fuse / bf16)

    tokens = jax.random.randint(kt, (B,), 0, V, dtype=jnp.int32)
    encoder_outputs = jax.random.normal(ke, (B, S, E), jnp.float32)
    hidden = jax.random.normal(kh, (2, B, D), jnp.float32) * 0.1
    cell = jax.random.normal(kc, (2, B, D), jnp.float32) * 0.1

    fwd = jax.jit(decoder_forward)
    pred, h_new, c_new, alpha = fwd(tokens, encoder_outputs, hidden, cell,
                                    params["emb"], kparams)
    jax.block_until_ready((pred, h_new, c_new, alpha))

    # sanity check against a pure-JAX f32 reference (kernel matmuls are bf16)
    r_pred, r_h, r_c, r_a = reference_forward(tokens, encoder_outputs, hidden, cell, params)
    assert pred.shape == (B, V) and h_new.shape == (2, B, D)
    assert c_new.shape == (2, B, D) and alpha.shape == (B, S)
    assert np.allclose(np.asarray(alpha), np.asarray(r_a), atol=1e-2, rtol=2e-2)
    assert np.allclose(np.asarray(h_new), np.asarray(r_h), atol=1e-2, rtol=2e-2)
    assert np.allclose(np.asarray(c_new), np.asarray(r_c), atol=1e-2, rtol=2e-2)
    assert np.allclose(np.asarray(pred), np.asarray(r_pred), atol=1e-2, rtol=2e-2)
    assert np.all(np.isfinite(np.asarray(pred)))

    print("KERNEL_OK")
</pallas_src>

<mosaic_0001>
module attributes {stable_mosaic.version = 11 : i64} {
  func.func @decoder_fused_kernel(%arg0: i32, %arg1: memref<8x128xf32, #tpu.memory_space<vmem>>, %arg2: memref<8x8x256xf32, #tpu.memory_space<vmem>>, %arg3: memref<2x8x128xf32, #tpu.memory_space<vmem>>, %arg4: memref<2x8x128xf32, #tpu.memory_space<vmem>>, %arg5: memref<256x128xbf16, #tpu.memory_space<vmem>>, %arg6: memref<128x128xbf16, #tpu.memory_space<vmem>>, %arg7: memref<1x128xf32, #tpu.memory_space<vmem>>, %arg8: memref<1x128xf32, #tpu.memory_space<vmem>>, %arg9: memref<128x1024xbf16, #tpu.memory_space<vmem>>, %arg10: memref<256x1024xbf16, #tpu.memory_space<vmem>>, %arg11: memref<256x1024xbf16, #tpu.memory_space<vmem>>, %arg12: memref<1x1024xf32, #tpu.memory_space<vmem>>, %arg13: memref<256x512xbf16, #tpu.memory_space<vmem>>, %arg14: memref<256x512xbf16, #tpu.memory_space<vmem>>, %arg15: memref<128x512xbf16, #tpu.memory_space<vmem>>, %arg16: memref<1x512xf32, #tpu.memory_space<vmem>>, %arg17: memref<8x512xf32, #tpu.memory_space<vmem>>, %arg18: memref<2x8x128xf32, #tpu.memory_space<vmem>>, %arg19: memref<2x8x128xf32, #tpu.memory_space<vmem>>, %arg20: memref<8x8xf32, #tpu.memory_space<vmem>>) attributes {dimension_semantics = [#tpu.dimension_semantics<arbitrary>], iteration_bounds = array<i64: 1>, scalar_prefetch = 0 : i64, scratch_operands = 0 : i64, tpu.core_type = #tpu.core_type<tc>, window_params = [{pipeline_mode = #tpu.pipeline_mode<synchronous>, transform_indices = @transform_0, window_bounds = array<i64: 8, 128>}, {pipeline_mode = #tpu.pipeline_mode<synchronous>, transform_indices = @transform_1, window_bounds = array<i64: 8, 8, 256>}, {pipeline_mode = #tpu.pipeline_mode<synchronous>, transform_indices = @transform_2, window_bounds = array<i64: 2, 8, 128>}, {pipeline_mode = #tpu.pipeline_mode<synchronous>, transform_indices = @transform_3, window_bounds = array<i64: 2, 8, 128>}, {pipeline_mode = #tpu.pipeline_mode<synchronous>, transform_indices = @transform_4, window_bounds = array<i64: 256, 128>}, {pipeline_mode = #tpu.pipeline_mode<synchronous>, transform_indices = @transform_5, window_bounds = array<i64: 128, 128>}, {pipeline_mode = #tpu.pipeline_mode<synchronous>, transform_indices = @transform_6, window_bounds = array<i64: 1, 128>}, {pipeline_mode = #tpu.pipeline_mode<synchronous>, transform_indices = @transform_7, window_bounds = array<i64: 1, 128>}, {pipeline_mode = #tpu.pipeline_mode<synchronous>, transform_indices = @transform_8, window_bounds = array<i64: 128, 1024>}, {pipeline_mode = #tpu.pipeline_mode<synchronous>, transform_indices = @transform_9, window_bounds = array<i64: 256, 1024>}, {pipeline_mode = #tpu.pipeline_mode<synchronous>, transform_indices = @transform_10, window_bounds = array<i64: 256, 1024>}, {pipeline_mode = #tpu.pipeline_mode<synchronous>, transform_indices = @transform_11, window_bounds = array<i64: 1, 1024>}, {pipeline_mode = #tpu.pipeline_mode<synchronous>, transform_indices = @transform_12, window_bounds = array<i64: 256, 512>}, {pipeline_mode = #tpu.pipeline_mode<synchronous>, transform_indices = @transform_13, window_bounds = array<i64: 256, 512>}, {pipeline_mode = #tpu.pipeline_mode<synchronous>, transform_indices = @transform_14, window_bounds = array<i64: 128, 512>}, {pipeline_mode = #tpu.pipeline_mode<synchronous>, transform_indices = @transform_15, window_bounds = array<i64: 1, 512>}, {pipeline_mode = #tpu.pipeline_mode<synchronous>, transform_indices = @transform_16, window_bounds = array<i64: 8, 512>}, {pipeline_mode = #tpu.pipeline_mode<synchronous>, transform_indices = @transform_17, window_bounds = array<i64: 2, 8, 128>}, {pipeline_mode = #tpu.pipeline_mode<synchronous>, transform_indices = @transform_18, window_bounds = array<i64: 2, 8, 128>}, {pipeline_mode = #tpu.pipeline_mode<synchronous>, transform_indices = @transform_19, window_bounds = array<i64: 8, 8>}]} {
    %c0 = arith.constant 0 : index
    %c0_0 = arith.constant 0 : index
    %c0_1 = arith.constant 0 : index
    %0 = vector.load %arg2[%c0, %c0_0, %c0_1] : memref<8x8x256xf32, #tpu.memory_space<vmem>>, vector<8x8x256xf32>
    %c0_2 = arith.constant 0 : index
    %c0_3 = arith.constant 0 : index
    %1 = vector.load %arg1[%c0_2, %c0_3] : memref<8x128xf32, #tpu.memory_space<vmem>>, vector<8x128xf32>
    %c1 = arith.constant 1 : index
    %c0_4 = arith.constant 0 : index
    %c0_5 = arith.constant 0 : index
    %2 = vector.load %arg3[%c1, %c0_4, %c0_5] : memref<2x8x128xf32, #tpu.memory_space<vmem>>, vector<1x8x128xf32>
    %3 = vector.shape_cast %2 : vector<1x8x128xf32> to vector<8x128xf32>
    %4 = vector.shape_cast %0 : vector<8x8x256xf32> to vector<64x256xf32>
    %5 = arith.truncf %4 : vector<64x256xf32> to vector<64x256xbf16>
    %c0_6 = arith.constant 0 : index
    %c0_7 = arith.constant 0 : index
    %6 = vector.load %arg5[%c0_6, %c0_7] : memref<256x128xbf16, #tpu.memory_space<vmem>>, vector<256x128xbf16>
    %cst = arith.constant dense<0.000000e+00> : vector<64x128xf32>
    %7 = tpu.matmul %5, %6, %cst {dimension_numbers = #tpu.dot_dimension_numbers<[1], [0], [0], [1], [0, 0, 1, 1], [], []>} : vector<64x256xbf16>, vector<256x128xbf16>, vector<64x128xf32> -> vector<64x128xf32>
    %8 = vector.shape_cast %7 : vector<64x128xf32> to vector<8x8x128xf32>
    %9 = arith.truncf %3 : vector<8x128xf32> to vector<8x128xbf16>
    %c0_8 = arith.constant 0 : index
    %c0_9 = arith.constant 0 : index
    %10 = vector.load %arg6[%c0_8, %c0_9] : memref<128x128xbf16, #tpu.memory_space<vmem>>, vector<128x128xbf16>
    %cst_10 = arith.constant dense<0.000000e+00> : vector<8x128xf32>
    %11 = tpu.matmul %9, %10, %cst_10 {dimension_numbers = #tpu.dot_dimension_numbers<[1], [0], [0], [1], [0, 0, 1, 1], [], []>} : vector<8x128xbf16>, vector<128x128xbf16>, vector<8x128xf32> -> vector<8x128xf32>
    %c0_11 = arith.constant 0 : index
    %c0_12 = arith.constant 0 : index
    %12 = vector.load %arg7[%c0_11, %c0_12] : memref<1x128xf32, #tpu.memory_space<vmem>>, vector<1x128xf32>
    %13 = vector.broadcast %12 : vector<1x128xf32> to vector<8x128xf32>
    %14 = arith.addf %11, %13 : vector<8x128xf32>
    %15 = vector.shape_cast %14 : vector<8x128xf32> to vector<8x1x128xf32>
    %16 = vector.broadcast %15 : vector<8x1x128xf32> to vector<8x8x128xf32>
    %17 = arith.addf %8, %16 : vector<8x8x128xf32>
    %18 = math.tanh %17 : vector<8x8x128xf32>
    %c0_13 = arith.constant 0 : index
    %c0_14 = arith.constant 0 : index
    %19 = vector.load %arg8[%c0_13, %c0_14] : memref<1x128xf32, #tpu.memory_space<vmem>>, vector<1x128xf32>
    %20 = vector.shape_cast %19 : vector<1x128xf32> to vector<1x1x128xf32>
    %21 = vector.broadcast %20 : vector<1x1x128xf32> to vector<8x8x128xf32>
    %22 = arith.mulf %18, %21 : vector<8x8x128xf32>
    %cst_15 = arith.constant dense<0.000000e+00> : vector<8x8xf32>
    %23 = vector.multi_reduction <add>, %22, %cst_15 [2] : vector<8x8x128xf32> to vector<8x8xf32>
    %cst_16 = arith.constant dense<0xFF800000> : vector<8xf32>
    %24 = vector.multi_reduction <maximumf>, %23, %cst_16 [1] : vector<8x8xf32> to vector<8xf32>
    %25 = vector.shape_cast %24 : vector<8xf32> to vector<8x1xf32>
    %26 = vector.broadcast %25 : vector<8x1xf32> to vector<8x8xf32>
    %27 = arith.subf %23, %26 : vector<8x8xf32>
    %28 = math.exp %27 : vector<8x8xf32>
    %cst_17 = arith.constant dense<0.000000e+00> : vector<8xf32>
    %29 = vector.multi_reduction <add>, %28, %cst_17 [1] : vector<8x8xf32> to vector<8xf32>
    %30 = vector.shape_cast %29 : vector<8xf32> to vector<8x1xf32>
    %31 = tpu.reciprocal %30 : vector<8x1xf32> -> vector<8x1xf32>
    %32 = vector.broadcast %31 : vector<8x1xf32> to vector<8x8xf32>
    %33 = arith.mulf %28, %32 : vector<8x8xf32>
    %c0_18 = arith.constant 0 : index
    %c0_19 = arith.constant 0 : index
    %34 = vector.load %arg20[%c0_18, %c0_19] : memref<8x8xf32, #tpu.memory_space<vmem>>, vector<8x8xf32>
    tpu.vector_store %arg20[%c0_18, %c0_19], %33 {strides = array<i32>} : memref<8x8xf32, #tpu.memory_space<vmem>>, vector<8x8xf32>,
    %35 = vector.shape_cast %33 : vector<8x8xf32> to vector<8x8x1xf32>
    %36 = vector.broadcast %35 : vector<8x8x1xf32> to vector<8x8x256xf32>
    %37 = arith.mulf %36, %0 : vector<8x8x256xf32>
    %cst_20 = arith.constant dense<0.000000e+00> : vector<8x256xf32>
    %38 = vector.multi_reduction <add>, %37, %cst_20 [1] : vector<8x8x256xf32> to vector<8x256xf32>
    %c0_21 = arith.constant 0 : index
    %c0_22 = arith.constant 0 : index
    %c0_23 = arith.constant 0 : index
    %39 = vector.load %arg3[%c0_21, %c0_22, %c0_23] : memref<2x8x128xf32, #tpu.memory_space<vmem>>, vector<1x8x128xf32>
    %40 = vector.shape_cast %39 : vector<1x8x128xf32> to vector<8x128xf32>
    %c1_24 = arith.constant 1 : index
    %c0_25 = arith.constant 0 : index
    %c0_26 = arith.constant 0 : index
    %41 = vector.load %arg3[%c1_24, %c0_25, %c0_26] : memref<2x8x128xf32, #tpu.memory_space<vmem>>, vector<1x8x128xf32>
    %42 = vector.shape_cast %41 : vector<1x8x128xf32> to vector<8x128xf32>
    %43 = tpu.concatenate %40, %42 in 1 : vector<8x128xf32>, vector<8x128xf32> -> vector<8x256xf32>
    %44 = arith.truncf %1 : vector<8x128xf32> to vector<8x128xbf16>
    %c0_27 = arith.constant 0 : index
    %c0_28 = arith.constant 0 : index
    %45 = vector.load %arg9[%c0_27, %c0_28] : memref<128x1024xbf16, #tpu.memory_space<vmem>>, vector<128x1024xbf16>
    %cst_29 = arith.constant dense<0.000000e+00> : vector<8x1024xf32>
    %46 = tpu.matmul %44, %45, %cst_29 {dimension_numbers = #tpu.dot_dimension_numbers<[1], [0], [0], [1], [0, 0, 1, 1], [], []>} : vector<8x128xbf16>, vector<128x1024xbf16>, vector<8x1024xf32> -> vector<8x1024xf32>
    %47 = arith.truncf %38 : vector<8x256xf32> to vector<8x256xbf16>
    %c0_30 = arith.constant 0 : index
    %c0_31 = arith.constant 0 : index
    %48 = vector.load %arg10[%c0_30, %c0_31] : memref<256x1024xbf16, #tpu.memory_space<vmem>>, vector<256x1024xbf16>
    %cst_32 = arith.constant dense<0.000000e+00> : vector<8x1024xf32>
    %49 = tpu.matmul %47, %48, %cst_32 {dimension_numbers = #tpu.dot_dimension_numbers<[1], [0], [0], [1], [0, 0, 1, 1], [], []>} : vector<8x256xbf16>, vector<256x1024xbf16>, vector<8x1024xf32> -> vector<8x1024xf32>
    %50 = arith.addf %46, %49 : vector<8x1024xf32>
    %51 = arith.truncf %43 : vector<8x256xf32> to vector<8x256xbf16>
    %c0_33 = arith.constant 0 : index
    %c0_34 = arith.constant 0 : index
    %52 = vector.load %arg11[%c0_33, %c0_34] : memref<256x1024xbf16, #tpu.memory_space<vmem>>, vector<256x1024xbf16>
    %cst_35 = arith.constant dense<0.000000e+00> : vector<8x1024xf32>
    %53 = tpu.matmul %51, %52, %cst_35 {dimension_numbers = #tpu.dot_dimension_numbers<[1], [0], [0], [1], [0, 0, 1, 1], [], []>} : vector<8x256xbf16>, vector<256x1024xbf16>, vector<8x1024xf32> -> vector<8x1024xf32>
    %54 = arith.addf %50, %53 : vector<8x1024xf32>
    %c0_36 = arith.constant 0 : index
    %c0_37 = arith.constant 0 : index
    %55 = vector.load %arg12[%c0_36, %c0_37] : memref<1x1024xf32, #tpu.memory_space<vmem>>, vector<1x1024xf32>
    %56 = vector.broadcast %55 : vector<1x1024xf32> to vector<8x1024xf32>
    %57 = arith.addf %54, %56 : vector<8x1024xf32>
    %58 = vector.extract_strided_slice %57 {offsets = [0, 0], sizes = [8, 512], strides = [1, 1]} : vector<8x1024xf32> to vector<8x512xf32>
    %59 = vector.extract_strided_slice %58 {offsets = [0, 0], sizes = [8, 128], strides = [1, 1]} : vector<8x512xf32> to vector<8x128xf32>
    %60 = arith.negf %59 : vector<8x128xf32>
    %61 = math.exp %60 : vector<8x128xf32>
    %cst_38 = arith.constant 1.000000e+00 : f32
    %62 = vector.broadcast %cst_38 : f32 to vector<8x128xf32>
    %63 = arith.addf %62, %61 : vector<8x128xf32>
    %64 = arith.divf %62, %63 : vector<8x128xf32>
    %65 = vector.extract_strided_slice %58 {offsets = [0, 128], sizes = [8, 128], strides = [1, 1]} : vector<8x512xf32> to vector<8x128xf32>
    %66 = arith.negf %65 : vector<8x128xf32>
    %67 = math.exp %66 : vector<8x128xf32>
    %cst_39 = arith.constant 1.000000e+00 : f32
    %68 = vector.broadcast %cst_39 : f32 to vector<8x128xf32>
    %69 = arith.addf %68, %67 : vector<8x128xf32>
    %70 = arith.divf %68, %69 : vector<8x128xf32>
    %71 = vector.extract_strided_slice %58 {offsets = [0, 256], sizes = [8, 128], strides = [1, 1]} : vector<8x512xf32> to vector<8x128xf32>
    %72 = math.tanh %71 : vector<8x128xf32>
    %73 = vector.extract_strided_slice %58 {offsets = [0, 384], sizes = [8, 128], strides = [1, 1]} : vector<8x512xf32> to vector<8x128xf32>
    %74 = arith.negf %73 : vector<8x128xf32>
    %75 = math.exp %74 : vector<8x128xf32>
    %cst_40 = arith.constant 1.000000e+00 : f32
    %76 = vector.broadcast %cst_40 : f32 to vector<8x128xf32>
    %77 = arith.addf %76, %75 : vector<8x128xf32>
    %78 = arith.divf %76, %77 : vector<8x128xf32>
    %c0_41 = arith.constant 0 : index
    %c0_42 = arith.constant 0 : index
    %c0_43 = arith.constant 0 : index
    %79 = vector.load %arg4[%c0_41, %c0_42, %c0_43] : memref<2x8x128xf32, #tpu.memory_space<vmem>>, vector<1x8x128xf32>
    %80 = vector.shape_cast %79 : vector<1x8x128xf32> to vector<8x128xf32>
    %81 = arith.mulf %70, %80 : vector<8x128xf32>
    %82 = arith.mulf %64, %72 : vector<8x128xf32>
    %83 = arith.addf %81, %82 : vector<8x128xf32>
    %84 = math.tanh %83 : vector<8x128xf32>
    %85 = arith.mulf %78, %84 : vector<8x128xf32>
    %86 = vector.extract_strided_slice %57 {offsets = [0, 512], sizes = [8, 512], strides = [1, 1]} : vector<8x1024xf32> to vector<8x512xf32>
    %87 = vector.extract_strided_slice %86 {offsets = [0, 0], sizes = [8, 128], strides = [1, 1]} : vector<8x512xf32> to vector<8x128xf32>
    %88 = arith.negf %87 : vector<8x128xf32>
    %89 = math.exp %88 : vector<8x128xf32>
    %cst_44 = arith.constant 1.000000e+00 : f32
    %90 = vector.broadcast %cst_44 : f32 to vector<8x128xf32>
    %91 = arith.addf %90, %89 : vector<8x128xf32>
    %92 = arith.divf %90, %91 : vector<8x128xf32>
    %93 = vector.extract_strided_slice %86 {offsets = [0, 128], sizes = [8, 128], strides = [1, 1]} : vector<8x512xf32> to vector<8x128xf32>
    %94 = arith.negf %93 : vector<8x128xf32>
    %95 = math.exp %94 : vector<8x128xf32>
    %cst_45 = arith.constant 1.000000e+00 : f32
    %96 = vector.broadcast %cst_45 : f32 to vector<8x128xf32>
    %97 = arith.addf %96, %95 : vector<8x128xf32>
    %98 = arith.divf %96, %97 : vector<8x128xf32>
    %99 = vector.extract_strided_slice %86 {offsets = [0, 256], sizes = [8, 128], strides = [1, 1]} : vector<8x512xf32> to vector<8x128xf32>
    %100 = math.tanh %99 : vector<8x128xf32>
    %101 = vector.extract_strided_slice %86 {offsets = [0, 384], sizes = [8, 128], strides = [1, 1]} : vector<8x512xf32> to vector<8x128xf32>
    %102 = arith.negf %101 : vector<8x128xf32>
    %103 = math.exp %102 : vector<8x128xf32>
    %cst_46 = arith.constant 1.000000e+00 : f32
    %104 = vector.broadcast %cst_46 : f32 to vector<8x128xf32>
    %105 = arith.addf %104, %103 : vector<8x128xf32>
    %106 = arith.divf %104, %105 : vector<8x128xf32>
    %c1_47 = arith.constant 1 : index
    %c0_48 = arith.constant 0 : index
    %c0_49 = arith.constant 0 : index
    %107 = vector.load %arg4[%c1_47, %c0_48, %c0_49] : memref<2x8x128xf32, #tpu.memory_space<vmem>>, vector<1x8x128xf32>
    %108 = vector.shape_cast %107 : vector<1x8x128xf32> to vector<8x128xf32>
    %109 = arith.mulf %98, %108 : vector<8x128xf32>
    %110 = arith.mulf %92, %100 : vector<8x128xf32>
    %111 = arith.addf %109, %110 : vector<8x128xf32>
    %112 = math.tanh %111 : vector<8x128xf32>
    %113 = arith.mulf %106, %112 : vector<8x128xf32>
    %c0_50 = arith.constant 0 : index
    %c0_51 = arith.constant 0 : index
    %c0_52 = arith.constant 0 : index
    %114 = vector.load %arg18[%c0_50, %c0_51, %c0_52] : memref<2x8x128xf32, #tpu.memory_space<vmem>>, vector<1x8x128xf32>
    %115 = vector.shape_cast %114 : vector<1x8x128xf32> to vector<8x128xf32>
    %116 = vector.shape_cast %85 : vector<8x128xf32> to vector<1x8x128xf32>
    tpu.vector_store %arg18[%c0_50, %c0_51, %c0_52], %116 {strides = array<i32>} : memref<2x8x128xf32, #tpu.memory_space<vmem>>, vector<1x8x128xf32>,
    %c1_53 = arith.constant 1 : index
    %c0_54 = arith.constant 0 : index
    %c0_55 = arith.constant 0 : index
    %117 = vector.load %arg18[%c1_53, %c0_54, %c0_55] : memref<2x8x128xf32, #tpu.memory_space<vmem>>, vector<1x8x128xf32>
    %118 = vector.shape_cast %117 : vector<1x8x128xf32> to vector<8x128xf32>
    %119 = vector.shape_cast %113 : vector<8x128xf32> to vector<1x8x128xf32>
    tpu.vector_store %arg18[%c1_53, %c0_54, %c0_55], %119 {strides = array<i32>} : memref<2x8x128xf32, #tpu.memory_space<vmem>>, vector<1x8x128xf32>,
    %c0_56 = arith.constant 0 : index
    %c0_57 = arith.constant 0 : index
    %c0_58 = arith.constant 0 : index
    %120 = vector.load %arg19[%c0_56, %c0_57, %c0_58] : memref<2x8x128xf32, #tpu.memory_space<vmem>>, vector<1x8x128xf32>
    %121 = vector.shape_cast %120 : vector<1x8x128xf32> to vector<8x128xf32>
    %122 = vector.shape_cast %83 : vector<8x128xf32> to vector<1x8x128xf32>
    tpu.vector_store %arg19[%c0_56, %c0_57, %c0_58], %122 {strides = array<i32>} : memref<2x8x128xf32, #tpu.memory_space<vmem>>, vector<1x8x128xf32>,
    %c1_59 = arith.constant 1 : index
    %c0_60 = arith.constant 0 : index
    %c0_61 = arith.constant 0 : index
    %123 = vector.load %arg19[%c1_59, %c0_60, %c0_61] : memref<2x8x128xf32, #tpu.memory_space<vmem>>, vector<1x8x128xf32>
    %124 = vector.shape_cast %123 : vector<1x8x128xf32> to vector<8x128xf32>
    %125 = vector.shape_cast %111 : vector<8x128xf32> to vector<1x8x128xf32>
    tpu.vector_store %arg19[%c1_59, %c0_60, %c0_61], %125 {strides = array<i32>} : memref<2x8x128xf32, #tpu.memory_space<vmem>>, vector<1x8x128xf32>,
    %126 = tpu.concatenate %85, %113 in 1 : vector<8x128xf32>, vector<8x128xf32> -> vector<8x256xf32>
    %127 = arith.truncf %126 : vector<8x256xf32> to vector<8x256xbf16>
    %c0_62 = arith.constant 0 : index
    %c0_63 = arith.constant 0 : index
    %128 = vector.load %arg13[%c0_62, %c0_63] : memref<256x512xbf16, #tpu.memory_space<vmem>>, vector<256x512xbf16>
    %cst_64 = arith.constant dense<0.000000e+00> : vector<8x512xf32>
    %129 = tpu.matmul %127, %128, %cst_64 {dimension_numbers = #tpu.dot_dimension_numbers<[1], [0], [0], [1], [0, 0, 1, 1], [], []>} : vector<8x256xbf16>, vector<256x512xbf16>, vector<8x512xf32> -> vector<8x512xf32>
    %130 = arith.truncf %38 : vector<8x256xf32> to vector<8x256xbf16>
    %c0_65 = arith.constant 0 : index
    %c0_66 = arith.constant 0 : index
    %131 = vector.load %arg14[%c0_65, %c0_66] : memref<256x512xbf16, #tpu.memory_space<vmem>>, vector<256x512xbf16>
    %cst_67 = arith.constant dense<0.000000e+00> : vector<8x512xf32>
    %132 = tpu.matmul %130, %131, %cst_67 {dimension_numbers = #tpu.dot_dimension_numbers<[1], [0], [0], [1], [0, 0, 1, 1], [], []>} : vector<8x256xbf16>, vector<256x512xbf16>, vector<8x512xf32> -> vector<8x512xf32>
    %133 = arith.addf %129, %132 : vector<8x512xf32>
    %134 = arith.truncf %1 : vector<8x128xf32> to vector<8x128xbf16>
    %c0_68 = arith.constant 0 : index
    %c0_69 = arith.constant 0 : index
    %135 = vector.load %arg15[%c0_68, %c0_69] : memref<128x512xbf16, #tpu.memory_space<vmem>>, vector<128x512xbf16>
    %cst_70 = arith.constant dense<0.000000e+00> : vector<8x512xf32>
    %136 = tpu.matmul %134, %135, %cst_70 {dimension_numbers = #tpu.dot_dimension_numbers<[1], [0], [0], [1], [0, 0, 1, 1], [], []>} : vector<8x128xbf16>, vector<128x512xbf16>, vector<8x512xf32> -> vector<8x512xf32>
    %137 = arith.addf %133, %136 : vector<8x512xf32>
    %c0_71 = arith.constant 0 : index
    %c0_72 = arith.constant 0 : index
    %138 = vector.load %arg16[%c0_71, %c0_72] : memref<1x512xf32, #tpu.memory_space<vmem>>, vector<1x512xf32>
    %139 = vector.broadcast %138 : vector<1x512xf32> to vector<8x512xf32>
    %140 = arith.addf %137, %139 : vector<8x512xf32>
    %c0_73 = arith.constant 0 : index
    %c0_74 = arith.constant 0 : index
    %141 = vector.load %arg17[%c0_73, %c0_74] : memref<8x512xf32, #tpu.memory_space<vmem>>, vector<8x512xf32>
    tpu.vector_store %arg17[%c0_73, %c0_74], %140 {strides = array<i32>} : memref<8x512xf32, #tpu.memory_space<vmem>>, vector<8x512xf32>,
    return
  }
  func.func @transform_0(%arg0: i32) -> (i32, i32) {
    %c0_i32 = arith.constant 0 : i32
    %c0_i32_0 = arith.constant 0 : i32
    %c0_i32_1 = arith.constant 0 : i32
    return %c0_i32, %c0_i32_0 : i32, i32
  }
  func.func @transform_1(%arg0: i32) -> (i32, i32, i32) {
    %c0_i32 = arith.constant 0 : i32
    %c0_i32_0 = arith.constant 0 : i32
    %c0_i32_1 = arith.constant 0 : i32
    %c0_i32_2 = arith.constant 0 : i32
    return %c0_i32, %c0_i32_0, %c0_i32_1 : i32, i32, i32
  }
  func.func @transform_2(%arg0: i32) -> (i32, i32, i32) {
    %c0_i32 = arith.constant 0 : i32
    %c0_i32_0 = arith.constant 0 : i32
    %c0_i32_1 = arith.constant 0 : i32
    %c0_i32_2 = arith.constant 0 : i32
    return %c0_i32, %c0_i32_0, %c0_i32_1 : i32, i32, i32
  }
  func.func @transform_3(%arg0: i32) -> (i32, i32, i32) {
    %c0_i32 = arith.constant 0 : i32
    %c0_i32_0 = arith.constant 0 : i32
    %c0_i32_1 = arith.constant 0 : i32
    %c0_i32_2 = arith.constant 0 : i32
    return %c0_i32, %c0_i32_0, %c0_i32_1 : i32, i32, i32
  }
  func.func @transform_4(%arg0: i32) -> (i32, i32) {
    %c0_i32 = arith.constant 0 : i32
    %c0_i32_0 = arith.constant 0 : i32
    %c0_i32_1 = arith.constant 0 : i32
    return %c0_i32, %c0_i32_0 : i32, i32
  }
  func.func @transform_5(%arg0: i32) -> (i32, i32) {
    %c0_i32 = arith.constant 0 : i32
    %c0_i32_0 = arith.constant 0 : i32
    %c0_i32_1 = arith.constant 0 : i32
    return %c0_i32, %c0_i32_0 : i32, i32
  }
  func.func @transform_6(%arg0: i32) -> (i32, i32) {
    %c0_i32 = arith.constant 0 : i32
    %c0_i32_0 = arith.constant 0 : i32
    %c0_i32_1 = arith.constant 0 : i32
    return %c0_i32, %c0_i32_0 : i32, i32
  }
  func.func @transform_7(%arg0: i32) -> (i32, i32) {
    %c0_i32 = arith.constant 0 : i32
    %c0_i32_0 = arith.constant 0 : i32
    %c0_i32_1 = arith.constant 0 : i32
    return %c0_i32, %c0_i32_0 : i32, i32
  }
  func.func @transform_8(%arg0: i32) -> (i32, i32) {
    %c0_i32 = arith.constant 0 : i32
    %c0_i32_0 = arith.constant 0 : i32
    %c0_i32_1 = arith.constant 0 : i32
    return %c0_i32, %c0_i32_0 : i32, i32
  }
  func.func @transform_9(%arg0: i32) -> (i32, i32) {
    %c0_i32 = arith.constant 0 : i32
    %c0_i32_0 = arith.constant 0 : i32
    %c0_i32_1 = arith.constant 0 : i32
    return %c0_i32, %c0_i32_0 : i32, i32
  }
  func.func @transform_10(%arg0: i32) -> (i32, i32) {
    %c0_i32 = arith.constant 0 : i32
    %c0_i32_0 = arith.constant 0 : i32
    %c0_i32_1 = arith.constant 0 : i32
    return %c0_i32, %c0_i32_0 : i32, i32
  }
  func.func @transform_11(%arg0: i32) -> (i32, i32) {
    %c0_i32 = arith.constant 0 : i32
    %c0_i32_0 = arith.constant 0 : i32
    %c0_i32_1 = arith.constant 0 : i32
    return %c0_i32, %c0_i32_0 : i32, i32
  }
  func.func @transform_12(%arg0: i32) -> (i32, i32) {
    %c0_i32 = arith.constant 0 : i32
    %c0_i32_0 = arith.constant 0 : i32
    %c0_i32_1 = arith.constant 0 : i32
    return %c0_i32, %c0_i32_0 : i32, i32
  }
  func.func @transform_13(%arg0: i32) -> (i32, i32) {
    %c0_i32 = arith.constant 0 : i32
    %c0_i32_0 = arith.constant 0 : i32
    %c0_i32_1 = arith.constant 0 : i32
    return %c0_i32, %c0_i32_0 : i32, i32
  }
  func.func @transform_14(%arg0: i32) -> (i32, i32) {
    %c0_i32 = arith.constant 0 : i32
    %c0_i32_0 = arith.constant 0 : i32
    %c0_i32_1 = arith.constant 0 : i32
    return %c0_i32, %c0_i32_0 : i32, i32
  }
  func.func @transform_15(%arg0: i32) -> (i32, i32) {
    %c0_i32 = arith.constant 0 : i32
    %c0_i32_0 = arith.constant 0 : i32
    %c0_i32_1 = arith.constant 0 : i32
    return %c0_i32, %c0_i32_0 : i32, i32
  }
  func.func @transform_16(%arg0: i32) -> (i32, i32) {
    %c0_i32 = arith.constant 0 : i32
    %c0_i32_0 = arith.constant 0 : i32
    %c0_i32_1 = arith.constant 0 : i32
    return %c0_i32, %c0_i32_0 : i32, i32
  }
  func.func @transform_17(%arg0: i32) -> (i32, i32, i32) {
    %c0_i32 = arith.constant 0 : i32
    %c0_i32_0 = arith.constant 0 : i32
    %c0_i32_1 = arith.constant 0 : i32
    %c0_i32_2 = arith.constant 0 : i32
    return %c0_i32, %c0_i32_0, %c0_i32_1 : i32, i32, i32
  }
  func.func @transform_18(%arg0: i32) -> (i32, i32, i32) {
    %c0_i32 = arith.constant 0 : i32
    %c0_i32_0 = arith.constant 0 : i32
    %c0_i32_1 = arith.constant 0 : i32
    %c0_i32_2 = arith.constant 0 : i32
    return %c0_i32, %c0_i32_0, %c0_i32_1 : i32, i32, i32
  }
  func.func @transform_19(%arg0: i32) -> (i32, i32) {
    %c0_i32 = arith.constant 0 : i32
    %c0_i32_0 = arith.constant 0 : i32
    %c0_i32_1 = arith.constant 0 : i32
    return %c0_i32, %c0_i32_0 : i32, i32
  }
}

</mosaic_0001>

<llo_original>
// kernel: decoder_forward.1
$region0: #{decoder_forward.1}
  #allocation0 [shape = 'u32[]', space=smem, size = 0x4, offset = 0x4, fixed_abs, tag = 'smem constant byte address 0x4 - core index']
  #allocation1 [shape = 'u32[144,128]{1,0:T(1,128)}', space=vmem, size = 0x12000, scoped, tag = 'internal scratch']
  %s0 = inlined_call_operand.vmem [shape: f32[8,128], index: 0, kind: input, shape index: {}]
  %s1 = inlined_call_operand.hbm [shape: f32[8,8,256], index: 1, kind: input, shape index: {}]
  %s2 = inlined_call_operand.vmem [shape: f32[2,8,128], index: 2, kind: input, shape index: {}]
  %s3 = inlined_call_operand.vmem [shape: f32[2,8,128], index: 3, kind: input, shape index: {}]
  %s4 = inlined_call_operand.hbm [shape: bf16[256,128], index: 4, kind: input, shape index: {}]
  %s5 = inlined_call_operand.vmem [shape: bf16[128,128], index: 5, kind: input, shape index: {}]
  %s6 = inlined_call_operand.hbm [shape: f32[1,128], index: 6, kind: input, shape index: {}]
  %s7 = inlined_call_operand.hbm [shape: f32[1,128], index: 7, kind: input, shape index: {}]
  %s8 = inlined_call_operand.hbm [shape: bf16[128,1024], index: 8, kind: input, shape index: {}]
  %s9 = inlined_call_operand.hbm [shape: bf16[256,1024], index: 9, kind: input, shape index: {}]
  %s10 = inlined_call_operand.hbm [shape: bf16[256,1024], index: 10, kind: input, shape index: {}]
  %s11 = inlined_call_operand.vmem [shape: f32[1,1024], index: 11, kind: input, shape index: {}]
  %s12 = inlined_call_operand.hbm [shape: bf16[256,512], index: 12, kind: input, shape index: {}]
  %s13 = inlined_call_operand.hbm [shape: bf16[256,512], index: 13, kind: input, shape index: {}]
  %s14 = inlined_call_operand.hbm [shape: bf16[128,512], index: 14, kind: input, shape index: {}]
  %s15 = inlined_call_operand.hbm [shape: f32[1,512], index: 15, kind: input, shape index: {}]
  %s16 = inlined_call_operand.hbm [shape: f32[8,512], index: 16, kind: output, shape index: {0}]
  %s17 = inlined_call_operand.hbm [shape: f32[2,8,128], index: 17, kind: output, shape index: {1}]
  %s18 = inlined_call_operand.hbm [shape: f32[2,8,128], index: 18, kind: output, shape index: {2}]
  %s19 = inlined_call_operand.hbm [shape: f32[8,8], index: 19, kind: output, shape index: {3}]
  %20 = xla_tuple %s16, %s17, %s18, %s19
  %s21 = sld [smem:[#allocation0]]
  $region142: #{decoder_forward.1} parent=0
    _
  %s23 = ssub.s32 1, %s21
  %s24 = scalar_select 0, %s23, %s21
  $region1: #{decoder_forward.1} parent=0
    #allocation2 [shape = 'u8[65536]{0}', space=vmem, size = 0x10000, scoped, tag = 'input window, operand 1, single buffered']
    #allocation3 [shape = 's32[1]{0}', space=sflag, size = 0x4, scoped, tag = 'scoped memory for decoder_forward.1']
    #allocation4 [shape = 's32[1]{0}', space=sflag, size = 0x4, scoped, tag = 'scoped memory for decoder_forward.1']
    #allocation5 [shape = 'u8[65536]{0}', space=vmem, size = 0x10000, scoped, tag = 'input window, operand 4, single buffered']
    #allocation6 [shape = 's32[1]{0}', space=sflag, size = 0x4, scoped, tag = 'scoped memory for decoder_forward.1']
    #allocation7 [shape = 'u8[512]{0}', space=vmem, size = 0x400, scoped, tag = 'input window, operand 6, single buffered']
    #allocation8 [shape = 'u8[512]{0}', space=vmem, size = 0x400, scoped, tag = 'input window, operand 7, single buffered']
    #allocation9 [shape = 's32[1]{0}', space=sflag, size = 0x4, scoped, tag = 'scoped memory for decoder_forward.1']
    #allocation10 [shape = 'u8[262144]{0}', space=vmem, size = 0x40000, scoped, tag = 'input window, operand 8, single buffered']
    #allocation11 [shape = 'u8[524288]{0}', space=vmem, size = 0x80000, scoped, tag = 'input window, operand 9, single buffered']
    #allocation12 [shape = 's32[1]{0}', space=sflag, size = 0x4, scoped, tag = 'scoped memory for decoder_forward.1']
    #allocation13 [shape = 'u8[524288]{0}', space=vmem, size = 0x80000, scoped, tag = 'input window, operand 10, single buffered']
    #allocation14 [shape = 'u8[262144]{0}', space=vmem, size = 0x40000, scoped, tag = 'input window, operand 12, single buffered']
    #allocation15 [shape = 's32[1]{0}', space=sflag, size = 0x4, scoped, tag = 'scoped memory for decoder_forward.1']
    #allocation16 [shape = 'u8[262144]{0}', space=vmem, size = 0x40000, scoped, tag = 'input window, operand 13, single buffered']
    #allocation17 [shape = 'u8[131072]{0}', space=vmem, size = 0x20000, scoped, tag = 'input window, operand 14, single buffered']
    #allocation18 [shape = 's32[1]{0}', space=sflag, size = 0x4, scoped, tag = 'scoped memory for decoder_forward.1']
    #allocation19 [shape = 'u8[2048]{0}', space=vmem, size = 0x800, scoped, tag = 'input window, operand 15, single buffered']
    #allocation20 [shape = 'u8[16384]{0}', space=vmem, size = 0x4000, scoped, tag = 'output window, operand 0, single buffered']
    #allocation21 [shape = 'u8[8192]{0}', space=vmem, size = 0x2000, scoped, tag = 'output window, operand 1, single buffered']
    #allocation22 [shape = 's32[1]{0}', space=sflag, size = 0x4, scoped, tag = 'scoped memory for decoder_forward.1']
    #allocation23 [shape = 'u8[8192]{0}', space=vmem, size = 0x2000, scoped, tag = 'output window, operand 2, single buffered']
    #allocation24 [shape = 'u8[4096]{0}', space=vmem, size = 0x1000, scoped, tag = 'output window, operand 3, single buffered']
    #allocation25 [shape = 's32[1]{0}', space=sflag, size = 0x4, scoped, tag = 'scoped memory for decoder_forward.1']
    %25 = vsyncpa [#allocation3], 0
    %26 = vsyncpa [#allocation6], 0
    %27 = vsyncpa [#allocation9], 0
    %28 = vsyncpa [#allocation12], 0
    %29 = vsyncpa [#allocation15], 0
    %30 = vsyncpa [#allocation18], 0
    %31 = vsyncpa [#allocation4], 0
    %32 = vsyncpa [#allocation22], 0
    %33 = vsyncpa [#allocation25], 0
    // Predicated region
    $region2: #{decoder_forward.1} parent=1 // pred_check
      _
    $region3: #{decoder_forward.1} parent=1 // pred_check_branch
      %35 = sbr.rel (0) target = $region5
    $region4: #{decoder_forward.1} parent=1 // pred_region
      _
    $region5: #{decoder_forward.1} parent=1 // pred_fallthru
      _
    // Predicated region
    $region6: #{decoder_forward.1} parent=1 // pred_check
      _
    $region7: #{decoder_forward.1} parent=1 // pred_check_branch
      %37 = sbr.rel (0) target = $region9
    $region8: #{decoder_forward.1} parent=1 // pred_region
      %s39 = ssub.s32 2048, 2048
      %40 = vsyncadd [#allocation3], %s39
      %s41 = sshll.u32 [#allocation2], 4
      %s42 = int_to_ptr.vmem [resolvable:$true] %s41
      %47 = dma.hbm_to_vmem [thread:$0]  %s1, 2048, %s42, [#allocation3], 256, 256, 16
    $region9: #{decoder_forward.1} parent=1 // pred_fallthru
      _
    // Predicated region
    $region10: #{decoder_forward.1} parent=1 // pred_check
      _
    $region11: #{decoder_forward.1} parent=1 // pred_check_branch
      %49 = sbr.rel (0) target = $region13
    $region12: #{decoder_forward.1} parent=1 // pred_region
      _
    $region13: #{decoder_forward.1} parent=1 // pred_fallthru
      _
    // Predicated region
    $region14: #{decoder_forward.1} parent=1 // pred_check
      _
    $region15: #{decoder_forward.1} parent=1 // pred_check_branch
      %51 = sbr.rel (0) target = $region17
    $region16: #{decoder_forward.1} parent=1 // pred_region
      _
    $region17: #{decoder_forward.1} parent=1 // pred_fallthru
      _
    // Predicated region
    $region18: #{decoder_forward.1} parent=1 // pred_check
      _
    $region19: #{decoder_forward.1} parent=1 // pred_check_branch
      %53 = sbr.rel (0) target = $region21
    $region20: #{decoder_forward.1} parent=1 // pred_region
      %s55 = ssub.s32 2048, 2048
      %56 = vsyncadd [#allocation6], %s55
      %s57 = sshll.u32 [#allocation5], 4
      %s58 = int_to_ptr.vmem [resolvable:$true] %s57
      %63 = dma.hbm_to_vmem [thread:$0]  %s4, 2048, %s58, [#allocation6], 64, 64, 4
    $region21: #{decoder_forward.1} parent=1 // pred_fallthru
      _
    // Predicated region
    $region22: #{decoder_forward.1} parent=1 // pred_check
      _
    $region23: #{decoder_forward.1} parent=1 // pred_check_branch
      %65 = sbr.rel (0) target = $region25
    $region24: #{decoder_forward.1} parent=1 // pred_region
      _
    $region25: #{decoder_forward.1} parent=1 // pred_fallthru
      _
    // Predicated region
    $region26: #{decoder_forward.1} parent=1 // pred_check
      _
    $region27: #{decoder_forward.1} parent=1 // pred_check_branch
      %67 = sbr.rel (0) target = $region29
    $region28: #{decoder_forward.1} parent=1 // pred_region
      %s69 = ssub.s32 16, 16
      %70 = vsyncadd [#allocation6], %s69
      %s72 = sshll.u32 [#allocation7], 4
      %s73 = int_to_ptr.vmem [resolvable:$true] %s72
      %75 = dma.hbm_to_vmem [thread:$0]  %s6, 16, %s73, [#allocation6]
    $region29: #{decoder_forward.1} parent=1 // pred_fallthru
      _
    // Predicated region
    $region30: #{decoder_forward.1} parent=1 // pred_check
      _
    $region31: #{decoder_forward.1} parent=1 // pred_check_branch
      %77 = sbr.rel (0) target = $region33
    $region32: #{decoder_forward.1} parent=1 // pred_region
      %s79 = ssub.s32 16, 16
      %80 = vsyncadd [#allocation9], %s79
      %s82 = sshll.u32 [#allocation8], 4
      %s83 = int_to_ptr.vmem [resolvable:$true] %s82
      %85 = dma.hbm_to_vmem [thread:$0]  %s7, 16, %s83, [#allocation9]
    $region33: #{decoder_forward.1} parent=1 // pred_fallthru
      _
    // Predicated region
    $region34: #{decoder_forward.1} parent=1 // pred_check
      _
    $region35: #{decoder_forward.1} parent=1 // pred_check_branch
      %87 = sbr.rel (0) target = $region37
    $region36: #{decoder_forward.1} parent=1 // pred_region
      %s89 = ssub.s32 8192, 8192
      %90 = vsyncadd [#allocation9], %s89
      %s91 = sshll.u32 [#allocation10], 4
      %s92 = int_to_ptr.vmem [resolvable:$true] %s91
      %97 = dma.hbm_to_vmem [thread:$0]  %s8, 8192, %s92, [#allocation9], 512, 512, 32
    $region37: #{decoder_forward.1} parent=1 // pred_fallthru
      _
    // Predicated region
    $region38: #{decoder_forward.1} parent=1 // pred_check
      _
    $region39: #{decoder_forward.1} parent=1 // pred_check_branch
      %99 = sbr.rel (0) target = $region41
    $region40: #{decoder_forward.1} parent=1 // pred_region
      %s101 = ssub.s32 16384, 16384
      %102 = vsyncadd [#allocation12], %s101
      %s103 = sshll.u32 [#allocation11], 4
      %s104 = int_to_ptr.vmem [resolvable:$true] %s103
      %109 = dma.hbm_to_vmem [thread:$0]  %s9, 16384, %s104, [#allocation12], 512, 512, 32
    $region41: #{decoder_forward.1} parent=1 // pred_fallthru
      _
    // Predicated region
    $region42: #{decoder_forward.1} parent=1 // pred_check
      _
    $region43: #{decoder_forward.1} parent=1 // pred_check_branch
      %111 = sbr.rel (0) target = $region45
    $region44: #{decoder_forward.1} parent=1 // pred_region
      %s113 = ssub.s32 16384, 16384
      %114 = vsyncadd [#allocation12], %s113
      %s115 = sshll.u32 [#allocation13], 4
      %s116 = int_to_ptr.vmem [resolvable:$true] %s115
      %121 = dma.hbm_to_vmem [thread:$0]  %s10, 16384, %s116, [#allocation12], 512, 512, 32
    $region45: #{decoder_forward.1} parent=1 // pred_fallthru
      _
    // Predicated region
    $region46: #{decoder_forward.1} parent=1 // pred_check
      _
    $region47: #{decoder_forward.1} parent=1 // pred_check_branch
      %123 = sbr.rel (0) target = $region49
    $region48: #{decoder_forward.1} parent=1 // pred_region
      _
    $region49: #{decoder_forward.1} parent=1 // pred_fallthru
      _
    // Predicated region
    $region50: #{decoder_forward.1} parent=1 // pred_check
      _
    $region51: #{decoder_forward.1} parent=1 // pred_check_branch
      %125 = sbr.rel (0) target = $region53
    $region52: #{decoder_forward.1} parent=1 // pred_region
      %s127 = ssub.s32 8192, 8192
      %128 = vsyncadd [#allocation15], %s127
      %s129 = sshll.u32 [#allocation14], 4
      %s130 = int_to_ptr.vmem [resolvable:$true] %s129
      %135 = dma.hbm_to_vmem [thread:$0]  %s12, 8192, %s130, [#allocation15], 256, 256, 16
    $region53: #{decoder_forward.1} parent=1 // pred_fallthru
      _
    // Predicated region
    $region54: #{decoder_forward.1} parent=1 // pred_check
      _
    $region55: #{decoder_forward.1} parent=1 // pred_check_branch
      %137 = sbr.rel (0) target = $region57
    $region56: #{decoder_forward.1} parent=1 // pred_region
      %s139 = ssub.s32 8192, 8192
      %140 = vsyncadd [#allocation15], %s139
      %s141 = sshll.u32 [#allocation16], 4
      %s142 = int_to_ptr.vmem [resolvable:$true] %s141
      %147 = dma.hbm_to_vmem [thread:$0]  %s13, 8192, %s142, [#allocation15], 256, 256, 16
    $region57: #{decoder_forward.1} parent=1 // pred_fallthru
      _
    // Predicated region
    $region58: #{decoder_forward.1} parent=1 // pred_check
      _
    $region59: #{decoder_forward.1} parent=1 // pred_check_branch
      %149 = sbr.rel (0) target = $region61
    $region60: #{decoder_forward.1} parent=1 // pred_region
      %s151 = ssub.s32 4096, 4096
      %152 = vsyncadd [#allocation18], %s151
      %s153 = sshll.u32 [#allocation17], 4
      %s154 = int_to_ptr.vmem [resolvable:$true] %s153
      %159 = dma.hbm_to_vmem [thread:$0]  %s14, 4096, %s154, [#allocation18], 256, 256, 16
    $region61: #{decoder_forward.1} parent=1 // pred_fallthru
      _
    // Predicated region
    $region62: #{decoder_forward.1} parent=1 // pred_check
      _
    $region63: #{decoder_forward.1} parent=1 // pred_check_branch
      %161 = sbr.rel (0) target = $region65
    $region64: #{decoder_forward.1} parent=1 // pred_region
      %s163 = ssub.s32 64, 64
      %164 = vsyncadd [#allocation18], %s163
      %s166 = sshll.u32 [#allocation19], 4
      %s167 = int_to_ptr.vmem [resolvable:$true] %s166
      %169 = dma.hbm_to_vmem [thread:$0]  %s15, 64, %s167, [#allocation18]
    $region65: #{decoder_forward.1} parent=1 // pred_fallthru
      _
    // Predicated region
    $region66: #{decoder_forward.1} parent=1 // pred_check
      _
    $region67: #{decoder_forward.1} parent=1 // pred_check_branch
      %171 = sbr.rel (0) target = $region69
    $region68: #{decoder_forward.1} parent=1 // pred_region
      %172 = dma.done [#allocation3], 2048
    $region69: #{decoder_forward.1} parent=1 // pred_fallthru
      _
    // Predicated region
    $region70: #{decoder_forward.1} parent=1 // pred_check
      _
    $region71: #{decoder_forward.1} parent=1 // pred_check_branch
      %174 = sbr.rel (0) target = $region73
    $region72: #{decoder_forward.1} parent=1 // pred_region
      %175 = dma.done [#allocation6], 2048
    $region73: #{decoder_forward.1} parent=1 // pred_fallthru
      _
    // Predicated region
    $region74: #{decoder_forward.1} parent=1 // pred_check
      _
    $region75: #{decoder_forward.1} parent=1 // pred_check_branch
      %177 = sbr.rel (0) target = $region77
    $region76: #{decoder_forward.1} parent=1 // pred_region
      %178 = dma.done [#allocation6], 16
    $region77: #{decoder_forward.1} parent=1 // pred_fallthru
      _
    // Predicated region
    $region78: #{decoder_forward.1} parent=1 // pred_check
      _
    $region79: #{decoder_forward.1} parent=1 // pred_check_branch
      %180 = sbr.rel (0) target = $region81
    $region80: #{decoder_forward.1} parent=1 // pred_region
      %181 = dma.done [#allocation9], 16
    $region81: #{decoder_forward.1} parent=1 // pred_fallthru
      _
    // Predicated region
    $region82: #{decoder_forward.1} parent=1 // pred_check
      _
    $region83: #{decoder_forward.1} parent=1 // pred_check_branch
      %183 = sbr.rel (0) target = $region85
    $region84: #{decoder_forward.1} parent=1 // pred_region
      %184 = dma.done [#allocation9], 8192
    $region85: #{decoder_forward.1} parent=1 // pred_fallthru
      _
    // Predicated region
    $region86: #{decoder_forward.1} parent=1 // pred_check
      _
    $region87: #{decoder_forward.1} parent=1 // pred_check_branch
      %186 = sbr.rel (0) target = $region89
    $region88: #{decoder_forward.1} parent=1 // pred_region
      %187 = dma.done [#allocation12], 16384
    $region89: #{decoder_forward.1} parent=1 // pred_fallthru
      _
    // Predicated region
    $region90: #{decoder_forward.1} parent=1 // pred_check
      _
    $region91: #{decoder_forward.1} parent=1 // pred_check_branch
      %189 = sbr.rel (0) target = $region93
    $region92: #{decoder_forward.1} parent=1 // pred_region
      %190 = dma.done [#allocation12], 16384
    $region93: #{decoder_forward.1} parent=1 // pred_fallthru
      _
    // Predicated region
    $region94: #{decoder_forward.1} parent=1 // pred_check
      _
    $region95: #{decoder_forward.1} parent=1 // pred_check_branch
      %192 = sbr.rel (0) target = $region97
    $region96: #{decoder_forward.1} parent=1 // pred_region
      %193 = dma.done [#allocation15], 8192
    $region97: #{decoder_forward.1} parent=1 // pred_fallthru
      _
    // Predicated region
    $region98: #{decoder_forward.1} parent=1 // pred_check
      _
    $region99: #{decoder_forward.1} parent=1 // pred_check_branch
      %195 = sbr.rel (0) target = $region101
    $region100: #{decoder_forward.1} parent=1 // pred_region
      %196 = dma.done [#allocation15], 8192
    $region101: #{decoder_forward.1} parent=1 // pred_fallthru
      _
    // Predicated region
    $region102: #{decoder_forward.1} parent=1 // pred_check
      _
    $region103: #{decoder_forward.1} parent=1 // pred_check_branch
      %198 = sbr.rel (0) target = $region105
    $region104: #{decoder_forward.1} parent=1 // pred_region
      %199 = dma.done [#allocation18], 4096
    $region105: #{decoder_forward.1} parent=1 // pred_fallthru
      _
    // Predicated region
    $region106: #{decoder_forward.1} parent=1 // pred_check
      _
    $region107: #{decoder_forward.1} parent=1 // pred_check_branch
      %201 = sbr.rel (0) target = $region109
    $region108: #{decoder_forward.1} parent=1 // pred_region
      %202 = dma.done [#allocation18], 64
    $region109: #{decoder_forward.1} parent=1 // pred_fallthru
      _
    %v204 = vld [vmem:[#allocation2] sm:$0xff]
    %v205 = vld [vmem:[#allocation2 + $0x8] sm:$0xff]
    %v206 = vld [vmem:[#allocation2 + $0x10] sm:$0xff]
    %v207 = vld [vmem:[#allocation2 + $0x18] sm:$0xff]
    %v208 = vld [vmem:[#allocation2 + $0x20] sm:$0xff]
    %v209 = vld [vmem:[#allocation2 + $0x28] sm:$0xff]
    %v210 = vld [vmem:[#allocation2 + $0x30] sm:$0xff]
    %v211 = vld [vmem:[#allocation2 + $0x38] sm:$0xff]
    %v212 = vld [vmem:[#allocation2 + $0x40] sm:$0xff]
    %v213 = vld [vmem:[#allocation2 + $0x48] sm:$0xff]
    %v214 = vld [vmem:[#allocation2 + $0x50] sm:$0xff]
    %v215 = vld [vmem:[#allocation2 + $0x58] sm:$0xff]
    %v216 = vld [vmem:[#allocation2 + $0x60] sm:$0xff]
    %v217 = vld [vmem:[#allocation2 + $0x68] sm:$0xff]
    %v218 = vld [vmem:[#allocation2 + $0x70] sm:$0xff]
    %v219 = vld [vmem:[#allocation2 + $0x78] sm:$0xff]
    %v220 = vld [vmem:[%s0] sm:$0xff]
    %s221 = scalar_lea.vmem %s2, 8
    %v222 = vld [vmem:[%s221] sm:$0xff]
    %v223 = vpack.c.bf16 %v206, %v204
    %v224 = vpack.c.bf16 %v207, %v205
    %v225 = vpack.c.bf16 %v210, %v208
    %v226 = vpack.c.bf16 %v211, %v209
    %v227 = vpack.c.bf16 %v214, %v212
    %v228 = vpack.c.bf16 %v215, %v213
    %v229 = vpack.c.bf16 %v218, %v216
    %v230 = vpack.c.bf16 %v219, %v217
    %v231 = vld [vmem:[#allocation5] sm:$0xf]
    %v232 = vld [vmem:[#allocation5 + $0x4] sm:$0xf]
    %v233 = vld [vmem:[#allocation5 + $0x8] sm:$0xf]
    %v234 = vld [vmem:[#allocation5 + $0xc] sm:$0xf]
    %v235 = vld [vmem:[#allocation5 + $0x10] sm:$0xf]
    %v236 = vld [vmem:[#allocation5 + $0x14] sm:$0xf]
    %v237 = vld [vmem:[#allocation5 + $0x18] sm:$0xf]
    %v238 = vld [vmem:[#allocation5 + $0x1c] sm:$0xf]
    %v239 = vld [vmem:[#allocation5 + $0x20] sm:$0xf]
    %v240 = vld [vmem:[#allocation5 + $0x24] sm:$0xf]
    %v241 = vld [vmem:[#allocation5 + $0x28] sm:$0xf]
    %v242 = vld [vmem:[#allocation5 + $0x2c] sm:$0xf]
    %v243 = vld [vmem:[#allocation5 + $0x30] sm:$0xf]
    %v244 = vld [vmem:[#allocation5 + $0x34] sm:$0xf]
    %v245 = vld [vmem:[#allocation5 + $0x38] sm:$0xf]
    %v246 = vld [vmem:[#allocation5 + $0x3c] sm:$0xf]
    %v247 = vld [vmem:[#allocation5 + $0x40] sm:$0xf]
    %v248 = vld [vmem:[#allocation5 + $0x44] sm:$0xf]
    %v249 = vld [vmem:[#allocation5 + $0x48] sm:$0xf]
    %v250 = vld [vmem:[#allocation5 + $0x4c] sm:$0xf]
    %v251 = vld [vmem:[#allocation5 + $0x50] sm:$0xf]
    %v252 = vld [vmem:[#allocation5 + $0x54] sm:$0xf]
    %v253 = vld [vmem:[#allocation5 + $0x58] sm:$0xf]
    %v254 = vld [vmem:[#allocation5 + $0x5c] sm:$0xf]
    %v255 = vld [vmem:[#allocation5 + $0x60] sm:$0xf]
    %v256 = vld [vmem:[#allocation5 + $0x64] sm:$0xf]
    %v257 = vld [vmem:[#allocation5 + $0x68] sm:$0xf]
    %v258 = vld [vmem:[#allocation5 + $0x6c] sm:$0xf]
    %v259 = vld [vmem:[#allocation5 + $0x70] sm:$0xf]
    %v260 = vld [vmem:[#allocation5 + $0x74] sm:$0xf]
    %v261 = vld [vmem:[#allocation5 + $0x78] sm:$0xf]
    %v262 = vld [vmem:[#allocation5 + $0x7c] sm:$0xf]
    %v295 = vunpack.c.l.b16 %v231
    %v296 = vunpack.c.l.b16 %v232
    %v297 = vunpack.c.l.b16 %v233
    %v298 = vunpack.c.l.b16 %v234
    %v299 = vunpack.c.l.b16 %v235
    %v300 = vunpack.c.l.b16 %v236
    %v301 = vunpack.c.l.b16 %v237
    %v302 = vunpack.c.l.b16 %v238
    %v303 = vunpack.c.l.b16 %v239
    %v304 = vunpack.c.l.b16 %v240
    %v305 = vunpack.c.l.b16 %v241
    %v306 = vunpack.c.l.b16 %v242
    %v307 = vunpack.c.l.b16 %v243
    %v308 = vunpack.c.l.b16 %v244
    %v309 = vunpack.c.l.b16 %v245
    %v310 = vunpack.c.l.b16 %v246
    %v311 = vunpack.c.l.b16 %v247
    %v312 = vunpack.c.l.b16 %v248
    %v313 = vunpack.c.l.b16 %v249
    %v314 = vunpack.c.l.b16 %v250
    %v315 = vunpack.c.l.b16 %v251
    %v316 = vunpack.c.l.b16 %v252
    %v317 = vunpack.c.l.b16 %v253
    %v318 = vunpack.c.l.b16 %v254
    %v319 = vunpack.c.l.b16 %v255
    %v320 = vunpack.c.l.b16 %v256
    %v321 = vunpack.c.l.b16 %v257
    %v322 = vunpack.c.l.b16 %v258
    %v323 = vunpack.c.l.b16 %v259
    %v324 = vunpack.c.l.b16 %v260
    %v325 = vunpack.c.l.b16 %v261
    %v326 = vunpack.c.l.b16 %v262
    %v327 = vpack.c.b16 %v296, %v295
    %v328 = vpack.c.b16 %v298, %v297
    %v329 = vpack.c.b16 %v300, %v299
    %v330 = vpack.c.b16 %v302, %v301
    %v331 = vpack.c.b16 %v304, %v303
    %v332 = vpack.c.b16 %v306, %v305
    %v333 = vpack.c.b16 %v308, %v307
    %v334 = vpack.c.b16 %v310, %v309
    %v335 = vpack.c.b16 %v312, %v311
    %v336 = vpack.c.b16 %v314, %v313
    %v337 = vpack.c.b16 %v316, %v315
    %v338 = vpack.c.b16 %v318, %v317
    %v339 = vpack.c.b16 %v320, %v319
    %v340 = vpack.c.b16 %v322, %v321
    %v341 = vpack.c.b16 %v324, %v323
    %v342 = vpack.c.b16 %v326, %v325
    %359 = vmatprep.subr.bf16.mxu0 0
    %360 = vmatpush1.bf16.msra.mxu0 %v334
    %361 = vmatprep.subr.bf16.mxu0 0
    %362 = vmatpush1.bf16.msra.mxu0 %v333
    %363 = vmatprep.subr.bf16.mxu0 0
    %364 = vmatpush1.bf16.msra.mxu0 %v332
    %365 = vmatprep.subr.bf16.mxu0 0
    %366 = vmatpush1.bf16.msra.mxu0 %v331
    %367 = vmatprep.subr.bf16.mxu0 0
    %368 = vmatpush1.bf16.msra.mxu0 %v330
    %369 = vmatprep.subr.bf16.mxu0 0
    %370 = vmatpush1.bf16.msra.mxu0 %v329
    %371 = vmatprep.subr.bf16.mxu0 0
    %372 = vmatpush1.bf16.msra.mxu0 %v328
    %373 = vmatprep.subr.bf16.mxu0 0
    %374 = vmatpush1.bf16.msra.mxu0 %v327
    %375 = vmatprep.subr.bf16.mxu0 0
    %376 = vmatpush2.bf16.msra.mxu0 %v342
    %377 = vmatprep.subr.bf16.mxu0 0
    %378 = vmatpush2.bf16.msra.mxu0 %v341
    %379 = vmatprep.subr.bf16.mxu0 0
    %380 = vmatpush2.bf16.msra.mxu0 %v340
    %381 = vmatprep.subr.bf16.mxu0 0
    %382 = vmatpush2.bf16.msra.mxu0 %v339
    %383 = vmatprep.subr.bf16.mxu0 0
    %384 = vmatpush2.bf16.msra.mxu0 %v338
    %385 = vmatprep.subr.bf16.mxu0 0
    %386 = vmatpush2.bf16.msra.mxu0 %v337
    %387 = vmatprep.subr.bf16.mxu0 0
    %388 = vmatpush2.bf16.msra.mxu0 %v336
    %389 = vmatprep.subr.bf16.mxu0 0
    %390 = vmatpush2.bf16.msra.mxu0 %v335
    %391 = vmatprep.mubr.bf16.mxu0 %v224
    %392 = vmatmul.mubr.bf16.gmra.mxu0 %v223
    %v393 = vpop.f32.mrf.mxu0
    %v394 = vadd.f32 0.0, %v393
    %v395 = vpop.f32.mrf.mxu0
    %v396 = vpop.f32.mrf.mxu0
    %v397 = vadd.f32 0.0, %v396
    %v398 = vpop.f32.mrf.mxu0
    %399 = vmatprep.mubr.bf16.mxu0 %v226
    %400 = vmatmul.mubr.bf16.gmra.mxu0 %v225
    %v401 = vpop.f32.mrf.mxu0
    %v402 = vadd.f32 0.0, %v401
    %v403 = vpop.f32.mrf.mxu0
    %v404 = vpop.f32.mrf.mxu0
    %v405 = vadd.f32 0.0, %v404
    %v406 = vpop.f32.mrf.mxu0
    %407 = vmatprep.mubr.bf16.mxu0 %v228
    %408 = vmatmul.mubr.bf16.gmra.mxu0 %v227
    %v409 = vpop.f32.mrf.mxu0
    %v410 = vadd.f32 0.0, %v409
    %v411 = vpop.f32.mrf.mxu0
    %v412 = vpop.f32.mrf.mxu0
    %v413 = vadd.f32 0.0, %v412
    %v414 = vpop.f32.mrf.mxu0
    %415 = vmatprep.mubr.bf16.mxu0 %v230
    %416 = vmatmul.mubr.bf16.gmra.mxu0 %v229
    %v417 = vpop.f32.mrf.mxu0
    %v418 = vadd.f32 0.0, %v417
    %v419 = vpop.f32.mrf.mxu0
    %v420 = vpop.f32.mrf.mxu0
    %v421 = vadd.f32 0.0, %v420
    %v422 = vpop.f32.mrf.mxu0
    %423 = vdwg.mxu0
    %v424 = vpack.c.bf16 %v222, %v222
    %v425 = vld [vmem:[%s5] sm:$0xf]
    %v426 = vld [vmem:[%s5 + $0x4] sm:$0xf]
    %v427 = vld [vmem:[%s5 + $0x8] sm:$0xf]
    %v428 = vld [vmem:[%s5 + $0xc] sm:$0xf]
    %v429 = vld [vmem:[%s5 + $0x10] sm:$0xf]
    %v430 = vld [vmem:[%s5 + $0x14] sm:$0xf]
    %v431 = vld [vmem:[%s5 + $0x18] sm:$0xf]
    %v432 = vld [vmem:[%s5 + $0x1c] sm:$0xf]
    %v433 = vld [vmem:[%s5 + $0x20] sm:$0xf]
    %v434 = vld [vmem:[%s5 + $0x24] sm:$0xf]
    %v435 = vld [vmem:[%s5 + $0x28] sm:$0xf]
    %v436 = vld [vmem:[%s5 + $0x2c] sm:$0xf]
    %v437 = vld [vmem:[%s5 + $0x30] sm:$0xf]
    %v438 = vld [vmem:[%s5 + $0x34] sm:$0xf]
    %v439 = vld [vmem:[%s5 + $0x38] sm:$0xf]
    %v440 = vld [vmem:[%s5 + $0x3c] sm:$0xf]
    %v441 = vld [vmem:[#allocation7] sm:$0x1]
    %v443 = vlaneseq
    %v444 = vshrl.u32 %v443, 7
    %v445 = vsub.s32 0, %v444
    %v446 = vrot.slane %v441, %v445
    %v464 = vunpack.c.l.b16 %v425
    %v465 = vunpack.c.l.b16 %v426
    %v466 = vunpack.c.l.b16 %v427
    %v467 = vunpack.c.l.b16 %v428
    %v468 = vunpack.c.l.b16 %v429
    %v469 = vunpack.c.l.b16 %v430
    %v470 = vunpack.c.l.b16 %v431
    %v471 = vunpack.c.l.b16 %v432
    %v472 = vunpack.c.l.b16 %v433
    %v473 = vunpack.c.l.b16 %v434
    %v474 = vunpack.c.l.b16 %v435
    %v475 = vunpack.c.l.b16 %v436
    %v476 = vunpack.c.l.b16 %v437
    %v477 = vunpack.c.l.b16 %v438
    %v478 = vunpack.c.l.b16 %v439
    %v479 = vunpack.c.l.b16 %v440
    %v480 = vpack.c.b16 %v465, %v464
    %v481 = vpack.c.b16 %v467, %v466
    %v482 = vpack.c.b16 %v469, %v468
    %v483 = vpack.c.b16 %v471, %v470
    %v484 = vpack.c.b16 %v473, %v472
    %v485 = vpack.c.b16 %v475, %v474
    %v486 = vpack.c.b16 %v477, %v476
    %v487 = vpack.c.b16 %v479, %v478
    %496 = vmatprep.subr.bf16.mxu0 0
    %497 = vmatpush1.bf16.msra.mxu0 %v487
    %498 = vmatprep.subr.bf16.mxu0 0
    %499 = vmatpush1.bf16.msra.mxu0 %v486
    %500 = vmatprep.subr.bf16.mxu0 0
    %501 = vmatpush1.bf16.msra.mxu0 %v485
    %502 = vmatprep.subr.bf16.mxu0 0
    %503 = vmatpush1.bf16.msra.mxu0 %v484
    %504 = vmatprep.subr.bf16.mxu0 0
    %505 = vmatpush1.bf16.msra.mxu0 %v483
    %506 = vmatprep.subr.bf16.mxu0 0
    %507 = vmatpush1.bf16.msra.mxu0 %v482
    %508 = vmatprep.subr.bf16.mxu0 0
    %509 = vmatpush1.bf16.msra.mxu0 %v481
    %510 = vmatprep.subr.bf16.mxu0 0
    %511 = vmatpush1.bf16.msra.mxu0 %v480
    %512 = vmatprep.subr.bf16.mxu0 0
    %513 = vmatpush2.bf16.msra.mxu0 0
    %514 = vmatprep.subr.bf16.mxu0 0
    %515 = vmatpush2.bf16.msra.mxu0 0
    %516 = vmatprep.subr.bf16.mxu0 0
    %517 = vmatpush2.bf16.msra.mxu0 0
    %518 = vmatprep.subr.bf16.mxu0 0
    %519 = vmatpush2.bf16.msra.mxu0 0
    %520 = vmatprep.subr.bf16.mxu0 0
    %521 = vmatpush2.bf16.msra.mxu0 0
    %522 = vmatprep.subr.bf16.mxu0 0
    %523 = vmatpush2.bf16.msra.mxu0 0
    %524 = vmatprep.subr.bf16.mxu0 0
    %525 = vmatpush2.bf16.msra.mxu0 0
    %526 = vmatprep.subr.bf16.mxu0 0
    %527 = vmatpush2.bf16.msra.mxu0 0
    %528 = vmatprep.mubr.bf16.mxu0 0
    %529 = vmatmul.mubr.bf16.gmra.mxu0 %v424
    %v530 = vpop.f32.mrf.mxu0
    %v531 = vadd.f32 %v446, %v530
    %v532 = vpop.f32.mrf.mxu0
    %v533 = vpop.f32.mrf.mxu0
    %v534 = vpop.f32.mrf.mxu0
    %535 = vdwg.mxu0
    %v537 = vcombine.high %v531, %v531
    %v539 = vunpack.c.l.s4 1966171168
    %v540 = vunpack.c.0.s8 %v539
    %v541 = vlaneseq
    %v542 = vshrl.u32 %v541, 7
    %v543 = vsub.s32 %v540, %v542
    %v544 = vrot.slane %v531, %v543
    %v546 = vunpack.c.l.s4 1966171168
    %v547 = vunpack.c.0.s8 %v546
    %v548 = vlaneseq
    %v549 = vshrl.u32 %v548, 7
    %v550 = vsub.s32 %v547, %v549
    %v551 = vrot.slane %v537, %v550
    %v552 = vcombine.high %v544, %v544
    %v553 = vcombine.high %v551, %v551
    %v555 = vunpack.c.l.s4 1966171168
    %v556 = vunpack.c.0.s8 %v555
    %v557 = vlaneseq
    %v558 = vshrl.u32 %v557, 7
    %v559 = vsub.s32 %v556, %v558
    %v560 = vrot.slane %v544, %v559
    %v562 = vunpack.c.l.s4 1966171168
    %v563 = vunpack.c.0.s8 %v562
    %v564 = vlaneseq
    %v565 = vshrl.u32 %v564, 7
    %v566 = vsub.s32 %v563, %v565
    %v567 = vrot.slane %v551, %v566
    %v569 = vunpack.c.l.s4 1966171168
    %v570 = vunpack.c.0.s8 %v569
    %v571 = vlaneseq
    %v572 = vshrl.u32 %v571, 7
    %v573 = vsub.s32 %v570, %v572
    %v574 = vrot.slane %v552, %v573
    %v576 = vunpack.c.l.s4 1966171168
    %v577 = vunpack.c.0.s8 %v576
    %v578 = vlaneseq
    %v579 = vshrl.u32 %v578, 7
    %v580 = vsub.s32 %v577, %v579
    %v581 = vrot.slane %v553, %v580
    %v582 = vcombine.high %v560, %v560
    %v583 = vcombine.high %v567, %v567
    %v584 = vcombine.high %v574, %v574
    %v585 = vcombine.high %v581, %v581
    %v586 = vlaneseq
    %v587 = vshrl.u32 %v586, 7
    %v588 = vsub.s32 0, %v587
    %v589 = vrot.slane %v560, %v588
    %v590 = vlaneseq
    %v591 = vshrl.u32 %v590, 7
    %v592 = vsub.s32 0, %v591
    %v593 = vrot.slane %v574, %v592
    %v594 = vlaneseq
    %v595 = vshrl.u32 %v594, 7
    %v596 = vsub.s32 0, %v595
    %v597 = vrot.slane %v582, %v596
    %v598 = vlaneseq
    %v599 = vshrl.u32 %v598, 7
    %v600 = vsub.s32 0, %v599
    %v601 = vrot.slane %v584, %v600
    %v602 = vlaneseq
    %v603 = vshrl.u32 %v602, 7
    %v604 = vsub.s32 0, %v603
    %v605 = vrot.slane %v567, %v604
    %v606 = vlaneseq
    %v607 = vshrl.u32 %v606, 7
    %v608 = vsub.s32 0, %v607
    %v609 = vrot.slane %v581, %v608
    %v610 = vlaneseq
    %v611 = vshrl.u32 %v610, 7
    %v612 = vsub.s32 0, %v611
    %v613 = vrot.slane %v583, %v612
    %v614 = vlaneseq
    %v615 = vshrl.u32 %v614, 7
    %v616 = vsub.s32 0, %v615
    %v617 = vrot.slane %v585, %v616
    %v626 = vadd.f32 %v394, %v589
    %v627 = vadd.f32 %v397, %v593
    %v628 = vadd.f32 %v402, %v597
    %v629 = vadd.f32 %v405, %v601
    %v630 = vadd.f32 %v410, %v605
    %v631 = vadd.f32 %v413, %v609
    %v632 = vadd.f32 %v418, %v613
    %v633 = vadd.f32 %v421, %v617
    %v634 = vtanh.pop %v626
    %v635 = vtanh.pop %v627
    %v636 = vtanh.pop %v628
    %v637 = vtanh.pop %v629
    %v638 = vtanh.pop %v630
    %v639 = vtanh.pop %v631
    %v640 = vtanh.pop %v632
    %v641 = vtanh.pop %v633
    %v642 = vld [vmem:[#allocation8] sm:$0x1]
    %v644 = vlaneseq
    %v645 = vshrl.u32 %v644, 7
    %v646 = vsub.s32 0, %v645
    %v647 = vrot.slane %v642, %v646
    %v649 = vmul.f32 %v634, %v647
    %v650 = vmul.f32 %v635, %v647
    %v651 = vmul.f32 %v636, %v647
    %v652 = vmul.f32 %v637, %v647
    %v653 = vmul.f32 %v638, %v647
    %v654 = vmul.f32 %v639, %v647
    %v655 = vmul.f32 %v640, %v647
    %v656 = vmul.f32 %v641, %v647
    %657 = vadd.xlane.f32.xlu0 %v649
    %v658 = vpop.xlane.xlu0 %657
    %659 = vadd.xlane.f32.xlu0 %v650
    %v660 = vpop.xlane.xlu0 %659
    %661 = vadd.xlane.f32.xlu0 %v651
    %v662 = vpop.xlane.xlu0 %661
    %663 = vadd.xlane.f32.xlu0 %v652
    %v664 = vpop.xlane.xlu0 %663
    %665 = vadd.xlane.f32.xlu0 %v653
    %v666 = vpop.xlane.xlu0 %665
    %667 = vadd.xlane.f32.xlu0 %v654
    %v668 = vpop.xlane.xlu0 %667
    %669 = vadd.xlane.f32.xlu0 %v655
    %v670 = vpop.xlane.xlu0 %669
    %671 = vadd.xlane.f32.xlu0 %v656
    %v672 = vpop.xlane.xlu0 %671
    %v681 = vlaneseq
    %v682 = vand.u32 %v681, 127
    %v683 = vlaneseq
    %v684 = vshrl.u32 %v683, 7
    %v685 = vsub.s32 %v682, %v684
    %v686 = vrot.slane %v658, %v685
    %v687 = vlaneseq
    %v688 = vshrl.u32 %v687, 7
    %v689 = vsub.s32 %v682, %v688
    %v690 = vrot.slane %v660, %v689
    %v691 = vlaneseq
    %v692 = vshrl.u32 %v691, 7
    %v693 = vsub.s32 %v682, %v692
    %v694 = vrot.slane %v662, %v693
    %v695 = vlaneseq
    %v696 = vshrl.u32 %v695, 7
    %v697 = vsub.s32 %v682, %v696
    %v698 = vrot.slane %v664, %v697
    %v699 = vlaneseq
    %v700 = vshrl.u32 %v699, 7
    %v701 = vsub.s32 %v682, %v700
    %v702 = vrot.slane %v666, %v701
    %v703 = vlaneseq
    %v704 = vshrl.u32 %v703, 7
    %v705 = vsub.s32 %v682, %v704
    %v706 = vrot.slane %v668, %v705
    %v707 = vlaneseq
    %v708 = vshrl.u32 %v707, 7
    %v709 = vsub.s32 %v682, %v708
    %v710 = vrot.slane %v670, %v709
    %v711 = vlaneseq
    %v712 = vshrl.u32 %v711, 7
    %v713 = vsub.s32 %v682, %v712
    %v714 = vrot.slane %v672, %v713
    %vm715 = vcmask 1041409
    %v716 = vsel %vm715, %v690, %v686
    %vm717 = vcmask 1042434
    %v718 = vsel %vm717, %v694, %v716
    %vm719 = vcmask 1043459
    %v720 = vsel %vm719, %v698, %v718
    %vm721 = vcmask 1044484
    %v722 = vsel %vm721, %v702, %v720
    %vm723 = vcmask 1045509
    %v724 = vsel %vm723, %v706, %v722
    %vm725 = vcmask 1046534
    %v726 = vsel %vm725, %v710, %v724
    %vm727 = vcmask 1047559
    %v728 = vsel %vm727, %v714, %v726
    %vm730 = vcmask 64512
    %v731 = vsel %vm730, %v728, -inf
    %732 = vmax.xlane.f32.xlu0 %v731
    %v733 = vpop.xlane.xlu0 %732
    %v735 = vlaneseq
    %v736 = vshrl.u32 %v735, 7
    %v737 = vsub.s32 0, %v736
    %v738 = vrot.slane %v733, %v737
    %v739 = vlaneseq
    %v740 = vshrl.u32 %v739, 7
    %v741 = vsub.s32 1, %v740
    %v742 = vrot.slane %v733, %v741
    %v743 = vlaneseq
    %v744 = vshrl.u32 %v743, 7
    %v745 = vsub.s32 2, %v744
    %v746 = vrot.slane %v733, %v745
    %v747 = vlaneseq
    %v748 = vshrl.u32 %v747, 7
    %v749 = vsub.s32 3, %v748
    %v750 = vrot.slane %v733, %v749
    %v751 = vlaneseq
    %v752 = vshrl.u32 %v751, 7
    %v753 = vsub.s32 4, %v752
    %v754 = vrot.slane %v733, %v753
    %v755 = vlaneseq
    %v756 = vshrl.u32 %v755, 7
    %v757 = vsub.s32 5, %v756
    %v758 = vrot.slane %v733, %v757
    %v759 = vlaneseq
    %v760 = vshrl.u32 %v759, 7
    %v761 = vsub.s32 6, %v760
    %v762 = vrot.slane %v733, %v761
    %v763 = vlaneseq
    %v764 = vshrl.u32 %v763, 7
    %v765 = vsub.s32 7, %v764
    %v766 = vrot.slane %v733, %v765
    %v775 = vsub.f32 %v658, %v738
    %v776 = vsub.f32 %v660, %v742
    %v777 = vsub.f32 %v662, %v746
    %v778 = vsub.f32 %v664, %v750
    %v779 = vsub.f32 %v666, %v754
    %v780 = vsub.f32 %v668, %v758
    %v781 = vsub.f32 %v670, %v762
    %v782 = vsub.f32 %v672, %v766
    %v783 = vmul.f32 %v775, 1.442695
    %v784 = vpow.pop %v783
    %v785 = vmul.f32 %v776, 1.442695
    %v786 = vpow.pop %v785
    %v787 = vmul.f32 %v777, 1.442695
    %v788 = vpow.pop %v787
    %v789 = vmul.f32 %v778, 1.442695
    %v790 = vpow.pop %v789
    %v791 = vmul.f32 %v779, 1.442695
    %v792 = vpow.pop %v791
    %v793 = vmul.f32 %v780, 1.442695
    %v794 = vpow.pop %v793
    %v795 = vmul.f32 %v781, 1.442695
    %v796 = vpow.pop %v795
    %v797 = vmul.f32 %v782, 1.442695
    %v798 = vpow.pop %v797
    %807 = vset.pattern.permute.xlu0 0
    %808 = vperm.xlu0 %807, %v784
    %v809 = vpop.permute.xlu0 %808
    %810 = vset.pattern.permute.xlu0 0
    %811 = vperm.xlu0 %810, %v786
    %v812 = vpop.permute.xlu0 %811
    %813 = vset.pattern.permute.xlu0 0
    %814 = vperm.xlu0 %813, %v788
    %v815 = vpop.permute.xlu0 %814
    %816 = vset.pattern.permute.xlu0 0
    %817 = vperm.xlu0 %816, %v790
    %v818 = vpop.permute.xlu0 %817
    %819 = vset.pattern.permute.xlu0 0
    %820 = vperm.xlu0 %819, %v792
    %v821 = vpop.permute.xlu0 %820
    %822 = vset.pattern.permute.xlu0 0
    %823 = vperm.xlu0 %822, %v794
    %v824 = vpop.permute.xlu0 %823
    %825 = vset.pattern.permute.xlu0 0
    %826 = vperm.xlu0 %825, %v796
    %v827 = vpop.permute.xlu0 %826
    %828 = vset.pattern.permute.xlu0 0
    %829 = vperm.xlu0 %828, %v798
    %v830 = vpop.permute.xlu0 %829
    %v831 = vlaneseq
    %v832 = vshrl.u32 %v831, 7
    %v833 = vsub.s32 %v682, %v832
    %v834 = vrot.slane %v809, %v833
    %v835 = vlaneseq
    %v836 = vshrl.u32 %v835, 7
    %v837 = vsub.s32 %v682, %v836
    %v838 = vrot.slane %v812, %v837
    %v839 = vlaneseq
    %v840 = vshrl.u32 %v839, 7
    %v841 = vsub.s32 %v682, %v840
    %v842 = vrot.slane %v815, %v841
    %v843 = vlaneseq
    %v844 = vshrl.u32 %v843, 7
    %v845 = vsub.s32 %v682, %v844
    %v846 = vrot.slane %v818, %v845
    %v847 = vlaneseq
    %v848 = vshrl.u32 %v847, 7
    %v849 = vsub.s32 %v682, %v848
    %v850 = vrot.slane %v821, %v849
    %v851 = vlaneseq
    %v852 = vshrl.u32 %v851, 7
    %v853 = vsub.s32 %v682, %v852
    %v854 = vrot.slane %v824, %v853
    %v855 = vlaneseq
    %v856 = vshrl.u32 %v855, 7
    %v857 = vsub.s32 %v682, %v856
    %v858 = vrot.slane %v827, %v857
    %v859 = vlaneseq
    %v860 = vshrl.u32 %v859, 7
    %v861 = vsub.s32 %v682, %v860
    %v862 = vrot.slane %v830, %v861
    %v863 = vsel %vm715, %v838, %v834
    %v864 = vsel %vm717, %v842, %v863
    %v865 = vsel %vm719, %v846, %v864
    %v866 = vsel %vm721, %v850, %v865
    %v867 = vsel %vm723, %v854, %v866
    %v868 = vsel %vm725, %v858, %v867
    %v869 = vsel %vm727, %v862, %v868
    %v871 = vsel %vm730, %v869, 0.0
    %872 = vadd.xlane.f32.xlu0 %v871
    %v873 = vpop.xlane.xlu0 %872
    %v874 = vrcp.pop %v873
    %v876 = vlaneseq
    %v877 = vshrl.u32 %v876, 7
    %v878 = vsub.s32 0, %v877
    %v879 = vrot.slane %v874, %v878
    %v880 = vlaneseq
    %v881 = vshrl.u32 %v880, 7
    %v882 = vsub.s32 1, %v881
    %v883 = vrot.slane %v874, %v882
    %v884 = vlaneseq
    %v885 = vshrl.u32 %v884, 7
    %v886 = vsub.s32 2, %v885
    %v887 = vrot.slane %v874, %v886
    %v888 = vlaneseq
    %v889 = vshrl.u32 %v888, 7
    %v890 = vsub.s32 3, %v889
    %v891 = vrot.slane %v874, %v890
    %v892 = vlaneseq
    %v893 = vshrl.u32 %v892, 7
    %v894 = vsub.s32 4, %v893
    %v895 = vrot.slane %v874, %v894
    %v896 = vlaneseq
    %v897 = vshrl.u32 %v896, 7
    %v898 = vsub.s32 5, %v897
    %v899 = vrot.slane %v874, %v898
    %v900 = vlaneseq
    %v901 = vshrl.u32 %v900, 7
    %v902 = vsub.s32 6, %v901
    %v903 = vrot.slane %v874, %v902
    %v904 = vlaneseq
    %v905 = vshrl.u32 %v904, 7
    %v906 = vsub.s32 7, %v905
    %v907 = vrot.slane %v874, %v906
    %v916 = vmul.f32 %v784, %v879
    %v917 = vmul.f32 %v786, %v883
    %v918 = vmul.f32 %v788, %v887
    %v919 = vmul.f32 %v790, %v891
    %v920 = vmul.f32 %v792, %v895
    %v921 = vmul.f32 %v794, %v899
    %v922 = vmul.f32 %v796, %v903
    %v923 = vmul.f32 %v798, %v907
    %932 = vset.pattern.permute.xlu0 0
    %933 = vperm.xlu0 %932, %v916
    %v934 = vpop.permute.xlu0 %933
    %935 = vset.pattern.permute.xlu0 0
    %936 = vperm.xlu0 %935, %v917
    %v937 = vpop.permute.xlu0 %936
    %938 = vset.pattern.permute.xlu0 0
    %939 = vperm.xlu0 %938, %v918
    %v940 = vpop.permute.xlu0 %939
    %941 = vset.pattern.permute.xlu0 0
    %942 = vperm.xlu0 %941, %v919
    %v943 = vpop.permute.xlu0 %942
    %944 = vset.pattern.permute.xlu0 0
    %945 = vperm.xlu0 %944, %v920
    %v946 = vpop.permute.xlu0 %945
    %947 = vset.pattern.permute.xlu0 0
    %948 = vperm.xlu0 %947, %v921
    %v949 = vpop.permute.xlu0 %948
    %950 = vset.pattern.permute.xlu0 0
    %951 = vperm.xlu0 %950, %v922
    %v952 = vpop.permute.xlu0 %951
    %953 = vset.pattern.permute.xlu0 0
    %954 = vperm.xlu0 %953, %v923
    %v955 = vpop.permute.xlu0 %954
    %v956 = vlaneseq
    %v957 = vshrl.u32 %v956, 7
    %v958 = vsub.s32 %v682, %v957
    %v959 = vrot.slane %v934, %v958
    %v960 = vlaneseq
    %v961 = vshrl.u32 %v960, 7
    %v962 = vsub.s32 %v682, %v961
    %v963 = vrot.slane %v937, %v962
    %v964 = vlaneseq
    %v965 = vshrl.u32 %v964, 7
    %v966 = vsub.s32 %v682, %v965
    %v967 = vrot.slane %v940, %v966
    %v968 = vlaneseq
    %v969 = vshrl.u32 %v968, 7
    %v970 = vsub.s32 %v682, %v969
    %v971 = vrot.slane %v943, %v970
    %v972 = vlaneseq
    %v973 = vshrl.u32 %v972, 7
    %v974 = vsub.s32 %v682, %v973
    %v975 = vrot.slane %v946, %v974
    %v976 = vlaneseq
    %v977 = vshrl.u32 %v976, 7
    %v978 = vsub.s32 %v682, %v977
    %v979 = vrot.slane %v949, %v978
    %v980 = vlaneseq
    %v981 = vshrl.u32 %v980, 7
    %v982 = vsub.s32 %v682, %v981
    %v983 = vrot.slane %v952, %v982
    %v984 = vlaneseq
    %v985 = vshrl.u32 %v984, 7
    %v986 = vsub.s32 %v682, %v985
    %v987 = vrot.slane %v955, %v986
    %v988 = vsel %vm715, %v963, %v959
    %v989 = vsel %vm717, %v967, %v988
    %v990 = vsel %vm719, %v971, %v989
    %v991 = vsel %vm721, %v975, %v990
    %v992 = vsel %vm723, %v979, %v991
    %v993 = vsel %vm725, %v983, %v992
    %v994 = vsel %vm727, %v987, %v993
    %996 = vst.msk [vmem:[#allocation24] sm:$0xff] %vm730, %v994
    %v1005 = vmul.f32 %v934, %v204
    %v1006 = vmul.f32 %v934, %v205
    %v1007 = vmul.f32 %v937, %v206
    %v1008 = vmul.f32 %v937, %v207
    %v1009 = vmul.f32 %v940, %v208
    %v1010 = vmul.f32 %v940, %v209
    %v1011 = vmul.f32 %v943, %v210
    %v1012 = vmul.f32 %v943, %v211
    %v1013 = vmul.f32 %v946, %v212
    %v1014 = vmul.f32 %v946, %v213
    %v1015 = vmul.f32 %v949, %v214
    %v1016 = vmul.f32 %v949, %v215
    %v1017 = vmul.f32 %v952, %v216
    %v1018 = vmul.f32 %v952, %v217
    %v1019 = vmul.f32 %v955, %v218
    %v1020 = vmul.f32 %v955, %v219
    %v1021 = vrot.slane %v1005, 4
    %v1022 = vadd.f32 %v1005, %v1021
    %v1023 = vrot.slane %v1022, 2
    %v1024 = vadd.f32 %v1022, %v1023
    %v1025 = vrot.slane %v1024, 1
    %v1026 = vadd.f32 %v1024, %v1025
    %v1027 = vrot.slane %v1006, 4
    %v1028 = vadd.f32 %v1006, %v1027
    %v1029 = vrot.slane %v1028, 2
    %v1030 = vadd.f32 %v1028, %v1029
    %v1031 = vrot.slane %v1030, 1
    %v1032 = vadd.f32 %v1030, %v1031
    %v1033 = vrot.slane %v1007, 4
    %v1034 = vadd.f32 %v1007, %v1033
    %v1035 = vrot.slane %v1034, 2
    %v1036 = vadd.f32 %v1034, %v1035
    %v1037 = vrot.slane %v1036, 1
    %v1038 = vadd.f32 %v1036, %v1037
    %v1039 = vrot.slane %v1008, 4
    %v1040 = vadd.f32 %v1008, %v1039
    %v1041 = vrot.slane %v1040, 2
    %v1042 = vadd.f32 %v1040, %v1041
    %v1043 = vrot.slane %v1042, 1
    %v1044 = vadd.f32 %v1042, %v1043
    %v1045 = vrot.slane %v1009, 4
    %v1046 = vadd.f32 %v1009, %v1045
    %v1047 = vrot.slane %v1046, 2
    %v1048 = vadd.f32 %v1046, %v1047
    %v1049 = vrot.slane %v1048, 1
    %v1050 = vadd.f32 %v1048, %v1049
    %v1051 = vrot.slane %v1010, 4
    %v1052 = vadd.f32 %v1010, %v1051
    %v1053 = vrot.slane %v1052, 2
    %v1054 = vadd.f32 %v1052, %v1053
    %v1055 = vrot.slane %v1054, 1
    %v1056 = vadd.f32 %v1054, %v1055
    %v1057 = vrot.slane %v1011, 4
    %v1058 = vadd.f32 %v1011, %v1057
    %v1059 = vrot.slane %v1058, 2
    %v1060 = vadd.f32 %v1058, %v1059
    %v1061 = vrot.slane %v1060, 1
    %v1062 = vadd.f32 %v1060, %v1061
    %v1063 = vrot.slane %v1012, 4
    %v1064 = vadd.f32 %v1012, %v1063
    %v1065 = vrot.slane %v1064, 2
    %v1066 = vadd.f32 %v1064, %v1065
    %v1067 = vrot.slane %v1066, 1
    %v1068 = vadd.f32 %v1066, %v1067
    %v1069 = vrot.slane %v1013, 4
    %v1070 = vadd.f32 %v1013, %v1069
    %v1071 = vrot.slane %v1070, 2
    %v1072 = vadd.f32 %v1070, %v1071
    %v1073 = vrot.slane %v1072, 1
    %v1074 = vadd.f32 %v1072, %v1073
    %v1075 = vrot.slane %v1014, 4
    %v1076 = vadd.f32 %v1014, %v1075
    %v1077 = vrot.slane %v1076, 2
    %v1078 = vadd.f32 %v1076, %v1077
    %v1079 = vrot.slane %v1078, 1
    %v1080 = vadd.f32 %v1078, %v1079
    %v1081 = vrot.slane %v1015, 4
    %v1082 = vadd.f32 %v1015, %v1081
    %v1083 = vrot.slane %v1082, 2
    %v1084 = vadd.f32 %v1082, %v1083
    %v1085 = vrot.slane %v1084, 1
    %v1086 = vadd.f32 %v1084, %v1085
    %v1087 = vrot.slane %v1016, 4
    %v1088 = vadd.f32 %v1016, %v1087
    %v1089 = vrot.slane %v1088, 2
    %v1090 = vadd.f32 %v1088, %v1089
    %v1091 = vrot.slane %v1090, 1
    %v1092 = vadd.f32 %v1090, %v1091
    %v1093 = vrot.slane %v1017, 4
    %v1094 = vadd.f32 %v1017, %v1093
    %v1095 = vrot.slane %v1094, 2
    %v1096 = vadd.f32 %v1094, %v1095
    %v1097 = vrot.slane %v1096, 1
    %v1098 = vadd.f32 %v1096, %v1097
    %v1099 = vrot.slane %v1018, 4
    %v1100 = vadd.f32 %v1018, %v1099
    %v1101 = vrot.slane %v1100, 2
    %v1102 = vadd.f32 %v1100, %v1101
    %v1103 = vrot.slane %v1102, 1
    %v1104 = vadd.f32 %v1102, %v1103
    %v1105 = vrot.slane %v1019, 4
    %v1106 = vadd.f32 %v1019, %v1105
    %v1107 = vrot.slane %v1106, 2
    %v1108 = vadd.f32 %v1106, %v1107
    %v1109 = vrot.slane %v1108, 1
    %v1110 = vadd.f32 %v1108, %v1109
    %v1111 = vrot.slane %v1020, 4
    %v1112 = vadd.f32 %v1020, %v1111
    %v1113 = vrot.slane %v1112, 2
    %v1114 = vadd.f32 %v1112, %v1113
    %v1115 = vrot.slane %v1114, 1
    %v1116 = vadd.f32 %v1114, %v1115
    %v1117 = vld [vmem:[%s2] sm:$0xff]
    %v1118 = vld [vmem:[%s221] sm:$0xff]
    %v1119 = vpack.c.bf16 %v220, %v220
    %v1120 = vld [vmem:[#allocation10] sm:$0xff]
    %v1121 = vld [vmem:[#allocation10 + $0x8] sm:$0xff]
    %v1122 = vld [vmem:[#allocation10 + $0x10] sm:$0xff]
    %v1123 = vld [vmem:[#allocation10 + $0x18] sm:$0xff]
    %v1124 = vld [vmem:[#allocation10 + $0x20] sm:$0xff]
    %v1125 = vld [vmem:[#allocation10 + $0x28] sm:$0xff]
    %v1126 = vld [vmem:[#allocation10 + $0x30] sm:$0xff]
    %v1127 = vld [vmem:[#allocation10 + $0x38] sm:$0xff]
    %v1128 = vld [vmem:[#allocation10 + $0x40] sm:$0xff]
    %v1129 = vld [vmem:[#allocation10 + $0x48] sm:$0xff]
    %v1130 = vld [vmem:[#allocation10 + $0x50] sm:$0xff]
    %v1131 = vld [vmem:[#allocation10 + $0x58] sm:$0xff]
    %v1132 = vld [vmem:[#allocation10 + $0x60] sm:$0xff]
    %v1133 = vld [vmem:[#allocation10 + $0x68] sm:$0xff]
    %v1134 = vld [vmem:[#allocation10 + $0x70] sm:$0xff]
    %v1135 = vld [vmem:[#allocation10 + $0x78] sm:$0xff]
    %v1136 = vld [vmem:[#allocation10 + $0x80] sm:$0xff]
    %v1137 = vld [vmem:[#allocation10 + $0x88] sm:$0xff]
    %v1138 = vld [vmem:[#allocation10 + $0x90] sm:$0xff]
    %v1139 = vld [vmem:[#allocation10 + $0x98] sm:$0xff]
    %v1140 = vld [vmem:[#allocation10 + $0xa0] sm:$0xff]
    %v1141 = vld [vmem:[#allocation10 + $0xa8] sm:$0xff]
    %v1142 = vld [vmem:[#allocation10 + $0xb0] sm:$0xff]
    %v1143 = vld [vmem:[#allocation10 + $0xb8] sm:$0xff]
    %v1144 = vld [vmem:[#allocation10 + $0xc0] sm:$0xff]
    %v1145 = vld [vmem:[#allocation10 + $0xc8] sm:$0xff]
    %v1146 = vld [vmem:[#allocation10 + $0xd0] sm:$0xff]
    %v1147 = vld [vmem:[#allocation10 + $0xd8] sm:$0xff]
    %v1148 = vld [vmem:[#allocation10 + $0xe0] sm:$0xff]
    %v1149 = vld [vmem:[#allocation10 + $0xe8] sm:$0xff]
    %v1150 = vld [vmem:[#allocation10 + $0xf0] sm:$0xff]
    %v1151 = vld [vmem:[#allocation10 + $0xf8] sm:$0xff]
    %v1152 = vld [vmem:[#allocation10 + $0x100] sm:$0xff]
    %v1153 = vld [vmem:[#allocation10 + $0x108] sm:$0xff]
    %v1154 = vld [vmem:[#allocation10 + $0x110] sm:$0xff]
    %v1155 = vld [vmem:[#allocation10 + $0x118] sm:$0xff]
    %v1156 = vld [vmem:[#allocation10 + $0x120] sm:$0xff]
    %v1157 = vld [vmem:[#allocation10 + $0x128] sm:$0xff]
    %v1158 = vld [vmem:[#allocation10 + $0x130] sm:$0xff]
    %v1159 = vld [vmem:[#allocation10 + $0x138] sm:$0xff]
    %v1160 = vld [vmem:[#allocation10 + $0x140] sm:$0xff]
    %v1161 = vld [vmem:[#allocation10 + $0x148] sm:$0xff]
    %v1162 = vld [vmem:[#allocation10 + $0x150] sm:$0xff]
    %v1163 = vld [vmem:[#allocation10 + $0x158] sm:$0xff]
    %v1164 = vld [vmem:[#allocation10 + $0x160] sm:$0xff]
    %v1165 = vld [vmem:[#allocation10 + $0x168] sm:$0xff]
    %v1166 = vld [vmem:[#allocation10 + $0x170] sm:$0xff]
    %v1167 = vld [vmem:[#allocation10 + $0x178] sm:$0xff]
    %v1168 = vld [vmem:[#allocation10 + $0x180] sm:$0xff]
    %v1169 = vld [vmem:[#allocation10 + $0x188] sm:$0xff]
    %v1170 = vld [vmem:[#allocation10 + $0x190] sm:$0xff]
    %v1171 = vld [vmem:[#allocation10 + $0x198] sm:$0xff]
    %v1172 = vld [vmem:[#allocation10 + $0x1a0] sm:$0xff]
    %v1173 = vld [vmem:[#allocation10 + $0x1a8] sm:$0xff]
    %v1174 = vld [vmem:[#allocation10 + $0x1b0] sm:$0xff]
    %v1175 = vld [vmem:[#allocation10 + $0x1b8] sm:$0xff]
    %v1176 = vld [vmem:[#allocation10 + $0x1c0] sm:$0xff]
    %v1177 = vld [vmem:[#allocation10 + $0x1c8] sm:$0xff]
    %v1178 = vld [vmem:[#allocation10 + $0x1d0] sm:$0xff]
    %v1179 = vld [vmem:[#allocation10 + $0x1d8] sm:$0xff]
    %v1180 = vld [vmem:[#allocation10 + $0x1e0] sm:$0xff]
    %v1181 = vld [vmem:[#allocation10 + $0x1e8] sm:$0xff]
    %v1182 = vld [vmem:[#allocation10 + $0x1f0] sm:$0xff]
    %v1183 = vld [vmem:[#allocation10 + $0x1f8] sm:$0xff]
    %v1184 = vpack.c.bf16 %v1026, %v1026
    %v1185 = vpack.c.bf16 %v1032, %v1032
    %v1186 = vpack.c.bf16 %v1038, %v1038
    %v1187 = vpack.c.bf16 %v1044, %v1044
    %v1188 = vpack.c.bf16 %v1050, %v1050
    %v1189 = vpack.c.bf16 %v1056, %v1056
    %v1190 = vpack.c.bf16 %v1062, %v1062
    %v1191 = vpack.c.bf16 %v1068, %v1068
    %v1192 = vpack.c.bf16 %v1074, %v1074
    %v1193 = vpack.c.bf16 %v1080, %v1080
    %v1194 = vpack.c.bf16 %v1086, %v1086
    %v1195 = vpack.c.bf16 %v1092, %v1092
    %v1196 = vpack.c.bf16 %v1098, %v1098
    %v1197 = vpack.c.bf16 %v1104, %v1104
    %v1198 = vpack.c.bf16 %v1110, %v1110
    %v1199 = vpack.c.bf16 %v1116, %v1116
    %v1200 = vld [vmem:[#allocation11] sm:$0xff]
    %v1201 = vld [vmem:[#allocation11 + $0x8] sm:$0xff]
    %v1202 = vld [vmem:[#allocation11 + $0x10] sm:$0xff]
    %v1203 = vld [vmem:[#allocation11 + $0x18] sm:$0xff]
    %v1204 = vld [vmem:[#allocation11 + $0x20] sm:$0xff]
    %v1205 = vld [vmem:[#allocation11 + $0x28] sm:$0xff]
    %v1206 = vld [vmem:[#allocation11 + $0x30] sm:$0xff]
    %v1207 = vld [vmem:[#allocation11 + $0x38] sm:$0xff]
    %v1208 = vld [vmem:[#allocation11 + $0x40] sm:$0xff]
    %v1209 = vld [vmem:[#allocation11 + $0x48] sm:$0xff]
    %v1210 = vld [vmem:[#allocation11 + $0x50] sm:$0xff]
    %v1211 = vld [vmem:[#allocation11 + $0x58] sm:$0xff]
    %v1212 = vld [vmem:[#allocation11 + $0x60] sm:$0xff]
    %v1213 = vld [vmem:[#allocation11 + $0x68] sm:$0xff]
    %v1214 = vld [vmem:[#allocation11 + $0x70] sm:$0xff]
    %v1215 = vld [vmem:[#allocation11 + $0x78] sm:$0xff]
    %v1216 = vld [vmem:[#allocation11 + $0x80] sm:$0xff]
    %v1217 = vld [vmem:[#allocation11 + $0x88] sm:$0xff]
    %v1218 = vld [vmem:[#allocation11 + $0x90] sm:$0xff]
    %v1219 = vld [vmem:[#allocation11 + $0x98] sm:$0xff]
    %v1220 = vld [vmem:[#allocation11 + $0xa0] sm:$0xff]
    %v1221 = vld [vmem:[#allocation11 + $0xa8] sm:$0xff]
    %v1222 = vld [vmem:[#allocation11 + $0xb0] sm:$0xff]
    %v1223 = vld [vmem:[#allocation11 + $0xb8] sm:$0xff]
    %v1224 = vld [vmem:[#allocation11 + $0xc0] sm:$0xff]
    %v1225 = vld [vmem:[#allocation11 + $0xc8] sm:$0xff]
    %v1226 = vld [vmem:[#allocation11 + $0xd0] sm:$0xff]
    %v1227 = vld [vmem:[#allocation11 + $0xd8] sm:$0xff]
    %v1228 = vld [vmem:[#allocation11 + $0xe0] sm:$0xff]
    %v1229 = vld [vmem:[#allocation11 + $0xe8] sm:$0xff]
    %v1230 = vld [vmem:[#allocation11 + $0xf0] sm:$0xff]
    %v1231 = vld [vmem:[#allocation11 + $0xf8] sm:$0xff]
    %v1232 = vld [vmem:[#allocation11 + $0x100] sm:$0xff]
    %v1233 = vld [vmem:[#allocation11 + $0x108] sm:$0xff]
    %v1234 = vld [vmem:[#allocation11 + $0x110] sm:$0xff]
    %v1235 = vld [vmem:[#allocation11 + $0x118] sm:$0xff]
    %v1236 = vld [vmem:[#allocation11 + $0x120] sm:$0xff]
    %v1237 = vld [vmem:[#allocation11 + $0x128] sm:$0xff]
    %v1238 = vld [vmem:[#allocation11 + $0x130] sm:$0xff]
    %v1239 = vld [vmem:[#allocation11 + $0x138] sm:$0xff]
    %v1240 = vld [vmem:[#allocation11 + $0x140] sm:$0xff]
    %v1241 = vld [vmem:[#allocation11 + $0x148] sm:$0xff]
    %v1242 = vld [vmem:[#allocation11 + $0x150] sm:$0xff]
    %v1243 = vld [vmem:[#allocation11 + $0x158] sm:$0xff]
    %v1244 = vld [vmem:[#allocation11 + $0x160] sm:$0xff]
    %v1245 = vld [vmem:[#allocation11 + $0x168] sm:$0xff]
    %v1246 = vld [vmem:[#allocation11 + $0x170] sm:$0xff]
    %v1247 = vld [vmem:[#allocation11 + $0x178] sm:$0xff]
    %v1248 = vld [vmem:[#allocation11 + $0x180] sm:$0xff]
    %v1249 = vld [vmem:[#allocation11 + $0x188] sm:$0xff]
    %v1250 = vld [vmem:[#allocation11 + $0x190] sm:$0xff]
    %v1251 = vld [vmem:[#allocation11 + $0x198] sm:$0xff]
    %v1252 = vld [vmem:[#allocation11 + $0x1a0] sm:$0xff]
    %v1253 = vld [vmem:[#allocation11 + $0x1a8] sm:$0xff]
    %v1254 = vld [vmem:[#allocation11 + $0x1b0] sm:$0xff]
    %v1255 = vld [vmem:[#allocation11 + $0x1b8] sm:$0xff]
    %v1256 = vld [vmem:[#allocation11 + $0x1c0] sm:$0xff]
    %v1257 = vld [vmem:[#allocation11 + $0x1c8] sm:$0xff]
    %v1258 = vld [vmem:[#allocation11 + $0x1d0] sm:$0xff]
    %v1259 = vld [vmem:[#allocation11 + $0x1d8] sm:$0xff]
    %v1260 = vld [vmem:[#allocation11 + $0x1e0] sm:$0xff]
    %v1261 = vld [vmem:[#allocation11 + $0x1e8] sm:$0xff]
    %v1262 = vld [vmem:[#allocation11 + $0x1f0] sm:$0xff]
    %v1263 = vld [vmem:[#allocation11 + $0x1f8] sm:$0xff]
    %v1264 = vld [vmem:[#allocation11 + $0x200] sm:$0xff]
    %v1265 = vld [vmem:[#allocation11 + $0x208] sm:$0xff]
    %v1266 = vld [vmem:[#allocation11 + $0x210] sm:$0xff]
    %v1267 = vld [vmem:[#allocation11 + $0x218] sm:$0xff]
    %v1268 = vld [vmem:[#allocation11 + $0x220] sm:$0xff]
    %v1269 = vld [vmem:[#allocation11 + $0x228] sm:$0xff]
    %v1270 = vld [vmem:[#allocation11 + $0x230] sm:$0xff]
    %v1271 = vld [vmem:[#allocation11 + $0x238] sm:$0xff]
    %v1272 = vld [vmem:[#allocation11 + $0x240] sm:$0xff]
    %v1273 = vld [vmem:[#allocation11 + $0x248] sm:$0xff]
    %v1274 = vld [vmem:[#allocation11 + $0x250] sm:$0xff]
    %v1275 = vld [vmem:[#allocation11 + $0x258] sm:$0xff]
    %v1276 = vld [vmem:[#allocation11 + $0x260] sm:$0xff]
    %v1277 = vld [vmem:[#allocation11 + $0x268] sm:$0xff]
    %v1278 = vld [vmem:[#allocation11 + $0x270] sm:$0xff]
    %v1279 = vld [vmem:[#allocation11 + $0x278] sm:$0xff]
    %v1280 = vld [vmem:[#allocation11 + $0x280] sm:$0xff]
    %v1281 = vld [vmem:[#allocation11 + $0x288] sm:$0xff]
    %v1282 = vld [vmem:[#allocation11 + $0x290] sm:$0xff]
    %v1283 = vld [vmem:[#allocation11 + $0x298] sm:$0xff]
    %v1284 = vld [vmem:[#allocation11 + $0x2a0] sm:$0xff]
    %v1285 = vld [vmem:[#allocation11 + $0x2a8] sm:$0xff]
    %v1286 = vld [vmem:[#allocation11 + $0x2b0] sm:$0xff]
    %v1287 = vld [vmem:[#allocation11 + $0x2b8] sm:$0xff]
    %v1288 = vld [vmem:[#allocation11 + $0x2c0] sm:$0xff]
    %v1289 = vld [vmem:[#allocation11 + $0x2c8] sm:$0xff]
    %v1290 = vld [vmem:[#allocation11 + $0x2d0] sm:$0xff]
    %v1291 = vld [vmem:[#allocation11 + $0x2d8] sm:$0xff]
    %v1292 = vld [vmem:[#allocation11 + $0x2e0] sm:$0xff]
    %v1293 = vld [vmem:[#allocation11 + $0x2e8] sm:$0xff]
    %v1294 = vld [vmem:[#allocation11 + $0x2f0] sm:$0xff]
    %v1295 = vld [vmem:[#allocation11 + $0x2f8] sm:$0xff]
    %v1296 = vld [vmem:[#allocation11 + $0x300] sm:$0xff]
    %v1297 = vld [vmem:[#allocation11 + $0x308] sm:$0xff]
    %v1298 = vld [vmem:[#allocation11 + $0x310] sm:$0xff]
    %v1299 = vld [vmem:[#allocation11 + $0x318] sm:$0xff]
    %v1300 = vld [vmem:[#allocation11 + $0x320] sm:$0xff]
    %v1301 = vld [vmem:[#allocation11 + $0x328] sm:$0xff]
    %v1302 = vld [vmem:[#allocation11 + $0x330] sm:$0xff]
    %v1303 = vld [vmem:[#allocation11 + $0x338] sm:$0xff]
    %v1304 = vld [vmem:[#allocation11 + $0x340] sm:$0xff]
    %v1305 = vld [vmem:[#allocation11 + $0x348] sm:$0xff]
    %v1306 = vld [vmem:[#allocation11 + $0x350] sm:$0xff]
    %v1307 = vld [vmem:[#allocation11 + $0x358] sm:$0xff]
    %v1308 = vld [vmem:[#allocation11 + $0x360] sm:$0xff]
    %v1309 = vld [vmem:[#allocation11 + $0x368] sm:$0xff]
    %v1310 = vld [vmem:[#allocation11 + $0x370] sm:$0xff]
    %v1311 = vld [vmem:[#allocation11 + $0x378] sm:$0xff]
    %v1312 = vld [vmem:[#allocation11 + $0x380] sm:$0xff]
    %v1313 = vld [vmem:[#allocation11 + $0x388] sm:$0xff]
    %v1314 = vld [vmem:[#allocation11 + $0x390] sm:$0xff]
    %v1315 = vld [vmem:[#allocation11 + $0x398] sm:$0xff]
    %v1316 = vld [vmem:[#allocation11 + $0x3a0] sm:$0xff]
    %v1317 = vld [vmem:[#allocation11 + $0x3a8] sm:$0xff]
    %v1318 = vld [vmem:[#allocation11 + $0x3b0] sm:$0xff]
    %v1319 = vld [vmem:[#allocation11 + $0x3b8] sm:$0xff]
    %v1320 = vld [vmem:[#allocation11 + $0x3c0] sm:$0xff]
    %v1321 = vld [vmem:[#allocation11 + $0x3c8] sm:$0xff]
    %v1322 = vld [vmem:[#allocation11 + $0x3d0] sm:$0xff]
    %v1323 = vld [vmem:[#allocation11 + $0x3d8] sm:$0xff]
    %v1324 = vld [vmem:[#allocation11 + $0x3e0] sm:$0xff]
    %v1325 = vld [vmem:[#allocation11 + $0x3e8] sm:$0xff]
    %v1326 = vld [vmem:[#allocation11 + $0x3f0] sm:$0xff]
    %v1327 = vld [vmem:[#allocation11 + $0x3f8] sm:$0xff]
    %v1344 = vunpack.c.l.b16 %v1184
    %v1345 = vunpack.c.l.b16 %v1185
    %v1346 = vunpack.c.l.b16 %v1186
    %v1347 = vunpack.c.l.b16 %v1187
    %v1348 = vunpack.c.l.b16 %v1188
    %v1349 = vunpack.c.l.b16 %v1189
    %v1350 = vunpack.c.l.b16 %v1190
    %v1351 = vunpack.c.l.b16 %v1191
    %v1352 = vunpack.c.l.b16 %v1192
    %v1353 = vunpack.c.l.b16 %v1193
    %v1354 = vunpack.c.l.b16 %v1194
    %v1355 = vunpack.c.l.b16 %v1195
    %v1356 = vunpack.c.l.b16 %v1196
    %v1357 = vunpack.c.l.b16 %v1197
    %v1358 = vunpack.c.l.b16 %v1198
    %v1359 = vunpack.c.l.b16 %v1199
    %v1360 = vsel %vm715, %v1346, %v1344
    %v1361 = vsel %vm717, %v1348, %v1360
    %v1362 = vsel %vm719, %v1350, %v1361
    %v1363 = vsel %vm721, %v1352, %v1362
    %v1364 = vsel %vm723, %v1354, %v1363
    %v1365 = vsel %vm725, %v1356, %v1364
    %v1366 = vsel %vm727, %v1358, %v1365
    %v1367 = vsel %vm715, %v1347, %v1345
    %v1368 = vsel %vm717, %v1349, %v1367
    %v1369 = vsel %vm719, %v1351, %v1368
    %v1370 = vsel %vm721, %v1353, %v1369
    %v1371 = vsel %vm723, %v1355, %v1370
    %v1372 = vsel %vm725, %v1357, %v1371
    %v1373 = vsel %vm727, %v1359, %v1372
    %v1374 = vpack.c.b16 %v1366, %v1366
    %v1375 = vpack.c.b16 %v1373, %v1373
    %v1506 = vunpack.c.l.b16 %v1200
    %v1507 = vunpack.c.h.b16 %v1200
    %v1508 = vunpack.c.l.b16 %v1201
    %v1509 = vunpack.c.h.b16 %v1201
    %v1510 = vunpack.c.l.b16 %v1202
    %v1511 = vunpack.c.h.b16 %v1202
    %v1512 = vunpack.c.l.b16 %v1203
    %v1513 = vunpack.c.h.b16 %v1203
    %v1514 = vunpack.c.l.b16 %v1204
    %v1515 = vunpack.c.h.b16 %v1204
    %v1516 = vunpack.c.l.b16 %v1205
    %v1517 = vunpack.c.h.b16 %v1205
    %v1518 = vunpack.c.l.b16 %v1206
    %v1519 = vunpack.c.h.b16 %v1206
    %v1520 = vunpack.c.l.b16 %v1207
    %v1521 = vunpack.c.h.b16 %v1207
    %v1522 = vunpack.c.l.b16 %v1208
    %v1523 = vunpack.c.h.b16 %v1208
    %v1524 = vunpack.c.l.b16 %v1209
    %v1525 = vunpack.c.h.b16 %v1209
    %v1526 = vunpack.c.l.b16 %v1210
    %v1527 = vunpack.c.h.b16 %v1210
    %v1528 = vunpack.c.l.b16 %v1211
    %v1529 = vunpack.c.h.b16 %v1211
    %v1530 = vunpack.c.l.b16 %v1212
    %v1531 = vunpack.c.h.b16 %v1212
    %v1532 = vunpack.c.l.b16 %v1213
    %v1533 = vunpack.c.h.b16 %v1213
    %v1534 = vunpack.c.l.b16 %v1214
    %v1535 = vunpack.c.h.b16 %v1214
    %v1536 = vunpack.c.l.b16 %v1215
    %v1537 = vunpack.c.h.b16 %v1215
    %v1538 = vunpack.c.l.b16 %v1216
    %v1539 = vunpack.c.h.b16 %v1216
    %v1540 = vunpack.c.l.b16 %v1217
    %v1541 = vunpack.c.h.b16 %v1217
    %v1542 = vunpack.c.l.b16 %v1218
    %v1543 = vunpack.c.h.b16 %v1218
    %v1544 = vunpack.c.l.b16 %v1219
    %v1545 = vunpack.c.h.b16 %v1219
    %v1546 = vunpack.c.l.b16 %v1220
    %v1547 = vunpack.c.h.b16 %v1220
    %v1548 = vunpack.c.l.b16 %v1221
    %v1549 = vunpack.c.h.b16 %v1221
    %v1550 = vunpack.c.l.b16 %v1222
    %v1551 = vunpack.c.h.b16 %v1222
    %v1552 = vunpack.c.l.b16 %v1223
    %v1553 = vunpack.c.h.b16 %v1223
    %v1554 = vunpack.c.l.b16 %v1224
    %v1555 = vunpack.c.h.b16 %v1224
    %v1556 = vunpack.c.l.b16 %v1225
    %v1557 = vunpack.c.h.b16 %v1225
    %v1558 = vunpack.c.l.b16 %v1226
    %v1559 = vunpack.c.h.b16 %v1226
    %v1560 = vunpack.c.l.b16 %v1227
    %v1561 = vunpack.c.h.b16 %v1227
    %v1562 = vunpack.c.l.b16 %v1228
    %v1563 = vunpack.c.h.b16 %v1228
    %v1564 = vunpack.c.l.b16 %v1229
    %v1565 = vunpack.c.h.b16 %v1229
    %v1566 = vunpack.c.l.b16 %v1230
    %v1567 = vunpack.c.h.b16 %v1230
    %v1568 = vunpack.c.l.b16 %v1231
    %v1569 = vunpack.c.h.b16 %v1231
    %v1570 = vunpack.c.l.b16 %v1232
    %v1571 = vunpack.c.h.b16 %v1232
    %v1572 = vunpack.c.l.b16 %v1233
    %v1573 = vunpack.c.h.b16 %v1233
    %v1574 = vunpack.c.l.b16 %v1234
    %v1575 = vunpack.c.h.b16 %v1234
    %v1576 = vunpack.c.l.b16 %v1235
    %v1577 = vunpack.c.h.b16 %v1235
    %v1578 = vunpack.c.l.b16 %v1236
    %v1579 = vunpack.c.h.b16 %v1236
    %v1580 = vunpack.c.l.b16 %v1237
    %v1581 = vunpack.c.h.b16 %v1237
    %v1582 = vunpack.c.l.b16 %v1238
    %v1583 = vunpack.c.h.b16 %v1238
    %v1584 = vunpack.c.l.b16 %v1239
    %v1585 = vunpack.c.h.b16 %v1239
    %v1586 = vunpack.c.l.b16 %v1240
    %v1587 = vunpack.c.h.b16 %v1240
    %v1588 = vunpack.c.l.b16 %v1241
    %v1589 = vunpack.c.h.b16 %v1241
    %v1590 = vunpack.c.l.b16 %v1242
    %v1591 = vunpack.c.h.b16 %v1242
    %v1592 = vunpack.c.l.b16 %v1243
    %v1593 = vunpack.c.h.b16 %v1243
    %v1594 = vunpack.c.l.b16 %v1244
    %v1595 = vunpack.c.h.b16 %v1244
    %v1596 = vunpack.c.l.b16 %v1245
    %v1597 = vunpack.c.h.b16 %v1245
    %v1598 = vunpack.c.l.b16 %v1246
    %v1599 = vunpack.c.h.b16 %v1246
    %v1600 = vunpack.c.l.b16 %v1247
    %v1601 = vunpack.c.h.b16 %v1247
    %v1602 = vunpack.c.l.b16 %v1248
    %v1603 = vunpack.c.h.b16 %v1248
    %v1604 = vunpack.c.l.b16 %v1249
    %v1605 = vunpack.c.h.b16 %v1249
    %v1606 = vunpack.c.l.b16 %v1250
    %v1607 = vunpack.c.h.b16 %v1250
    %v1608 = vunpack.c.l.b16 %v1251
    %v1609 = vunpack.c.h.b16 %v1251
    %v1610 = vunpack.c.l.b16 %v1252
    %v1611 = vunpack.c.h.b16 %v1252
    %v1612 = vunpack.c.l.b16 %v1253
    %v1613 = vunpack.c.h.b16 %v1253
    %v1614 = vunpack.c.l.b16 %v1254
    %v1615 = vunpack.c.h.b16 %v1254
    %v1616 = vunpack.c.l.b16 %v1255
    %v1617 = vunpack.c.h.b16 %v1255
    %v1618 = vunpack.c.l.b16 %v1256
    %v1619 = vunpack.c.h.b16 %v1256
    %v1620 = vunpack.c.l.b16 %v1257
    %v1621 = vunpack.c.h.b16 %v1257
    %v1622 = vunpack.c.l.b16 %v1258
    %v1623 = vunpack.c.h.b16 %v1258
    %v1624 = vunpack.c.l.b16 %v1259
    %v1625 = vunpack.c.h.b16 %v1259
    %v1626 = vunpack.c.l.b16 %v1260
    %v1627 = vunpack.c.h.b16 %v1260
    %v1628 = vunpack.c.l.b16 %v1261
    %v1629 = vunpack.c.h.b16 %v1261
    %v1630 = vunpack.c.l.b16 %v1262
    %v1631 = vunpack.c.h.b16 %v1262
    %v1632 = vunpack.c.l.b16 %v1263
    %v1633 = vunpack.c.h.b16 %v1263
    %v1634 = vunpack.c.l.b16 %v1264
    %v1635 = vunpack.c.h.b16 %v1264
    %v1636 = vunpack.c.l.b16 %v1265
    %v1637 = vunpack.c.h.b16 %v1265
    %v1638 = vunpack.c.l.b16 %v1266
    %v1639 = vunpack.c.h.b16 %v1266
    %v1640 = vunpack.c.l.b16 %v1267
    %v1641 = vunpack.c.h.b16 %v1267
    %v1642 = vunpack.c.l.b16 %v1268
    %v1643 = vunpack.c.h.b16 %v1268
    %v1644 = vunpack.c.l.b16 %v1269
    %v1645 = vunpack.c.h.b16 %v1269
    %v1646 = vunpack.c.l.b16 %v1270
    %v1647 = vunpack.c.h.b16 %v1270
    %v1648 = vunpack.c.l.b16 %v1271
    %v1649 = vunpack.c.h.b16 %v1271
    %v1650 = vunpack.c.l.b16 %v1272
    %v1651 = vunpack.c.h.b16 %v1272
    %v1652 = vunpack.c.l.b16 %v1273
    %v1653 = vunpack.c.h.b16 %v1273
    %v1654 = vunpack.c.l.b16 %v1274
    %v1655 = vunpack.c.h.b16 %v1274
    %v1656 = vunpack.c.l.b16 %v1275
    %v1657 = vunpack.c.h.b16 %v1275
    %v1658 = vunpack.c.l.b16 %v1276
    %v1659 = vunpack.c.h.b16 %v1276
    %v1660 = vunpack.c.l.b16 %v1277
    %v1661 = vunpack.c.h.b16 %v1277
    %v1662 = vunpack.c.l.b16 %v1278
    %v1663 = vunpack.c.h.b16 %v1278
    %v1664 = vunpack.c.l.b16 %v1279
    %v1665 = vunpack.c.h.b16 %v1279
    %v1666 = vunpack.c.l.b16 %v1280
    %v1667 = vunpack.c.h.b16 %v1280
    %v1668 = vunpack.c.l.b16 %v1281
    %v1669 = vunpack.c.h.b16 %v1281
    %v1670 = vunpack.c.l.b16 %v1282
    %v1671 = vunpack.c.h.b16 %v1282
    %v1672 = vunpack.c.l.b16 %v1283
    %v1673 = vunpack.c.h.b16 %v1283
    %v1674 = vunpack.c.l.b16 %v1284
    %v1675 = vunpack.c.h.b16 %v1284
    %v1676 = vunpack.c.l.b16 %v1285
    %v1677 = vunpack.c.h.b16 %v1285
    %v1678 = vunpack.c.l.b16 %v1286
    %v1679 = vunpack.c.h.b16 %v1286
    %v1680 = vunpack.c.l.b16 %v1287
    %v1681 = vunpack.c.h.b16 %v1287
    %v1682 = vunpack.c.l.b16 %v1288
    %v1683 = vunpack.c.h.b16 %v1288
    %v1684 = vunpack.c.l.b16 %v1289
    %v1685 = vunpack.c.h.b16 %v1289
    %v1686 = vunpack.c.l.b16 %v1290
    %v1687 = vunpack.c.h.b16 %v1290
    %v1688 = vunpack.c.l.b16 %v1291
    %v1689 = vunpack.c.h.b16 %v1291
    %v1690 = vunpack.c.l.b16 %v1292
    %v1691 = vunpack.c.h.b16 %v1292
    %v1692 = vunpack.c.l.b16 %v1293
    %v1693 = vunpack.c.h.b16 %v1293
    %v1694 = vunpack.c.l.b16 %v1294
    %v1695 = vunpack.c.h.b16 %v1294
    %v1696 = vunpack.c.l.b16 %v1295
    %v1697 = vunpack.c.h.b16 %v1295
    %v1698 = vunpack.c.l.b16 %v1296
    %v1699 = vunpack.c.h.b16 %v1296
    %v1700 = vunpack.c.l.b16 %v1297
    %v1701 = vunpack.c.h.b16 %v1297
    %v1702 = vunpack.c.l.b16 %v1298
    %v1703 = vunpack.c.h.b16 %v1298
    %v1704 = vunpack.c.l.b16 %v1299
    %v1705 = vunpack.c.h.b16 %v1299
    %v1706 = vunpack.c.l.b16 %v1300
    %v1707 = vunpack.c.h.b16 %v1300
    %v1708 = vunpack.c.l.b16 %v1301
    %v1709 = vunpack.c.h.b16 %v1301
    %v1710 = vunpack.c.l.b16 %v1302
    %v1711 = vunpack.c.h.b16 %v1302
    %v1712 = vunpack.c.l.b16 %v1303
    %v1713 = vunpack.c.h.b16 %v1303
    %v1714 = vunpack.c.l.b16 %v1304
    %v1715 = vunpack.c.h.b16 %v1304
    %v1716 = vunpack.c.l.b16 %v1305
    %v1717 = vunpack.c.h.b16 %v1305
    %v1718 = vunpack.c.l.b16 %v1306
    %v1719 = vunpack.c.h.b16 %v1306
    %v1720 = vunpack.c.l.b16 %v1307
    %v1721 = vunpack.c.h.b16 %v1307
    %v1722 = vunpack.c.l.b16 %v1308
    %v1723 = vunpack.c.h.b16 %v1308
    %v1724 = vunpack.c.l.b16 %v1309
    %v1725 = vunpack.c.h.b16 %v1309
    %v1726 = vunpack.c.l.b16 %v1310
    %v1727 = vunpack.c.h.b16 %v1310
    %v1728 = vunpack.c.l.b16 %v1311
    %v1729 = vunpack.c.h.b16 %v1311
    %v1730 = vunpack.c.l.b16 %v1312
    %v1731 = vunpack.c.h.b16 %v1312
    %v1732 = vunpack.c.l.b16 %v1313
    %v1733 = vunpack.c.h.b16 %v1313
    %v1734 = vunpack.c.l.b16 %v1314
    %v1735 = vunpack.c.h.b16 %v1314
    %v1736 = vunpack.c.l.b16 %v1315
    %v1737 = vunpack.c.h.b16 %v1315
    %v1738 = vunpack.c.l.b16 %v1316
    %v1739 = vunpack.c.h.b16 %v1316
    %v1740 = vunpack.c.l.b16 %v1317
    %v1741 = vunpack.c.h.b16 %v1317
    %v1742 = vunpack.c.l.b16 %v1318
    %v1743 = vunpack.c.h.b16 %v1318
    %v1744 = vunpack.c.l.b16 %v1319
    %v1745 = vunpack.c.h.b16 %v1319
    %v1746 = vunpack.c.l.b16 %v1320
    %v1747 = vunpack.c.h.b16 %v1320
    %v1748 = vunpack.c.l.b16 %v1321
    %v1749 = vunpack.c.h.b16 %v1321
    %v1750 = vunpack.c.l.b16 %v1322
    %v1751 = vunpack.c.h.b16 %v1322
    %v1752 = vunpack.c.l.b16 %v1323
    %v1753 = vunpack.c.h.b16 %v1323
    %v1754 = vunpack.c.l.b16 %v1324
    %v1755 = vunpack.c.h.b16 %v1324
    %v1756 = vunpack.c.l.b16 %v1325
    %v1757 = vunpack.c.h.b16 %v1325
    %v1758 = vunpack.c.l.b16 %v1326
    %v1759 = vunpack.c.h.b16 %v1326
    %v1760 = vunpack.c.l.b16 %v1327
    %v1761 = vunpack.c.h.b16 %v1327
    %v1762 = vpack.c.b16 %v1514, %v1506
    %v1763 = vpack.c.b16 %v1515, %v1507
    %v1764 = vpack.c.b16 %v1516, %v1508
    %v1765 = vpack.c.b16 %v1517, %v1509
    %v1766 = vpack.c.b16 %v1518, %v1510
    %v1767 = vpack.c.b16 %v1519, %v1511
    %v1768 = vpack.c.b16 %v1520, %v1512
    %v1769 = vpack.c.b16 %v1521, %v1513
    %v1770 = vpack.c.b16 %v1530, %v1522
    %v1771 = vpack.c.b16 %v1531, %v1523
    %v1772 = vpack.c.b16 %v1532, %v1524
    %v1773 = vpack.c.b16 %v1533, %v1525
    %v1774 = vpack.c.b16 %v1534, %v1526
    %v1775 = vpack.c.b16 %v1535, %v1527
    %v1776 = vpack.c.b16 %v1536, %v1528
    %v1777 = vpack.c.b16 %v1537, %v1529
    %v1778 = vpack.c.b16 %v1546, %v1538
    %v1779 = vpack.c.b16 %v1547, %v1539
    %v1780 = vpack.c.b16 %v1548, %v1540
    %v1781 = vpack.c.b16 %v1549, %v1541
    %v1782 = vpack.c.b16 %v1550, %v1542
    %v1783 = vpack.c.b16 %v1551, %v1543
    %v1784 = vpack.c.b16 %v1552, %v1544
    %v1785 = vpack.c.b16 %v1553, %v1545
    %v1786 = vpack.c.b16 %v1562, %v1554
    %v1787 = vpack.c.b16 %v1563, %v1555
    %v1788 = vpack.c.b16 %v1564, %v1556
    %v1789 = vpack.c.b16 %v1565, %v1557
    %v1790 = vpack.c.b16 %v1566, %v1558
    %v1791 = vpack.c.b16 %v1567, %v1559
    %v1792 = vpack.c.b16 %v1568, %v1560
    %v1793 = vpack.c.b16 %v1569, %v1561
    %v1794 = vpack.c.b16 %v1578, %v1570
    %v1795 = vpack.c.b16 %v1579, %v1571
    %v1796 = vpack.c.b16 %v1580, %v1572
    %v1797 = vpack.c.b16 %v1581, %v1573
    %v1798 = vpack.c.b16 %v1582, %v1574
    %v1799 = vpack.c.b16 %v1583, %v1575
    %v1800 = vpack.c.b16 %v1584, %v1576
    %v1801 = vpack.c.b16 %v1585, %v1577
    %v1802 = vpack.c.b16 %v1594, %v1586
    %v1803 = vpack.c.b16 %v1595, %v1587
    %v1804 = vpack.c.b16 %v1596, %v1588
    %v1805 = vpack.c.b16 %v1597, %v1589
    %v1806 = vpack.c.b16 %v1598, %v1590
    %v1807 = vpack.c.b16 %v1599, %v1591
    %v1808 = vpack.c.b16 %v1600, %v1592
    %v1809 = vpack.c.b16 %v1601, %v1593
    %v1810 = vpack.c.b16 %v1610, %v1602
    %v1811 = vpack.c.b16 %v1611, %v1603
    %v1812 = vpack.c.b16 %v1612, %v1604
    %v1813 = vpack.c.b16 %v1613, %v1605
    %v1814 = vpack.c.b16 %v1614, %v1606
    %v1815 = vpack.c.b16 %v1615, %v1607
    %v1816 = vpack.c.b16 %v1616, %v1608
    %v1817 = vpack.c.b16 %v1617, %v1609
    %v1818 = vpack.c.b16 %v1626, %v1618
    %v1819 = vpack.c.b16 %v1627, %v1619
    %v1820 = vpack.c.b16 %v1628, %v1620
    %v1821 = vpack.c.b16 %v1629, %v1621
    %v1822 = vpack.c.b16 %v1630, %v1622
    %v1823 = vpack.c.b16 %v1631, %v1623
    %v1824 = vpack.c.b16 %v1632, %v1624
    %v1825 = vpack.c.b16 %v1633, %v1625
    %v1826 = vpack.c.b16 %v1642, %v1634
    %v1827 = vpack.c.b16 %v1643, %v1635
    %v1828 = vpack.c.b16 %v1644, %v1636
    %v1829 = vpack.c.b16 %v1645, %v1637
    %v1830 = vpack.c.b16 %v1646, %v1638
    %v1831 = vpack.c.b16 %v1647, %v1639
    %v1832 = vpack.c.b16 %v1648, %v1640
    %v1833 = vpack.c.b16 %v1649, %v1641
    %v1834 = vpack.c.b16 %v1658, %v1650
    %v1835 = vpack.c.b16 %v1659, %v1651
    %v1836 = vpack.c.b16 %v1660, %v1652
    %v1837 = vpack.c.b16 %v1661, %v1653
    %v1838 = vpack.c.b16 %v1662, %v1654
    %v1839 = vpack.c.b16 %v1663, %v1655
    %v1840 = vpack.c.b16 %v1664, %v1656
    %v1841 = vpack.c.b16 %v1665, %v1657
    %v1842 = vpack.c.b16 %v1674, %v1666
    %v1843 = vpack.c.b16 %v1675, %v1667
    %v1844 = vpack.c.b16 %v1676, %v1668
    %v1845 = vpack.c.b16 %v1677, %v1669
    %v1846 = vpack.c.b16 %v1678, %v1670
    %v1847 = vpack.c.b16 %v1679, %v1671
    %v1848 = vpack.c.b16 %v1680, %v1672
    %v1849 = vpack.c.b16 %v1681, %v1673
    %v1850 = vpack.c.b16 %v1690, %v1682
    %v1851 = vpack.c.b16 %v1691, %v1683
    %v1852 = vpack.c.b16 %v1692, %v1684
    %v1853 = vpack.c.b16 %v1693, %v1685
    %v1854 = vpack.c.b16 %v1694, %v1686
    %v1855 = vpack.c.b16 %v1695, %v1687
    %v1856 = vpack.c.b16 %v1696, %v1688
    %v1857 = vpack.c.b16 %v1697, %v1689
    %v1858 = vpack.c.b16 %v1706, %v1698
    %v1859 = vpack.c.b16 %v1707, %v1699
    %v1860 = vpack.c.b16 %v1708, %v1700
    %v1861 = vpack.c.b16 %v1709, %v1701
    %v1862 = vpack.c.b16 %v1710, %v1702
    %v1863 = vpack.c.b16 %v1711, %v1703
    %v1864 = vpack.c.b16 %v1712, %v1704
    %v1865 = vpack.c.b16 %v1713, %v1705
    %v1866 = vpack.c.b16 %v1722, %v1714
    %v1867 = vpack.c.b16 %v1723, %v1715
    %v1868 = vpack.c.b16 %v1724, %v1716
    %v1869 = vpack.c.b16 %v1725, %v1717
    %v1870 = vpack.c.b16 %v1726, %v1718
    %v1871 = vpack.c.b16 %v1727, %v1719
    %v1872 = vpack.c.b16 %v1728, %v1720
    %v1873 = vpack.c.b16 %v1729, %v1721
    %v1874 = vpack.c.b16 %v1738, %v1730
    %v1875 = vpack.c.b16 %v1739, %v1731
    %v1876 = vpack.c.b16 %v1740, %v1732
    %v1877 = vpack.c.b16 %v1741, %v1733
    %v1878 = vpack.c.b16 %v1742, %v1734
    %v1879 = vpack.c.b16 %v1743, %v1735
    %v1880 = vpack.c.b16 %v1744, %v1736
    %v1881 = vpack.c.b16 %v1745, %v1737
    %v1882 = vpack.c.b16 %v1754, %v1746
    %v1883 = vpack.c.b16 %v1755, %v1747
    %v1884 = vpack.c.b16 %v1756, %v1748
    %v1885 = vpack.c.b16 %v1757, %v1749
    %v1886 = vpack.c.b16 %v1758, %v1750
    %v1887 = vpack.c.b16 %v1759, %v1751
    %v1888 = vpack.c.b16 %v1760, %v1752
    %v1889 = vpack.c.b16 %v1761, %v1753
    %2018 = vmatprep.subr.bf16.mxu0 %v1819
    %2019 = vmatpush1.bf16.msra.mxu0 %v1818
    %2020 = vmatprep.subr.bf16.mxu0 %v1811
    %2021 = vmatpush1.bf16.msra.mxu0 %v1810
    %2022 = vmatprep.subr.bf16.mxu0 %v1803
    %2023 = vmatpush1.bf16.msra.mxu0 %v1802
    %2024 = vmatprep.subr.bf16.mxu0 %v1795
    %2025 = vmatpush1.bf16.msra.mxu0 %v1794
    %2026 = vmatprep.subr.bf16.mxu0 %v1787
    %2027 = vmatpush1.bf16.msra.mxu0 %v1786
    %2028 = vmatprep.subr.bf16.mxu0 %v1779
    %2029 = vmatpush1.bf16.msra.mxu0 %v1778
    %2030 = vmatprep.subr.bf16.mxu0 %v1771
    %2031 = vmatpush1.bf16.msra.mxu0 %v1770
    %2032 = vmatprep.subr.bf16.mxu0 %v1763
    %2033 = vmatpush1.bf16.msra.mxu0 %v1762
    %2034 = vmatprep.subr.bf16.mxu0 %v1883
    %2035 = vmatpush2.bf16.msra.mxu0 %v1882
    %2036 = vmatprep.subr.bf16.mxu0 %v1875
    %2037 = vmatpush2.bf16.msra.mxu0 %v1874
    %2038 = vmatprep.subr.bf16.mxu0 %v1867
    %2039 = vmatpush2.bf16.msra.mxu0 %v1866
    %2040 = vmatprep.subr.bf16.mxu0 %v1859
    %2041 = vmatpush2.bf16.msra.mxu0 %v1858
    %2042 = vmatprep.subr.bf16.mxu0 %v1851
    %2043 = vmatpush2.bf16.msra.mxu0 %v1850
    %2044 = vmatprep.subr.bf16.mxu0 %v1843
    %2045 = vmatpush2.bf16.msra.mxu0 %v1842
    %2046 = vmatprep.subr.bf16.mxu0 %v1835
    %2047 = vmatpush2.bf16.msra.mxu0 %v1834
    %2048 = vmatprep.subr.bf16.mxu0 %v1827
    %2049 = vmatpush2.bf16.msra.mxu0 %v1826
    %2050 = vmatprep.mubr.bf16.mxu0 %v1375
    %2051 = vmatmul.mubr.bf16.gmra.mxu0 %v1374
    %v2052 = vpop.f32.mrf.mxu0
    %v2053 = vadd.f32 0.0, %v2052
    %v2054 = vpop.f32.mrf.mxu0
    %v2055 = vadd.f32 0.0, %v2054
    %v2056 = vpop.f32.mrf.mxu0
    %v2057 = vpop.f32.mrf.mxu0
    %2058 = vdwg.mxu0
    %2059 = vmatprep.subr.bf16.mxu0 %v1821
    %2060 = vmatpush1.bf16.msra.mxu0 %v1820
    %2061 = vmatprep.subr.bf16.mxu0 %v1813
    %2062 = vmatpush1.bf16.msra.mxu0 %v1812
    %2063 = vmatprep.subr.bf16.mxu0 %v1805
    %2064 = vmatpush1.bf16.msra.mxu0 %v1804
    %2065 = vmatprep.subr.bf16.mxu0 %v1797
    %2066 = vmatpush1.bf16.msra.mxu0 %v1796
    %2067 = vmatprep.subr.bf16.mxu0 %v1789
    %2068 = vmatpush1.bf16.msra.mxu0 %v1788
    %2069 = vmatprep.subr.bf16.mxu0 %v1781
    %2070 = vmatpush1.bf16.msra.mxu0 %v1780
    %2071 = vmatprep.subr.bf16.mxu0 %v1773
    %2072 = vmatpush1.bf16.msra.mxu0 %v1772
    %2073 = vmatprep.subr.bf16.mxu0 %v1765
    %2074 = vmatpush1.bf16.msra.mxu0 %v1764
    %2075 = vmatprep.subr.bf16.mxu0 %v1885
    %2076 = vmatpush2.bf16.msra.mxu0 %v1884
    %2077 = vmatprep.subr.bf16.mxu0 %v1877
    %2078 = vmatpush2.bf16.msra.mxu0 %v1876
    %2079 = vmatprep.subr.bf16.mxu0 %v1869
    %2080 = vmatpush2.bf16.msra.mxu0 %v1868
    %2081 = vmatprep.subr.bf16.mxu0 %v1861
    %2082 = vmatpush2.bf16.msra.mxu0 %v1860
    %2083 = vmatprep.subr.bf16.mxu0 %v1853
    %2084 = vmatpush2.bf16.msra.mxu0 %v1852
    %2085 = vmatprep.subr.bf16.mxu0 %v1845
    %2086 = vmatpush2.bf16.msra.mxu0 %v1844
    %2087 = vmatprep.subr.bf16.mxu0 %v1837
    %2088 = vmatpush2.bf16.msra.mxu0 %v1836
    %2089 = vmatprep.subr.bf16.mxu0 %v1829
    %2090 = vmatpush2.bf16.msra.mxu0 %v1828
    %2091 = vmatprep.mubr.bf16.mxu0 %v1375
    %2092 = vmatmul.mubr.bf16.gmra.mxu0 %v1374
    %v2093 = vpop.f32.mrf.mxu0
    %v2094 = vadd.f32 0.0, %v2093
    %v2095 = vpop.f32.mrf.mxu0
    %v2096 = vadd.f32 0.0, %v2095
    %v2097 = vpop.f32.mrf.mxu0
    %v2098 = vpop.f32.mrf.mxu0
    %2099 = vdwg.mxu0
    %2100 = vmatprep.subr.bf16.mxu0 %v1823
    %2101 = vmatpush1.bf16.msra.mxu0 %v1822
    %2102 = vmatprep.subr.bf16.mxu0 %v1815
    %2103 = vmatpush1.bf16.msra.mxu0 %v1814
    %2104 = vmatprep.subr.bf16.mxu0 %v1807
    %2105 = vmatpush1.bf16.msra.mxu0 %v1806
    %2106 = vmatprep.subr.bf16.mxu0 %v1799
    %2107 = vmatpush1.bf16.msra.mxu0 %v1798
    %2108 = vmatprep.subr.bf16.mxu0 %v1791
    %2109 = vmatpush1.bf16.msra.mxu0 %v1790
    %2110 = vmatprep.subr.bf16.mxu0 %v1783
    %2111 = vmatpush1.bf16.msra.mxu0 %v1782
    %2112 = vmatprep.subr.bf16.mxu0 %v1775
    %2113 = vmatpush1.bf16.msra.mxu0 %v1774
    %2114 = vmatprep.subr.bf16.mxu0 %v1767
    %2115 = vmatpush1.bf16.msra.mxu0 %v1766
    %2116 = vmatprep.subr.bf16.mxu0 %v1887
    %2117 = vmatpush2.bf16.msra.mxu0 %v1886
    %2118 = vmatprep.subr.bf16.mxu0 %v1879
    %2119 = vmatpush2.bf16.msra.mxu0 %v1878
    %2120 = vmatprep.subr.bf16.mxu0 %v1871
    %2121 = vmatpush2.bf16.msra.mxu0 %v1870
    %2122 = vmatprep.subr.bf16.mxu0 %v1863
    %2123 = vmatpush2.bf16.msra.mxu0 %v1862
    %2124 = vmatprep.subr.bf16.mxu0 %v1855
    %2125 = vmatpush2.bf16.msra.mxu0 %v1854
    %2126 = vmatprep.subr.bf16.mxu0 %v1847
    %2127 = vmatpush2.bf16.msra.mxu0 %v1846
    %2128 = vmatprep.subr.bf16.mxu0 %v1839
    %2129 = vmatpush2.bf16.msra.mxu0 %v1838
    %2130 = vmatprep.subr.bf16.mxu0 %v1831
    %2131 = vmatpush2.bf16.msra.mxu0 %v1830
    %2132 = vmatprep.mubr.bf16.mxu0 %v1375
    %2133 = vmatmul.mubr.bf16.gmra.mxu0 %v1374
    %v2134 = vpop.f32.mrf.mxu0
    %v2135 = vadd.f32 0.0, %v2134
    %v2136 = vpop.f32.mrf.mxu0
    %v2137 = vadd.f32 0.0, %v2136
    %v2138 = vpop.f32.mrf.mxu0
    %v2139 = vpop.f32.mrf.mxu0
    %2140 = vdwg.mxu0
    %2141 = vmatprep.subr.bf16.mxu0 %v1825
    %2142 = vmatpush1.bf16.msra.mxu0 %v1824
    %2143 = vmatprep.subr.bf16.mxu0 %v1817
    %2144 = vmatpush1.bf16.msra.mxu0 %v1816
    %2145 = vmatprep.subr.bf16.mxu0 %v1809
    %2146 = vmatpush1.bf16.msra.mxu0 %v1808
    %2147 = vmatprep.subr.bf16.mxu0 %v1801
    %2148 = vmatpush1.bf16.msra.mxu0 %v1800
    %2149 = vmatprep.subr.bf16.mxu0 %v1793
    %2150 = vmatpush1.bf16.msra.mxu0 %v1792
    %2151 = vmatprep.subr.bf16.mxu0 %v1785
    %2152 = vmatpush1.bf16.msra.mxu0 %v1784
    %2153 = vmatprep.subr.bf16.mxu0 %v1777
    %2154 = vmatpush1.bf16.msra.mxu0 %v1776
    %2155 = vmatprep.subr.bf16.mxu0 %v1769
    %2156 = vmatpush1.bf16.msra.mxu0 %v1768
    %2157 = vmatprep.subr.bf16.mxu0 %v1889
    %2158 = vmatpush2.bf16.msra.mxu0 %v1888
    %2159 = vmatprep.subr.bf16.mxu0 %v1881
    %2160 = vmatpush2.bf16.msra.mxu0 %v1880
    %2161 = vmatprep.subr.bf16.mxu0 %v1873
    %2162 = vmatpush2.bf16.msra.mxu0 %v1872
    %2163 = vmatprep.subr.bf16.mxu0 %v1865
    %2164 = vmatpush2.bf16.msra.mxu0 %v1864
    %2165 = vmatprep.subr.bf16.mxu0 %v1857
    %2166 = vmatpush2.bf16.msra.mxu0 %v1856
    %2167 = vmatprep.subr.bf16.mxu0 %v1849
    %2168 = vmatpush2.bf16.msra.mxu0 %v1848
    %2169 = vmatprep.subr.bf16.mxu0 %v1841
    %2170 = vmatpush2.bf16.msra.mxu0 %v1840
    %2171 = vmatprep.subr.bf16.mxu0 %v1833
    %2172 = vmatpush2.bf16.msra.mxu0 %v1832
    %2173 = vmatprep.mubr.bf16.mxu0 %v1375
    %2174 = vmatmul.mubr.bf16.gmra.mxu0 %v1374
    %v2175 = vpop.f32.mrf.mxu0
    %v2176 = vadd.f32 0.0, %v2175
    %v2177 = vpop.f32.mrf.mxu0
    %v2178 = vadd.f32 0.0, %v2177
    %v2179 = vpop.f32.mrf.mxu0
    %v2180 = vpop.f32.mrf.mxu0
    %2181 = vdwg.mxu0
    %v2246 = vunpack.c.l.b16 %v1120
    %v2247 = vunpack.c.h.b16 %v1120
    %v2248 = vunpack.c.l.b16 %v1121
    %v2249 = vunpack.c.h.b16 %v1121
    %v2250 = vunpack.c.l.b16 %v1122
    %v2251 = vunpack.c.h.b16 %v1122
    %v2252 = vunpack.c.l.b16 %v1123
    %v2253 = vunpack.c.h.b16 %v1123
    %v2254 = vunpack.c.l.b16 %v1124
    %v2255 = vunpack.c.h.b16 %v1124
    %v2256 = vunpack.c.l.b16 %v1125
    %v2257 = vunpack.c.h.b16 %v1125
    %v2258 = vunpack.c.l.b16 %v1126
    %v2259 = vunpack.c.h.b16 %v1126
    %v2260 = vunpack.c.l.b16 %v1127
    %v2261 = vunpack.c.h.b16 %v1127
    %v2262 = vunpack.c.l.b16 %v1128
    %v2263 = vunpack.c.h.b16 %v1128
    %v2264 = vunpack.c.l.b16 %v1129
    %v2265 = vunpack.c.h.b16 %v1129
    %v2266 = vunpack.c.l.b16 %v1130
    %v2267 = vunpack.c.h.b16 %v1130
    %v2268 = vunpack.c.l.b16 %v1131
    %v2269 = vunpack.c.h.b16 %v1131
    %v2270 = vunpack.c.l.b16 %v1132
    %v2271 = vunpack.c.h.b16 %v1132
    %v2272 = vunpack.c.l.b16 %v1133
    %v2273 = vunpack.c.h.b16 %v1133
    %v2274 = vunpack.c.l.b16 %v1134
    %v2275 = vunpack.c.h.b16 %v1134
    %v2276 = vunpack.c.l.b16 %v1135
    %v2277 = vunpack.c.h.b16 %v1135
    %v2278 = vunpack.c.l.b16 %v1136
    %v2279 = vunpack.c.h.b16 %v1136
    %v2280 = vunpack.c.l.b16 %v1137
    %v2281 = vunpack.c.h.b16 %v1137
    %v2282 = vunpack.c.l.b16 %v1138
    %v2283 = vunpack.c.h.b16 %v1138
    %v2284 = vunpack.c.l.b16 %v1139
    %v2285 = vunpack.c.h.b16 %v1139
    %v2286 = vunpack.c.l.b16 %v1140
    %v2287 = vunpack.c.h.b16 %v1140
    %v2288 = vunpack.c.l.b16 %v1141
    %v2289 = vunpack.c.h.b16 %v1141
    %v2290 = vunpack.c.l.b16 %v1142
    %v2291 = vunpack.c.h.b16 %v1142
    %v2292 = vunpack.c.l.b16 %v1143
    %v2293 = vunpack.c.h.b16 %v1143
    %v2294 = vunpack.c.l.b16 %v1144
    %v2295 = vunpack.c.h.b16 %v1144
    %v2296 = vunpack.c.l.b16 %v1145
    %v2297 = vunpack.c.h.b16 %v1145
    %v2298 = vunpack.c.l.b16 %v1146
    %v2299 = vunpack.c.h.b16 %v1146
    %v2300 = vunpack.c.l.b16 %v1147
    %v2301 = vunpack.c.h.b16 %v1147
    %v2302 = vunpack.c.l.b16 %v1148
    %v2303 = vunpack.c.h.b16 %v1148
    %v2304 = vunpack.c.l.b16 %v1149
    %v2305 = vunpack.c.h.b16 %v1149
    %v2306 = vunpack.c.l.b16 %v1150
    %v2307 = vunpack.c.h.b16 %v1150
    %v2308 = vunpack.c.l.b16 %v1151
    %v2309 = vunpack.c.h.b16 %v1151
    %v2310 = vunpack.c.l.b16 %v1152
    %v2311 = vunpack.c.h.b16 %v1152
    %v2312 = vunpack.c.l.b16 %v1153
    %v2313 = vunpack.c.h.b16 %v1153
    %v2314 = vunpack.c.l.b16 %v1154
    %v2315 = vunpack.c.h.b16 %v1154
    %v2316 = vunpack.c.l.b16 %v1155
    %v2317 = vunpack.c.h.b16 %v1155
    %v2318 = vunpack.c.l.b16 %v1156
    %v2319 = vunpack.c.h.b16 %v1156
    %v2320 = vunpack.c.l.b16 %v1157
    %v2321 = vunpack.c.h.b16 %v1157
    %v2322 = vunpack.c.l.b16 %v1158
    %v2323 = vunpack.c.h.b16 %v1158
    %v2324 = vunpack.c.l.b16 %v1159
    %v2325 = vunpack.c.h.b16 %v1159
    %v2326 = vunpack.c.l.b16 %v1160
    %v2327 = vunpack.c.h.b16 %v1160
    %v2328 = vunpack.c.l.b16 %v1161
    %v2329 = vunpack.c.h.b16 %v1161
    %v2330 = vunpack.c.l.b16 %v1162
    %v2331 = vunpack.c.h.b16 %v1162
    %v2332 = vunpack.c.l.b16 %v1163
    %v2333 = vunpack.c.h.b16 %v1163
    %v2334 = vunpack.c.l.b16 %v1164
    %v2335 = vunpack.c.h.b16 %v1164
    %v2336 = vunpack.c.l.b16 %v1165
    %v2337 = vunpack.c.h.b16 %v1165
    %v2338 = vunpack.c.l.b16 %v1166
    %v2339 = vunpack.c.h.b16 %v1166
    %v2340 = vunpack.c.l.b16 %v1167
    %v2341 = vunpack.c.h.b16 %v1167
    %v2342 = vunpack.c.l.b16 %v1168
    %v2343 = vunpack.c.h.b16 %v1168
    %v2344 = vunpack.c.l.b16 %v1169
    %v2345 = vunpack.c.h.b16 %v1169
    %v2346 = vunpack.c.l.b16 %v1170
    %v2347 = vunpack.c.h.b16 %v1170
    %v2348 = vunpack.c.l.b16 %v1171
    %v2349 = vunpack.c.h.b16 %v1171
    %v2350 = vunpack.c.l.b16 %v1172
    %v2351 = vunpack.c.h.b16 %v1172
    %v2352 = vunpack.c.l.b16 %v1173
    %v2353 = vunpack.c.h.b16 %v1173
    %v2354 = vunpack.c.l.b16 %v1174
    %v2355 = vunpack.c.h.b16 %v1174
    %v2356 = vunpack.c.l.b16 %v1175
    %v2357 = vunpack.c.h.b16 %v1175
    %v2358 = vunpack.c.l.b16 %v1176
    %v2359 = vunpack.c.h.b16 %v1176
    %v2360 = vunpack.c.l.b16 %v1177
    %v2361 = vunpack.c.h.b16 %v1177
    %v2362 = vunpack.c.l.b16 %v1178
    %v2363 = vunpack.c.h.b16 %v1178
    %v2364 = vunpack.c.l.b16 %v1179
    %v2365 = vunpack.c.h.b16 %v1179
    %v2366 = vunpack.c.l.b16 %v1180
    %v2367 = vunpack.c.h.b16 %v1180
    %v2368 = vunpack.c.l.b16 %v1181
    %v2369 = vunpack.c.h.b16 %v1181
    %v2370 = vunpack.c.l.b16 %v1182
    %v2371 = vunpack.c.h.b16 %v1182
    %v2372 = vunpack.c.l.b16 %v1183
    %v2373 = vunpack.c.h.b16 %v1183
    %v2374 = vpack.c.b16 %v2254, %v2246
    %v2375 = vpack.c.b16 %v2255, %v2247
    %v2376 = vpack.c.b16 %v2256, %v2248
    %v2377 = vpack.c.b16 %v2257, %v2249
    %v2378 = vpack.c.b16 %v2258, %v2250
    %v2379 = vpack.c.b16 %v2259, %v2251
    %v2380 = vpack.c.b16 %v2260, %v2252
    %v2381 = vpack.c.b16 %v2261, %v2253
    %v2382 = vpack.c.b16 %v2270, %v2262
    %v2383 = vpack.c.b16 %v2271, %v2263
    %v2384 = vpack.c.b16 %v2272, %v2264
    %v2385 = vpack.c.b16 %v2273, %v2265
    %v2386 = vpack.c.b16 %v2274, %v2266
    %v2387 = vpack.c.b16 %v2275, %v2267
    %v2388 = vpack.c.b16 %v2276, %v2268
    %v2389 = vpack.c.b16 %v2277, %v2269
    %v2390 = vpack.c.b16 %v2286, %v2278
    %v2391 = vpack.c.b16 %v2287, %v2279
    %v2392 = vpack.c.b16 %v2288, %v2280
    %v2393 = vpack.c.b16 %v2289, %v2281
    %v2394 = vpack.c.b16 %v2290, %v2282
    %v2395 = vpack.c.b16 %v2291, %v2283
    %v2396 = vpack.c.b16 %v2292, %v2284
    %v2397 = vpack.c.b16 %v2293, %v2285
    %v2398 = vpack.c.b16 %v2302, %v2294
    %v2399 = vpack.c.b16 %v2303, %v2295
    %v2400 = vpack.c.b16 %v2304, %v2296
    %v2401 = vpack.c.b16 %v2305, %v2297
    %v2402 = vpack.c.b16 %v2306, %v2298
    %v2403 = vpack.c.b16 %v2307, %v2299
    %v2404 = vpack.c.b16 %v2308, %v2300
    %v2405 = vpack.c.b16 %v2309, %v2301
    %v2406 = vpack.c.b16 %v2318, %v2310
    %v2407 = vpack.c.b16 %v2319, %v2311
    %v2408 = vpack.c.b16 %v2320, %v2312
    %v2409 = vpack.c.b16 %v2321, %v2313
    %v2410 = vpack.c.b16 %v2322, %v2314
    %v2411 = vpack.c.b16 %v2323, %v2315
    %v2412 = vpack.c.b16 %v2324, %v2316
    %v2413 = vpack.c.b16 %v2325, %v2317
    %v2414 = vpack.c.b16 %v2334, %v2326
    %v2415 = vpack.c.b16 %v2335, %v2327
    %v2416 = vpack.c.b16 %v2336, %v2328
    %v2417 = vpack.c.b16 %v2337, %v2329
    %v2418 = vpack.c.b16 %v2338, %v2330
    %v2419 = vpack.c.b16 %v2339, %v2331
    %v2420 = vpack.c.b16 %v2340, %v2332
    %v2421 = vpack.c.b16 %v2341, %v2333
    %v2422 = vpack.c.b16 %v2350, %v2342
    %v2423 = vpack.c.b16 %v2351, %v2343
    %v2424 = vpack.c.b16 %v2352, %v2344
    %v2425 = vpack.c.b16 %v2353, %v2345
    %v2426 = vpack.c.b16 %v2354, %v2346
    %v2427 = vpack.c.b16 %v2355, %v2347
    %v2428 = vpack.c.b16 %v2356, %v2348
    %v2429 = vpack.c.b16 %v2357, %v2349
    %v2430 = vpack.c.b16 %v2366, %v2358
    %v2431 = vpack.c.b16 %v2367, %v2359
    %v2432 = vpack.c.b16 %v2368, %v2360
    %v2433 = vpack.c.b16 %v2369, %v2361
    %v2434 = vpack.c.b16 %v2370, %v2362
    %v2435 = vpack.c.b16 %v2371, %v2363
    %v2436 = vpack.c.b16 %v2372, %v2364
    %v2437 = vpack.c.b16 %v2373, %v2365
    %2502 = vmatprep.subr.bf16.mxu0 %v2431
    %2503 = vmatpush1.bf16.msra.mxu0 %v2430
    %2504 = vmatprep.subr.bf16.mxu0 %v2423
    %2505 = vmatpush1.bf16.msra.mxu0 %v2422
    %2506 = vmatprep.subr.bf16.mxu0 %v2415
    %2507 = vmatpush1.bf16.msra.mxu0 %v2414
    %2508 = vmatprep.subr.bf16.mxu0 %v2407
    %2509 = vmatpush1.bf16.msra.mxu0 %v2406
    %2510 = vmatprep.subr.bf16.mxu0 %v2399
    %2511 = vmatpush1.bf16.msra.mxu0 %v2398
    %2512 = vmatprep.subr.bf16.mxu0 %v2391
    %2513 = vmatpush1.bf16.msra.mxu0 %v2390
    %2514 = vmatprep.subr.bf16.mxu0 %v2383
    %2515 = vmatpush1.bf16.msra.mxu0 %v2382
    %2516 = vmatprep.subr.bf16.mxu0 %v2375
    %2517 = vmatpush1.bf16.msra.mxu0 %v2374
    %2518 = vmatprep.subr.bf16.mxu0 0
    %2519 = vmatpush2.bf16.msra.mxu0 0
    %2520 = vmatprep.subr.bf16.mxu0 0
    %2521 = vmatpush2.bf16.msra.mxu0 0
    %2522 = vmatprep.subr.bf16.mxu0 0
    %2523 = vmatpush2.bf16.msra.mxu0 0
    %2524 = vmatprep.subr.bf16.mxu0 0
    %2525 = vmatpush2.bf16.msra.mxu0 0
    %2526 = vmatprep.subr.bf16.mxu0 0
    %2527 = vmatpush2.bf16.msra.mxu0 0
    %2528 = vmatprep.subr.bf16.mxu0 0
    %2529 = vmatpush2.bf16.msra.mxu0 0
    %2530 = vmatprep.subr.bf16.mxu0 0
    %2531 = vmatpush2.bf16.msra.mxu0 0
    %2532 = vmatprep.subr.bf16.mxu0 0
    %2533 = vmatpush2.bf16.msra.mxu0 0
    %2534 = vmatprep.mubr.bf16.mxu0 0
    %2535 = vmatmul.mubr.bf16.gmra.mxu0 %v1119
    %v2536 = vpop.f32.mrf.mxu0
    %v2537 = vadd.f32 %v2053, %v2536
    %v2538 = vpop.f32.mrf.mxu0
    %v2539 = vadd.f32 %v2055, %v2538
    %v2540 = vpop.f32.mrf.mxu0
    %v2541 = vpop.f32.mrf.mxu0
    %2542 = vdwg.mxu0
    %2543 = vmatprep.subr.bf16.mxu0 %v2433
    %2544 = vmatpush1.bf16.msra.mxu0 %v2432
    %2545 = vmatprep.subr.bf16.mxu0 %v2425
    %2546 = vmatpush1.bf16.msra.mxu0 %v2424
    %2547 = vmatprep.subr.bf16.mxu0 %v2417
    %2548 = vmatpush1.bf16.msra.mxu0 %v2416
    %2549 = vmatprep.subr.bf16.mxu0 %v2409
    %2550 = vmatpush1.bf16.msra.mxu0 %v2408
    %2551 = vmatprep.subr.bf16.mxu0 %v2401
    %2552 = vmatpush1.bf16.msra.mxu0 %v2400
    %2553 = vmatprep.subr.bf16.mxu0 %v2393
    %2554 = vmatpush1.bf16.msra.mxu0 %v2392
    %2555 = vmatprep.subr.bf16.mxu0 %v2385
    %2556 = vmatpush1.bf16.msra.mxu0 %v2384
    %2557 = vmatprep.subr.bf16.mxu0 %v2377
    %2558 = vmatpush1.bf16.msra.mxu0 %v2376
    %2559 = vmatprep.subr.bf16.mxu0 0
    %2560 = vmatpush2.bf16.msra.mxu0 0
    %2561 = vmatprep.subr.bf16.mxu0 0
    %2562 = vmatpush2.bf16.msra.mxu0 0
    %2563 = vmatprep.subr.bf16.mxu0 0
    %2564 = vmatpush2.bf16.msra.mxu0 0
    %2565 = vmatprep.subr.bf16.mxu0 0
    %2566 = vmatpush2.bf16.msra.mxu0 0
    %2567 = vmatprep.subr.bf16.mxu0 0
    %2568 = vmatpush2.bf16.msra.mxu0 0
    %2569 = vmatprep.subr.bf16.mxu0 0
    %2570 = vmatpush2.bf16.msra.mxu0 0
    %2571 = vmatprep.subr.bf16.mxu0 0
    %2572 = vmatpush2.bf16.msra.mxu0 0
    %2573 = vmatprep.subr.bf16.mxu0 0
    %2574 = vmatpush2.bf16.msra.mxu0 0
    %2575 = vmatprep.mubr.bf16.mxu0 0
    %2576 = vmatmul.mubr.bf16.gmra.mxu0 %v1119
    %v2577 = vpop.f32.mrf.mxu0
    %v2578 = vadd.f32 %v2094, %v2577
    %v2579 = vpop.f32.mrf.mxu0
    %v2580 = vadd.f32 %v2096, %v2579
    %v2581 = vpop.f32.mrf.mxu0
    %v2582 = vpop.f32.mrf.mxu0
    %2583 = vdwg.mxu0
    %2584 = vmatprep.subr.bf16.mxu0 %v2435
    %2585 = vmatpush1.bf16.msra.mxu0 %v2434
    %2586 = vmatprep.subr.bf16.mxu0 %v2427
    %2587 = vmatpush1.bf16.msra.mxu0 %v2426
    %2588 = vmatprep.subr.bf16.mxu0 %v2419
    %2589 = vmatpush1.bf16.msra.mxu0 %v2418
    %2590 = vmatprep.subr.bf16.mxu0 %v2411
    %2591 = vmatpush1.bf16.msra.mxu0 %v2410
    %2592 = vmatprep.subr.bf16.mxu0 %v2403
    %2593 = vmatpush1.bf16.msra.mxu0 %v2402
    %2594 = vmatprep.subr.bf16.mxu0 %v2395
    %2595 = vmatpush1.bf16.msra.mxu0 %v2394
    %2596 = vmatprep.subr.bf16.mxu0 %v2387
    %2597 = vmatpush1.bf16.msra.mxu0 %v2386
    %2598 = vmatprep.subr.bf16.mxu0 %v2379
    %2599 = vmatpush1.bf16.msra.mxu0 %v2378
    %2600 = vmatprep.subr.bf16.mxu0 0
    %2601 = vmatpush2.bf16.msra.mxu0 0
    %2602 = vmatprep.subr.bf16.mxu0 0
    %2603 = vmatpush2.bf16.msra.mxu0 0
    %2604 = vmatprep.subr.bf16.mxu0 0
    %2605 = vmatpush2.bf16.msra.mxu0 0
    %2606 = vmatprep.subr.bf16.mxu0 0
    %2607 = vmatpush2.bf16.msra.mxu0 0
    %2608 = vmatprep.subr.bf16.mxu0 0
    %2609 = vmatpush2.bf16.msra.mxu0 0
    %2610 = vmatprep.subr.bf16.mxu0 0
    %2611 = vmatpush2.bf16.msra.mxu0 0
    %2612 = vmatprep.subr.bf16.mxu0 0
    %2613 = vmatpush2.bf16.msra.mxu0 0
    %2614 = vmatprep.subr.bf16.mxu0 0
    %2615 = vmatpush2.bf16.msra.mxu0 0
    %2616 = vmatprep.mubr.bf16.mxu0 0
    %2617 = vmatmul.mubr.bf16.gmra.mxu0 %v1119
    %v2618 = vpop.f32.mrf.mxu0
    %v2619 = vadd.f32 %v2135, %v2618
    %v2620 = vpop.f32.mrf.mxu0
    %v2621 = vadd.f32 %v2137, %v2620
    %v2622 = vpop.f32.mrf.mxu0
    %v2623 = vpop.f32.mrf.mxu0
    %2624 = vdwg.mxu0
    %2625 = vmatprep.subr.bf16.mxu0 %v2437
    %2626 = vmatpush1.bf16.msra.mxu0 %v2436
    %2627 = vmatprep.subr.bf16.mxu0 %v2429
    %2628 = vmatpush1.bf16.msra.mxu0 %v2428
    %2629 = vmatprep.subr.bf16.mxu0 %v2421
    %2630 = vmatpush1.bf16.msra.mxu0 %v2420
    %2631 = vmatprep.subr.bf16.mxu0 %v2413
    %2632 = vmatpush1.bf16.msra.mxu0 %v2412
    %2633 = vmatprep.subr.bf16.mxu0 %v2405
    %2634 = vmatpush1.bf16.msra.mxu0 %v2404
    %2635 = vmatprep.subr.bf16.mxu0 %v2397
    %2636 = vmatpush1.bf16.msra.mxu0 %v2396
    %2637 = vmatprep.subr.bf16.mxu0 %v2389
    %2638 = vmatpush1.bf16.msra.mxu0 %v2388
    %2639 = vmatprep.subr.bf16.mxu0 %v2381
    %2640 = vmatpush1.bf16.msra.mxu0 %v2380
    %2641 = vmatprep.subr.bf16.mxu0 0
    %2642 = vmatpush2.bf16.msra.mxu0 0
    %2643 = vmatprep.subr.bf16.mxu0 0
    %2644 = vmatpush2.bf16.msra.mxu0 0
    %2645 = vmatprep.subr.bf16.mxu0 0
    %2646 = vmatpush2.bf16.msra.mxu0 0
    %2647 = vmatprep.subr.bf16.mxu0 0
    %2648 = vmatpush2.bf16.msra.mxu0 0
    %2649 = vmatprep.subr.bf16.mxu0 0
    %2650 = vmatpush2.bf16.msra.mxu0 0
    %2651 = vmatprep.subr.bf16.mxu0 0
    %2652 = vmatpush2.bf16.msra.mxu0 0
    %2653 = vmatprep.subr.bf16.mxu0 0
    %2654 = vmatpush2.bf16.msra.mxu0 0
    %2655 = vmatprep.subr.bf16.mxu0 0
    %2656 = vmatpush2.bf16.msra.mxu0 0
    %2657 = vmatprep.mubr.bf16.mxu0 0
    %2658 = vmatmul.mubr.bf16.gmra.mxu0 %v1119
    %v2659 = vpop.f32.mrf.mxu0
    %v2660 = vadd.f32 %v2176, %v2659
    %v2661 = vpop.f32.mrf.mxu0
    %v2662 = vadd.f32 %v2178, %v2661
    %v2663 = vpop.f32.mrf.mxu0
    %v2664 = vpop.f32.mrf.mxu0
    %2665 = vdwg.mxu0
    %v2666 = vpack.c.bf16 %v1117, %v1117
    %v2667 = vpack.c.bf16 %v1118, %v1118
    %v2668 = vld [vmem:[#allocation13] sm:$0xff]
    %v2669 = vld [vmem:[#allocation13 + $0x8] sm:$0xff]
    %v2670 = vld [vmem:[#allocation13 + $0x10] sm:$0xff]
    %v2671 = vld [vmem:[#allocation13 + $0x18] sm:$0xff]
    %v2672 = vld [vmem:[#allocation13 + $0x20] sm:$0xff]
    %v2673 = vld [vmem:[#allocation13 + $0x28] sm:$0xff]
    %v2674 = vld [vmem:[#allocation13 + $0x30] sm:$0xff]
    %v2675 = vld [vmem:[#allocation13 + $0x38] sm:$0xff]
    %v2676 = vld [vmem:[#allocation13 + $0x40] sm:$0xff]
    %v2677 = vld [vmem:[#allocation13 + $0x48] sm:$0xff]
    %v2678 = vld [vmem:[#allocation13 + $0x50] sm:$0xff]
    %v2679 = vld [vmem:[#allocation13 + $0x58] sm:$0xff]
    %v2680 = vld [vmem:[#allocation13 + $0x60] sm:$0xff]
    %v2681 = vld [vmem:[#allocation13 + $0x68] sm:$0xff]
    %v2682 = vld [vmem:[#allocation13 + $0x70] sm:$0xff]
    %v2683 = vld [vmem:[#allocation13 + $0x78] sm:$0xff]
    %v2684 = vld [vmem:[#allocation13 + $0x80] sm:$0xff]
    %v2685 = vld [vmem:[#allocation13 + $0x88] sm:$0xff]
    %v2686 = vld [vmem:[#allocation13 + $0x90] sm:$0xff]
    %v2687 = vld [vmem:[#allocation13 + $0x98] sm:$0xff]
    %v2688 = vld [vmem:[#allocation13 + $0xa0] sm:$0xff]
    %v2689 = vld [vmem:[#allocation13 + $0xa8] sm:$0xff]
    %v2690 = vld [vmem:[#allocation13 + $0xb0] sm:$0xff]
    %v2691 = vld [vmem:[#allocation13 + $0xb8] sm:$0xff]
    %v2692 = vld [vmem:[#allocation13 + $0xc0] sm:$0xff]
    %v2693 = vld [vmem:[#allocation13 + $0xc8] sm:$0xff]
    %v2694 = vld [vmem:[#allocation13 + $0xd0] sm:$0xff]
    %v2695 = vld [vmem:[#allocation13 + $0xd8] sm:$0xff]
    %v2696 = vld [vmem:[#allocation13 + $0xe0] sm:$0xff]
    %v2697 = vld [vmem:[#allocation13 + $0xe8] sm:$0xff]
    %v2698 = vld [vmem:[#allocation13 + $0xf0] sm:$0xff]
    %v2699 = vld [vmem:[#allocation13 + $0xf8] sm:$0xff]
    %v2700 = vld [vmem:[#allocation13 + $0x100] sm:$0xff]
    %v2701 = vld [vmem:[#allocation13 + $0x108] sm:$0xff]
    %v2702 = vld [vmem:[#allocation13 + $0x110] sm:$0xff]
    %v2703 = vld [vmem:[#allocation13 + $0x118] sm:$0xff]
    %v2704 = vld [vmem:[#allocation13 + $0x120] sm:$0xff]
    %v2705 = vld [vmem:[#allocation13 + $0x128] sm:$0xff]
    %v2706 = vld [vmem:[#allocation13 + $0x130] sm:$0xff]
    %v2707 = vld [vmem:[#allocation13 + $0x138] sm:$0xff]
    %v2708 = vld [vmem:[#allocation13 + $0x140] sm:$0xff]
    %v2709 = vld [vmem:[#allocation13 + $0x148] sm:$0xff]
    %v2710 = vld [vmem:[#allocation13 + $0x150] sm:$0xff]
    %v2711 = vld [vmem:[#allocation13 + $0x158] sm:$0xff]
    %v2712 = vld [vmem:[#allocation13 + $0x160] sm:$0xff]
    %v2713 = vld [vmem:[#allocation13 + $0x168] sm:$0xff]
    %v2714 = vld [vmem:[#allocation13 + $0x170] sm:$0xff]
    %v2715 = vld [vmem:[#allocation13 + $0x178] sm:$0xff]
    %v2716 = vld [vmem:[#allocation13 + $0x180] sm:$0xff]
    %v2717 = vld [vmem:[#allocation13 + $0x188] sm:$0xff]
    %v2718 = vld [vmem:[#allocation13 + $0x190] sm:$0xff]
    %v2719 = vld [vmem:[#allocation13 + $0x198] sm:$0xff]
    %v2720 = vld [vmem:[#allocation13 + $0x1a0] sm:$0xff]
    %v2721 = vld [vmem:[#allocation13 + $0x1a8] sm:$0xff]
    %v2722 = vld [vmem:[#allocation13 + $0x1b0] sm:$0xff]
    %v2723 = vld [vmem:[#allocation13 + $0x1b8] sm:$0xff]
    %v2724 = vld [vmem:[#allocation13 + $0x1c0] sm:$0xff]
    %v2725 = vld [vmem:[#allocation13 + $0x1c8] sm:$0xff]
    %v2726 = vld [vmem:[#allocation13 + $0x1d0] sm:$0xff]
    %v2727 = vld [vmem:[#allocation13 + $0x1d8] sm:$0xff]
    %v2728 = vld [vmem:[#allocation13 + $0x1e0] sm:$0xff]
    %v2729 = vld [vmem:[#allocation13 + $0x1e8] sm:$0xff]
    %v2730 = vld [vmem:[#allocation13 + $0x1f0] sm:$0xff]
    %v2731 = vld [vmem:[#allocation13 + $0x1f8] sm:$0xff]
    %v2732 = vld [vmem:[#allocation13 + $0x200] sm:$0xff]
    %v2733 = vld [vmem:[#allocation13 + $0x208] sm:$0xff]
    %v2734 = vld [vmem:[#allocation13 + $0x210] sm:$0xff]
    %v2735 = vld [vmem:[#allocation13 + $0x218] sm:$0xff]
    %v2736 = vld [vmem:[#allocation13 + $0x220] sm:$0xff]
    %v2737 = vld [vmem:[#allocation13 + $0x228] sm:$0xff]
    %v2738 = vld [vmem:[#allocation13 + $0x230] sm:$0xff]
    %v2739 = vld [vmem:[#allocation13 + $0x238] sm:$0xff]
    %v2740 = vld [vmem:[#allocation13 + $0x240] sm:$0xff]
    %v2741 = vld [vmem:[#allocation13 + $0x248] sm:$0xff]
    %v2742 = vld [vmem:[#allocation13 + $0x250] sm:$0xff]
    %v2743 = vld [vmem:[#allocation13 + $0x258] sm:$0xff]
    %v2744 = vld [vmem:[#allocation13 + $0x260] sm:$0xff]
    %v2745 = vld [vmem:[#allocation13 + $0x268] sm:$0xff]
    %v2746 = vld [vmem:[#allocation13 + $0x270] sm:$0xff]
    %v2747 = vld [vmem:[#allocation13 + $0x278] sm:$0xff]
    %v2748 = vld [vmem:[#allocation13 + $0x280] sm:$0xff]
    %v2749 = vld [vmem:[#allocation13 + $0x288] sm:$0xff]
    %v2750 = vld [vmem:[#allocation13 + $0x290] sm:$0xff]
    %v2751 = vld [vmem:[#allocation13 + $0x298] sm:$0xff]
    %v2752 = vld [vmem:[#allocation13 + $0x2a0] sm:$0xff]
    %v2753 = vld [vmem:[#allocation13 + $0x2a8] sm:$0xff]
    %v2754 = vld [vmem:[#allocation13 + $0x2b0] sm:$0xff]
    %v2755 = vld [vmem:[#allocation13 + $0x2b8] sm:$0xff]
    %v2756 = vld [vmem:[#allocation13 + $0x2c0] sm:$0xff]
    %v2757 = vld [vmem:[#allocation13 + $0x2c8] sm:$0xff]
    %v2758 = vld [vmem:[#allocation13 + $0x2d0] sm:$0xff]
    %v2759 = vld [vmem:[#allocation13 + $0x2d8] sm:$0xff]
    %v2760 = vld [vmem:[#allocation13 + $0x2e0] sm:$0xff]
    %v2761 = vld [vmem:[#allocation13 + $0x2e8] sm:$0xff]
    %v2762 = vld [vmem:[#allocation13 + $0x2f0] sm:$0xff]
    %v2763 = vld [vmem:[#allocation13 + $0x2f8] sm:$0xff]
    %v2764 = vld [vmem:[#allocation13 + $0x300] sm:$0xff]
    %v2765 = vld [vmem:[#allocation13 + $0x308] sm:$0xff]
    %v2766 = vld [vmem:[#allocation13 + $0x310] sm:$0xff]
    %v2767 = vld [vmem:[#allocation13 + $0x318] sm:$0xff]
    %v2768 = vld [vmem:[#allocation13 + $0x320] sm:$0xff]
    %v2769 = vld [vmem:[#allocation13 + $0x328] sm:$0xff]
    %v2770 = vld [vmem:[#allocation13 + $0x330] sm:$0xff]
    %v2771 = vld [vmem:[#allocation13 + $0x338] sm:$0xff]
    %v2772 = vld [vmem:[#allocation13 + $0x340] sm:$0xff]
    %v2773 = vld [vmem:[#allocation13 + $0x348] sm:$0xff]
    %v2774 = vld [vmem:[#allocation13 + $0x350] sm:$0xff]
    %v2775 = vld [vmem:[#allocation13 + $0x358] sm:$0xff]
    %v2776 = vld [vmem:[#allocation13 + $0x360] sm:$0xff]
    %v2777 = vld [vmem:[#allocation13 + $0x368] sm:$0xff]
    %v2778 = vld [vmem:[#allocation13 + $0x370] sm:$0xff]
    %v2779 = vld [vmem:[#allocation13 + $0x378] sm:$0xff]
    %v2780 = vld [vmem:[#allocation13 + $0x380] sm:$0xff]
    %v2781 = vld [vmem:[#allocation13 + $0x388] sm:$0xff]
    %v2782 = vld [vmem:[#allocation13 + $0x390] sm:$0xff]
    %v2783 = vld [vmem:[#allocation13 + $0x398] sm:$0xff]
    %v2784 = vld [vmem:[#allocation13 + $0x3a0] sm:$0xff]
    %v2785 = vld [vmem:[#allocation13 + $0x3a8] sm:$0xff]
    %v2786 = vld [vmem:[#allocation13 + $0x3b0] sm:$0xff]
    %v2787 = vld [vmem:[#allocation13 + $0x3b8] sm:$0xff]
    %v2788 = vld [vmem:[#allocation13 + $0x3c0] sm:$0xff]
    %v2789 = vld [vmem:[#allocation13 + $0x3c8] sm:$0xff]
    %v2790 = vld [vmem:[#allocation13 + $0x3d0] sm:$0xff]
    %v2791 = vld [vmem:[#allocation13 + $0x3d8] sm:$0xff]
    %v2792 = vld [vmem:[#allocation13 + $0x3e0] sm:$0xff]
    %v2793 = vld [vmem:[#allocation13 + $0x3e8] sm:$0xff]
    %v2794 = vld [vmem:[#allocation13 + $0x3f0] sm:$0xff]
    %v2795 = vld [vmem:[#allocation13 + $0x3f8] sm:$0xff]
    %v2924 = vunpack.c.l.b16 %v2668
    %v2925 = vunpack.c.h.b16 %v2668
    %v2926 = vunpack.c.l.b16 %v2669
    %v2927 = vunpack.c.h.b16 %v2669
    %v2928 = vunpack.c.l.b16 %v2670
    %v2929 = vunpack.c.h.b16 %v2670
    %v2930 = vunpack.c.l.b16 %v2671
    %v2931 = vunpack.c.h.b16 %v2671
    %v2932 = vunpack.c.l.b16 %v2672
    %v2933 = vunpack.c.h.b16 %v2672
    %v2934 = vunpack.c.l.b16 %v2673
    %v2935 = vunpack.c.h.b16 %v2673
    %v2936 = vunpack.c.l.b16 %v2674
    %v2937 = vunpack.c.h.b16 %v2674
    %v2938 = vunpack.c.l.b16 %v2675
    %v2939 = vunpack.c.h.b16 %v2675
    %v2940 = vunpack.c.l.b16 %v2676
    %v2941 = vunpack.c.h.b16 %v2676
    %v2942 = vunpack.c.l.b16 %v2677
    %v2943 = vunpack.c.h.b16 %v2677
    %v2944 = vunpack.c.l.b16 %v2678
    %v2945 = vunpack.c.h.b16 %v2678
    %v2946 = vunpack.c.l.b16 %v2679
    %v2947 = vunpack.c.h.b16 %v2679
    %v2948 = vunpack.c.l.b16 %v2680
    %v2949 = vunpack.c.h.b16 %v2680
    %v2950 = vunpack.c.l.b16 %v2681
    %v2951 = vunpack.c.h.b16 %v2681
    %v2952 = vunpack.c.l.b16 %v2682
    %v2953 = vunpack.c.h.b16 %v2682
    %v2954 = vunpack.c.l.b16 %v2683
    %v2955 = vunpack.c.h.b16 %v2683
    %v2956 = vunpack.c.l.b16 %v2684
    %v2957 = vunpack.c.h.b16 %v2684
    %v2958 = vunpack.c.l.b16 %v2685
    %v2959 = vunpack.c.h.b16 %v2685
    %v2960 = vunpack.c.l.b16 %v2686
    %v2961 = vunpack.c.h.b16 %v2686
    %v2962 = vunpack.c.l.b16 %v2687
    %v2963 = vunpack.c.h.b16 %v2687
    %v2964 = vunpack.c.l.b16 %v2688
    %v2965 = vunpack.c.h.b16 %v2688
    %v2966 = vunpack.c.l.b16 %v2689
    %v2967 = vunpack.c.h.b16 %v2689
    %v2968 = vunpack.c.l.b16 %v2690
    %v2969 = vunpack.c.h.b16 %v2690
    %v2970 = vunpack.c.l.b16 %v2691
    %v2971 = vunpack.c.h.b16 %v2691
    %v2972 = vunpack.c.l.b16 %v2692
    %v2973 = vunpack.c.h.b16 %v2692
    %v2974 = vunpack.c.l.b16 %v2693
    %v2975 = vunpack.c.h.b16 %v2693
    %v2976 = vunpack.c.l.b16 %v2694
    %v2977 = vunpack.c.h.b16 %v2694
    %v2978 = vunpack.c.l.b16 %v2695
    %v2979 = vunpack.c.h.b16 %v2695
    %v2980 = vunpack.c.l.b16 %v2696
    %v2981 = vunpack.c.h.b16 %v2696
    %v2982 = vunpack.c.l.b16 %v2697
    %v2983 = vunpack.c.h.b16 %v2697
    %v2984 = vunpack.c.l.b16 %v2698
    %v2985 = vunpack.c.h.b16 %v2698
    %v2986 = vunpack.c.l.b16 %v2699
    %v2987 = vunpack.c.h.b16 %v2699
    %v2988 = vunpack.c.l.b16 %v2700
    %v2989 = vunpack.c.h.b16 %v2700
    %v2990 = vunpack.c.l.b16 %v2701
    %v2991 = vunpack.c.h.b16 %v2701
    %v2992 = vunpack.c.l.b16 %v2702
    %v2993 = vunpack.c.h.b16 %v2702
    %v2994 = vunpack.c.l.b16 %v2703
    %v2995 = vunpack.c.h.b16 %v2703
    %v2996 = vunpack.c.l.b16 %v2704
    %v2997 = vunpack.c.h.b16 %v2704
    %v2998 = vunpack.c.l.b16 %v2705
    %v2999 = vunpack.c.h.b16 %v2705
    %v3000 = vunpack.c.l.b16 %v2706
    %v3001 = vunpack.c.h.b16 %v2706
    %v3002 = vunpack.c.l.b16 %v2707
    %v3003 = vunpack.c.h.b16 %v2707
    %v3004 = vunpack.c.l.b16 %v2708
    %v3005 = vunpack.c.h.b16 %v2708
    %v3006 = vunpack.c.l.b16 %v2709
    %v3007 = vunpack.c.h.b16 %v2709
    %v3008 = vunpack.c.l.b16 %v2710
    %v3009 = vunpack.c.h.b16 %v2710
    %v3010 = vunpack.c.l.b16 %v2711
    %v3011 = vunpack.c.h.b16 %v2711
    %v3012 = vunpack.c.l.b16 %v2712
    %v3013 = vunpack.c.h.b16 %v2712
    %v3014 = vunpack.c.l.b16 %v2713
    %v3015 = vunpack.c.h.b16 %v2713
    %v3016 = vunpack.c.l.b16 %v2714
    %v3017 = vunpack.c.h.b16 %v2714
    %v3018 = vunpack.c.l.b16 %v2715
    %v3019 = vunpack.c.h.b16 %v2715
    %v3020 = vunpack.c.l.b16 %v2716
    %v3021 = vunpack.c.h.b16 %v2716
    %v3022 = vunpack.c.l.b16 %v2717
    %v3023 = vunpack.c.h.b16 %v2717
    %v3024 = vunpack.c.l.b16 %v2718
    %v3025 = vunpack.c.h.b16 %v2718
    %v3026 = vunpack.c.l.b16 %v2719
    %v3027 = vunpack.c.h.b16 %v2719
    %v3028 = vunpack.c.l.b16 %v2720
    %v3029 = vunpack.c.h.b16 %v2720
    %v3030 = vunpack.c.l.b16 %v2721
    %v3031 = vunpack.c.h.b16 %v2721
    %v3032 = vunpack.c.l.b16 %v2722
    %v3033 = vunpack.c.h.b16 %v2722
    %v3034 = vunpack.c.l.b16 %v2723
    %v3035 = vunpack.c.h.b16 %v2723
    %v3036 = vunpack.c.l.b16 %v2724
    %v3037 = vunpack.c.h.b16 %v2724
    %v3038 = vunpack.c.l.b16 %v2725
    %v3039 = vunpack.c.h.b16 %v2725
    %v3040 = vunpack.c.l.b16 %v2726
    %v3041 = vunpack.c.h.b16 %v2726
    %v3042 = vunpack.c.l.b16 %v2727
    %v3043 = vunpack.c.h.b16 %v2727
    %v3044 = vunpack.c.l.b16 %v2728
    %v3045 = vunpack.c.h.b16 %v2728
    %v3046 = vunpack.c.l.b16 %v2729
    %v3047 = vunpack.c.h.b16 %v2729
    %v3048 = vunpack.c.l.b16 %v2730
    %v3049 = vunpack.c.h.b16 %v2730
    %v3050 = vunpack.c.l.b16 %v2731
    %v3051 = vunpack.c.h.b16 %v2731
    %v3052 = vunpack.c.l.b16 %v2732
    %v3053 = vunpack.c.h.b16 %v2732
    %v3054 = vunpack.c.l.b16 %v2733
    %v3055 = vunpack.c.h.b16 %v2733
    %v3056 = vunpack.c.l.b16 %v2734
    %v3057 = vunpack.c.h.b16 %v2734
    %v3058 = vunpack.c.l.b16 %v2735
    %v3059 = vunpack.c.h.b16 %v2735
    %v3060 = vunpack.c.l.b16 %v2736
    %v3061 = vunpack.c.h.b16 %v2736
    %v3062 = vunpack.c.l.b16 %v2737
    %v3063 = vunpack.c.h.b16 %v2737
    %v3064 = vunpack.c.l.b16 %v2738
    %v3065 = vunpack.c.h.b16 %v2738
    %v3066 = vunpack.c.l.b16 %v2739
    %v3067 = vunpack.c.h.b16 %v2739
    %v3068 = vunpack.c.l.b16 %v2740
    %v3069 = vunpack.c.h.b16 %v2740
    %v3070 = vunpack.c.l.b16 %v2741
    %v3071 = vunpack.c.h.b16 %v2741
    %v3072 = vunpack.c.l.b16 %v2742
    %v3073 = vunpack.c.h.b16 %v2742
    %v3074 = vunpack.c.l.b16 %v2743
    %v3075 = vunpack.c.h.b16 %v2743
    %v3076 = vunpack.c.l.b16 %v2744
    %v3077 = vunpack.c.h.b16 %v2744
    %v3078 = vunpack.c.l.b16 %v2745
    %v3079 = vunpack.c.h.b16 %v2745
    %v3080 = vunpack.c.l.b16 %v2746
    %v3081 = vunpack.c.h.b16 %v2746
    %v3082 = vunpack.c.l.b16 %v2747
    %v3083 = vunpack.c.h.b16 %v2747
    %v3084 = vunpack.c.l.b16 %v2748
    %v3085 = vunpack.c.h.b16 %v2748
    %v3086 = vunpack.c.l.b16 %v2749
    %v3087 = vunpack.c.h.b16 %v2749
    %v3088 = vunpack.c.l.b16 %v2750
    %v3089 = vunpack.c.h.b16 %v2750
    %v3090 = vunpack.c.l.b16 %v2751
    %v3091 = vunpack.c.h.b16 %v2751
    %v3092 = vunpack.c.l.b16 %v2752
    %v3093 = vunpack.c.h.b16 %v2752
    %v3094 = vunpack.c.l.b16 %v2753
    %v3095 = vunpack.c.h.b16 %v2753
    %v3096 = vunpack.c.l.b16 %v2754
    %v3097 = vunpack.c.h.b16 %v2754
    %v3098 = vunpack.c.l.b16 %v2755
    %v3099 = vunpack.c.h.b16 %v2755
    %v3100 = vunpack.c.l.b16 %v2756
    %v3101 = vunpack.c.h.b16 %v2756
    %v3102 = vunpack.c.l.b16 %v2757
    %v3103 = vunpack.c.h.b16 %v2757
    %v3104 = vunpack.c.l.b16 %v2758
    %v3105 = vunpack.c.h.b16 %v2758
    %v3106 = vunpack.c.l.b16 %v2759
    %v3107 = vunpack.c.h.b16 %v2759
    %v3108 = vunpack.c.l.b16 %v2760
    %v3109 = vunpack.c.h.b16 %v2760
    %v3110 = vunpack.c.l.b16 %v2761
    %v3111 = vunpack.c.h.b16 %v2761
    %v3112 = vunpack.c.l.b16 %v2762
    %v3113 = vunpack.c.h.b16 %v2762
    %v3114 = vunpack.c.l.b16 %v2763
    %v3115 = vunpack.c.h.b16 %v2763
    %v3116 = vunpack.c.l.b16 %v2764
    %v3117 = vunpack.c.h.b16 %v2764
    %v3118 = vunpack.c.l.b16 %v2765
    %v3119 = vunpack.c.h.b16 %v2765
    %v3120 = vunpack.c.l.b16 %v2766
    %v3121 = vunpack.c.h.b16 %v2766
    %v3122 = vunpack.c.l.b16 %v2767
    %v3123 = vunpack.c.h.b16 %v2767
    %v3124 = vunpack.c.l.b16 %v2768
    %v3125 = vunpack.c.h.b16 %v2768
    %v3126 = vunpack.c.l.b16 %v2769
    %v3127 = vunpack.c.h.b16 %v2769
    %v3128 = vunpack.c.l.b16 %v2770
    %v3129 = vunpack.c.h.b16 %v2770
    %v3130 = vunpack.c.l.b16 %v2771
    %v3131 = vunpack.c.h.b16 %v2771
    %v3132 = vunpack.c.l.b16 %v2772
    %v3133 = vunpack.c.h.b16 %v2772
    %v3134 = vunpack.c.l.b16 %v2773
    %v3135 = vunpack.c.h.b16 %v2773
    %v3136 = vunpack.c.l.b16 %v2774
    %v3137 = vunpack.c.h.b16 %v2774
    %v3138 = vunpack.c.l.b16 %v2775
    %v3139 = vunpack.c.h.b16 %v2775
    %v3140 = vunpack.c.l.b16 %v2776
    %v3141 = vunpack.c.h.b16 %v2776
    %v3142 = vunpack.c.l.b16 %v2777
    %v3143 = vunpack.c.h.b16 %v2777
    %v3144 = vunpack.c.l.b16 %v2778
    %v3145 = vunpack.c.h.b16 %v2778
    %v3146 = vunpack.c.l.b16 %v2779
    %v3147 = vunpack.c.h.b16 %v2779
    %v3148 = vunpack.c.l.b16 %v2780
    %v3149 = vunpack.c.h.b16 %v2780
    %v3150 = vunpack.c.l.b16 %v2781
    %v3151 = vunpack.c.h.b16 %v2781
    %v3152 = vunpack.c.l.b16 %v2782
    %v3153 = vunpack.c.h.b16 %v2782
    %v3154 = vunpack.c.l.b16 %v2783
    %v3155 = vunpack.c.h.b16 %v2783
    %v3156 = vunpack.c.l.b16 %v2784
    %v3157 = vunpack.c.h.b16 %v2784
    %v3158 = vunpack.c.l.b16 %v2785
    %v3159 = vunpack.c.h.b16 %v2785
    %v3160 = vunpack.c.l.b16 %v2786
    %v3161 = vunpack.c.h.b16 %v2786
    %v3162 = vunpack.c.l.b16 %v2787
    %v3163 = vunpack.c.h.b16 %v2787
    %v3164 = vunpack.c.l.b16 %v2788
    %v3165 = vunpack.c.h.b16 %v2788
    %v3166 = vunpack.c.l.b16 %v2789
    %v3167 = vunpack.c.h.b16 %v2789
    %v3168 = vunpack.c.l.b16 %v2790
    %v3169 = vunpack.c.h.b16 %v2790
    %v3170 = vunpack.c.l.b16 %v2791
    %v3171 = vunpack.c.h.b16 %v2791
    %v3172 = vunpack.c.l.b16 %v2792
    %v3173 = vunpack.c.h.b16 %v2792
    %v3174 = vunpack.c.l.b16 %v2793
    %v3175 = vunpack.c.h.b16 %v2793
    %v3176 = vunpack.c.l.b16 %v2794
    %v3177 = vunpack.c.h.b16 %v2794
    %v3178 = vunpack.c.l.b16 %v2795
    %v3179 = vunpack.c.h.b16 %v2795
    %v3180 = vpack.c.b16 %v2932, %v2924
    %v3181 = vpack.c.b16 %v2933, %v2925
    %v3182 = vpack.c.b16 %v2934, %v2926
    %v3183 = vpack.c.b16 %v2935, %v2927
    %v3184 = vpack.c.b16 %v2936, %v2928
    %v3185 = vpack.c.b16 %v2937, %v2929
    %v3186 = vpack.c.b16 %v2938, %v2930
    %v3187 = vpack.c.b16 %v2939, %v2931
    %v3188 = vpack.c.b16 %v2948, %v2940
    %v3189 = vpack.c.b16 %v2949, %v2941
    %v3190 = vpack.c.b16 %v2950, %v2942
    %v3191 = vpack.c.b16 %v2951, %v2943
    %v3192 = vpack.c.b16 %v2952, %v2944
    %v3193 = vpack.c.b16 %v2953, %v2945
    %v3194 = vpack.c.b16 %v2954, %v2946
    %v3195 = vpack.c.b16 %v2955, %v2947
    %v3196 = vpack.c.b16 %v2964, %v2956
    %v3197 = vpack.c.b16 %v2965, %v2957
    %v3198 = vpack.c.b16 %v2966, %v2958
    %v3199 = vpack.c.b16 %v2967, %v2959
    %v3200 = vpack.c.b16 %v2968, %v2960
    %v3201 = vpack.c.b16 %v2969, %v2961
    %v3202 = vpack.c.b16 %v2970, %v2962
    %v3203 = vpack.c.b16 %v2971, %v2963
    %v3204 = vpack.c.b16 %v2980, %v2972
    %v3205 = vpack.c.b16 %v2981, %v2973
    %v3206 = vpack.c.b16 %v2982, %v2974
    %v3207 = vpack.c.b16 %v2983, %v2975
    %v3208 = vpack.c.b16 %v2984, %v2976
    %v3209 = vpack.c.b16 %v2985, %v2977
    %v3210 = vpack.c.b16 %v2986, %v2978
    %v3211 = vpack.c.b16 %v2987, %v2979
    %v3212 = vpack.c.b16 %v2996, %v2988
    %v3213 = vpack.c.b16 %v2997, %v2989
    %v3214 = vpack.c.b16 %v2998, %v2990
    %v3215 = vpack.c.b16 %v2999, %v2991
    %v3216 = vpack.c.b16 %v3000, %v2992
    %v3217 = vpack.c.b16 %v3001, %v2993
    %v3218 = vpack.c.b16 %v3002, %v2994
    %v3219 = vpack.c.b16 %v3003, %v2995
    %v3220 = vpack.c.b16 %v3012, %v3004
    %v3221 = vpack.c.b16 %v3013, %v3005
    %v3222 = vpack.c.b16 %v3014, %v3006
    %v3223 = vpack.c.b16 %v3015, %v3007
    %v3224 = vpack.c.b16 %v3016, %v3008
    %v3225 = vpack.c.b16 %v3017, %v3009
    %v3226 = vpack.c.b16 %v3018, %v3010
    %v3227 = vpack.c.b16 %v3019, %v3011
    %v3228 = vpack.c.b16 %v3028, %v3020
    %v3229 = vpack.c.b16 %v3029, %v3021
    %v3230 = vpack.c.b16 %v3030, %v3022
    %v3231 = vpack.c.b16 %v3031, %v3023
    %v3232 = vpack.c.b16 %v3032, %v3024
    %v3233 = vpack.c.b16 %v3033, %v3025
    %v3234 = vpack.c.b16 %v3034, %v3026
    %v3235 = vpack.c.b16 %v3035, %v3027
    %v3236 = vpack.c.b16 %v3044, %v3036
    %v3237 = vpack.c.b16 %v3045, %v3037
    %v3238 = vpack.c.b16 %v3046, %v3038
    %v3239 = vpack.c.b16 %v3047, %v3039
    %v3240 = vpack.c.b16 %v3048, %v3040
    %v3241 = vpack.c.b16 %v3049, %v3041
    %v3242 = vpack.c.b16 %v3050, %v3042
    %v3243 = vpack.c.b16 %v3051, %v3043
    %v3244 = vpack.c.b16 %v3060, %v3052
    %v3245 = vpack.c.b16 %v3061, %v3053
    %v3246 = vpack.c.b16 %v3062, %v3054
    %v3247 = vpack.c.b16 %v3063, %v3055
    %v3248 = vpack.c.b16 %v3064, %v3056
    %v3249 = vpack.c.b16 %v3065, %v3057
    %v3250 = vpack.c.b16 %v3066, %v3058
    %v3251 = vpack.c.b16 %v3067, %v3059
    %v3252 = vpack.c.b16 %v3076, %v3068
    %v3253 = vpack.c.b16 %v3077, %v3069
    %v3254 = vpack.c.b16 %v3078, %v3070
    %v3255 = vpack.c.b16 %v3079, %v3071
    %v3256 = vpack.c.b16 %v3080, %v3072
    %v3257 = vpack.c.b16 %v3081, %v3073
    %v3258 = vpack.c.b16 %v3082, %v3074
    %v3259 = vpack.c.b16 %v3083, %v3075
    %v3260 = vpack.c.b16 %v3092, %v3084
    %v3261 = vpack.c.b16 %v3093, %v3085
    %v3262 = vpack.c.b16 %v3094, %v3086
    %v3263 = vpack.c.b16 %v3095, %v3087
    %v3264 = vpack.c.b16 %v3096, %v3088
    %v3265 = vpack.c.b16 %v3097, %v3089
    %v3266 = vpack.c.b16 %v3098, %v3090
    %v3267 = vpack.c.b16 %v3099, %v3091
    %v3268 = vpack.c.b16 %v3108, %v3100
    %v3269 = vpack.c.b16 %v3109, %v3101
    %v3270 = vpack.c.b16 %v3110, %v3102
    %v3271 = vpack.c.b16 %v3111, %v3103
    %v3272 = vpack.c.b16 %v3112, %v3104
    %v3273 = vpack.c.b16 %v3113, %v3105
    %v3274 = vpack.c.b16 %v3114, %v3106
    %v3275 = vpack.c.b16 %v3115, %v3107
    %v3276 = vpack.c.b16 %v3124, %v3116
    %v3277 = vpack.c.b16 %v3125, %v3117
    %v3278 = vpack.c.b16 %v3126, %v3118
    %v3279 = vpack.c.b16 %v3127, %v3119
    %v3280 = vpack.c.b16 %v3128, %v3120
    %v3281 = vpack.c.b16 %v3129, %v3121
    %v3282 = vpack.c.b16 %v3130, %v3122
    %v3283 = vpack.c.b16 %v3131, %v3123
    %v3284 = vpack.c.b16 %v3140, %v3132
    %v3285 = vpack.c.b16 %v3141, %v3133
    %v3286 = vpack.c.b16 %v3142, %v3134
    %v3287 = vpack.c.b16 %v3143, %v3135
    %v3288 = vpack.c.b16 %v3144, %v3136
    %v3289 = vpack.c.b16 %v3145, %v3137
    %v3290 = vpack.c.b16 %v3146, %v3138
    %v3291 = vpack.c.b16 %v3147, %v3139
    %v3292 = vpack.c.b16 %v3156, %v3148
    %v3293 = vpack.c.b16 %v3157, %v3149
    %v3294 = vpack.c.b16 %v3158, %v3150
    %v3295 = vpack.c.b16 %v3159, %v3151
    %v3296 = vpack.c.b16 %v3160, %v3152
    %v3297 = vpack.c.b16 %v3161, %v3153
    %v3298 = vpack.c.b16 %v3162, %v3154
    %v3299 = vpack.c.b16 %v3163, %v3155
    %v3300 = vpack.c.b16 %v3172, %v3164
    %v3301 = vpack.c.b16 %v3173, %v3165
    %v3302 = vpack.c.b16 %v3174, %v3166
    %v3303 = vpack.c.b16 %v3175, %v3167
    %v3304 = vpack.c.b16 %v3176, %v3168
    %v3305 = vpack.c.b16 %v3177, %v3169
    %v3306 = vpack.c.b16 %v3178, %v3170
    %v3307 = vpack.c.b16 %v3179, %v3171
    %3436 = vmatprep.subr.bf16.mxu0 %v3237
    %3437 = vmatpush1.bf16.msra.mxu0 %v3236
    %3438 = vmatprep.subr.bf16.mxu0 %v3229
    %3439 = vmatpush1.bf16.msra.mxu0 %v3228
    %3440 = vmatprep.subr.bf16.mxu0 %v3221
    %3441 = vmatpush1.bf16.msra.mxu0 %v3220
    %3442 = vmatprep.subr.bf16.mxu0 %v3213
    %3443 = vmatpush1.bf16.msra.mxu0 %v3212
    %3444 = vmatprep.subr.bf16.mxu0 %v3205
    %3445 = vmatpush1.bf16.msra.mxu0 %v3204
    %3446 = vmatprep.subr.bf16.mxu0 %v3197
    %3447 = vmatpush1.bf16.msra.mxu0 %v3196
    %3448 = vmatprep.subr.bf16.mxu0 %v3189
    %3449 = vmatpush1.bf16.msra.mxu0 %v3188
    %3450 = vmatprep.subr.bf16.mxu0 %v3181
    %3451 = vmatpush1.bf16.msra.mxu0 %v3180
    %3452 = vmatprep.subr.bf16.mxu0 %v3301
    %3453 = vmatpush2.bf16.msra.mxu0 %v3300
    %3454 = vmatprep.subr.bf16.mxu0 %v3293
    %3455 = vmatpush2.bf16.msra.mxu0 %v3292
    %3456 = vmatprep.subr.bf16.mxu0 %v3285
    %3457 = vmatpush2.bf16.msra.mxu0 %v3284
    %3458 = vmatprep.subr.bf16.mxu0 %v3277
    %3459 = vmatpush2.bf16.msra.mxu0 %v3276
    %3460 = vmatprep.subr.bf16.mxu0 %v3269
    %3461 = vmatpush2.bf16.msra.mxu0 %v3268
    %3462 = vmatprep.subr.bf16.mxu0 %v3261
    %3463 = vmatpush2.bf16.msra.mxu0 %v3260
    %3464 = vmatprep.subr.bf16.mxu0 %v3253
    %3465 = vmatpush2.bf16.msra.mxu0 %v3252
    %3466 = vmatprep.subr.bf16.mxu0 %v3245
    %3467 = vmatpush2.bf16.msra.mxu0 %v3244
    %3468 = vmatprep.mubr.bf16.mxu0 %v2667
    %3469 = vmatmul.mubr.bf16.gmra.mxu0 %v2666
    %v3470 = vpop.f32.mrf.mxu0
    %v3471 = vadd.f32 0.0, %v3470
    %v3472 = vpop.f32.mrf.mxu0
    %v3473 = vadd.f32 0.0, %v3472
    %v3474 = vpop.f32.mrf.mxu0
    %v3475 = vpop.f32.mrf.mxu0
    %3476 = vdwg.mxu0
    %3477 = vmatprep.subr.bf16.mxu0 %v3239
    %3478 = vmatpush1.bf16.msra.mxu0 %v3238
    %3479 = vmatprep.subr.bf16.mxu0 %v3231
    %3480 = vmatpush1.bf16.msra.mxu0 %v3230
    %3481 = vmatprep.subr.bf16.mxu0 %v3223
    %3482 = vmatpush1.bf16.msra.mxu0 %v3222
    %3483 = vmatprep.subr.bf16.mxu0 %v3215
    %3484 = vmatpush1.bf16.msra.mxu0 %v3214
    %3485 = vmatprep.subr.bf16.mxu0 %v3207
    %3486 = vmatpush1.bf16.msra.mxu0 %v3206
    %3487 = vmatprep.subr.bf16.mxu0 %v3199
    %3488 = vmatpush1.bf16.msra.mxu0 %v3198
    %3489 = vmatprep.subr.bf16.mxu0 %v3191
    %3490 = vmatpush1.bf16.msra.mxu0 %v3190
    %3491 = vmatprep.subr.bf16.mxu0 %v3183
    %3492 = vmatpush1.bf16.msra.mxu0 %v3182
    %3493 = vmatprep.subr.bf16.mxu0 %v3303
    %3494 = vmatpush2.bf16.msra.mxu0 %v3302
    %3495 = vmatprep.subr.bf16.mxu0 %v3295
    %3496 = vmatpush2.bf16.msra.mxu0 %v3294
    %3497 = vmatprep.subr.bf16.mxu0 %v3287
    %3498 = vmatpush2.bf16.msra.mxu0 %v3286
    %3499 = vmatprep.subr.bf16.mxu0 %v3279
    %3500 = vmatpush2.bf16.msra.mxu0 %v3278
    %3501 = vmatprep.subr.bf16.mxu0 %v3271
    %3502 = vmatpush2.bf16.msra.mxu0 %v3270
    %3503 = vmatprep.subr.bf16.mxu0 %v3263
    %3504 = vmatpush2.bf16.msra.mxu0 %v3262
    %3505 = vmatprep.subr.bf16.mxu0 %v3255
    %3506 = vmatpush2.bf16.msra.mxu0 %v3254
    %3507 = vmatprep.subr.bf16.mxu0 %v3247
    %3508 = vmatpush2.bf16.msra.mxu0 %v3246
    %3509 = vmatprep.mubr.bf16.mxu0 %v2667
    %3510 = vmatmul.mubr.bf16.gmra.mxu0 %v2666
    %v3511 = vpop.f32.mrf.mxu0
    %v3512 = vadd.f32 0.0, %v3511
    %v3513 = vpop.f32.mrf.mxu0
    %v3514 = vadd.f32 0.0, %v3513
    %v3515 = vpop.f32.mrf.mxu0
    %v3516 = vpop.f32.mrf.mxu0
    %3517 = vdwg.mxu0
    %3518 = vmatprep.subr.bf16.mxu0 %v3241
    %3519 = vmatpush1.bf16.msra.mxu0 %v3240
    %3520 = vmatprep.subr.bf16.mxu0 %v3233
    %3521 = vmatpush1.bf16.msra.mxu0 %v3232
    %3522 = vmatprep.subr.bf16.mxu0 %v3225
    %3523 = vmatpush1.bf16.msra.mxu0 %v3224
    %3524 = vmatprep.subr.bf16.mxu0 %v3217
    %3525 = vmatpush1.bf16.msra.mxu0 %v3216
    %3526 = vmatprep.subr.bf16.mxu0 %v3209
    %3527 = vmatpush1.bf16.msra.mxu0 %v3208
    %3528 = vmatprep.subr.bf16.mxu0 %v3201
    %3529 = vmatpush1.bf16.msra.mxu0 %v3200
    %3530 = vmatprep.subr.bf16.mxu0 %v3193
    %3531 = vmatpush1.bf16.msra.mxu0 %v3192
    %3532 = vmatprep.subr.bf16.mxu0 %v3185
    %3533 = vmatpush1.bf16.msra.mxu0 %v3184
    %3534 = vmatprep.subr.bf16.mxu0 %v3305
    %3535 = vmatpush2.bf16.msra.mxu0 %v3304
    %3536 = vmatprep.subr.bf16.mxu0 %v3297
    %3537 = vmatpush2.bf16.msra.mxu0 %v3296
    %3538 = vmatprep.subr.bf16.mxu0 %v3289
    %3539 = vmatpush2.bf16.msra.mxu0 %v3288
    %3540 = vmatprep.subr.bf16.mxu0 %v3281
    %3541 = vmatpush2.bf16.msra.mxu0 %v3280
    %3542 = vmatprep.subr.bf16.mxu0 %v3273
    %3543 = vmatpush2.bf16.msra.mxu0 %v3272
    %3544 = vmatprep.subr.bf16.mxu0 %v3265
    %3545 = vmatpush2.bf16.msra.mxu0 %v3264
    %3546 = vmatprep.subr.bf16.mxu0 %v3257
    %3547 = vmatpush2.bf16.msra.mxu0 %v3256
    %3548 = vmatprep.subr.bf16.mxu0 %v3249
    %3549 = vmatpush2.bf16.msra.mxu0 %v3248
    %3550 = vmatprep.mubr.bf16.mxu0 %v2667
    %3551 = vmatmul.mubr.bf16.gmra.mxu0 %v2666
    %v3552 = vpop.f32.mrf.mxu0
    %v3553 = vadd.f32 0.0, %v3552
    %v3554 = vpop.f32.mrf.mxu0
    %v3555 = vadd.f32 0.0, %v3554
    %v3556 = vpop.f32.mrf.mxu0
    %v3557 = vpop.f32.mrf.mxu0
    %3558 = vdwg.mxu0
    %3559 = vmatprep.subr.bf16.mxu0 %v3243
    %3560 = vmatpush1.bf16.msra.mxu0 %v3242
    %3561 = vmatprep.subr.bf16.mxu0 %v3235
    %3562 = vmatpush1.bf16.msra.mxu0 %v3234
    %3563 = vmatprep.subr.bf16.mxu0 %v3227
    %3564 = vmatpush1.bf16.msra.mxu0 %v3226
    %3565 = vmatprep.subr.bf16.mxu0 %v3219
    %3566 = vmatpush1.bf16.msra.mxu0 %v3218
    %3567 = vmatprep.subr.bf16.mxu0 %v3211
    %3568 = vmatpush1.bf16.msra.mxu0 %v3210
    %3569 = vmatprep.subr.bf16.mxu0 %v3203
    %3570 = vmatpush1.bf16.msra.mxu0 %v3202
    %3571 = vmatprep.subr.bf16.mxu0 %v3195
    %3572 = vmatpush1.bf16.msra.mxu0 %v3194
    %3573 = vmatprep.subr.bf16.mxu0 %v3187
    %3574 = vmatpush1.bf16.msra.mxu0 %v3186
    %3575 = vmatprep.subr.bf16.mxu0 %v3307
    %3576 = vmatpush2.bf16.msra.mxu0 %v3306
    %3577 = vmatprep.subr.bf16.mxu0 %v3299
    %3578 = vmatpush2.bf16.msra.mxu0 %v3298
    %3579 = vmatprep.subr.bf16.mxu0 %v3291
    %3580 = vmatpush2.bf16.msra.mxu0 %v3290
    %3581 = vmatprep.subr.bf16.mxu0 %v3283
    %3582 = vmatpush2.bf16.msra.mxu0 %v3282
    %3583 = vmatprep.subr.bf16.mxu0 %v3275
    %3584 = vmatpush2.bf16.msra.mxu0 %v3274
    %3585 = vmatprep.subr.bf16.mxu0 %v3267
    %3586 = vmatpush2.bf16.msra.mxu0 %v3266
    %3587 = vmatprep.subr.bf16.mxu0 %v3259
    %3588 = vmatpush2.bf16.msra.mxu0 %v3258
    %3589 = vmatprep.subr.bf16.mxu0 %v3251
    %3590 = vmatpush2.bf16.msra.mxu0 %v3250
    %3591 = vmatprep.mubr.bf16.mxu0 %v2667
    %3592 = vmatmul.mubr.bf16.gmra.mxu0 %v2666
    %v3593 = vpop.f32.mrf.mxu0
    %v3594 = vadd.f32 0.0, %v3593
    %v3595 = vpop.f32.mrf.mxu0
    %v3596 = vadd.f32 0.0, %v3595
    %v3597 = vpop.f32.mrf.mxu0
    %v3598 = vpop.f32.mrf.mxu0
    %3599 = vdwg.mxu0
    %v3600 = vadd.f32 %v2537, %v3471
    %v3601 = vadd.f32 %v2539, %v3473
    %v3602 = vadd.f32 %v2578, %v3512
    %v3603 = vadd.f32 %v2580, %v3514
    %v3604 = vadd.f32 %v2619, %v3553
    %v3605 = vadd.f32 %v2621, %v3555
    %v3606 = vadd.f32 %v2660, %v3594
    %v3607 = vadd.f32 %v2662, %v3596
    %v3608 = vld [vmem:[%s11] sm:$0xff]
    %v3610 = vlaneseq
    %v3611 = vshrl.u32 %v3610, 7
    %v3612 = vsub.s32 0, %v3611
    %v3613 = vrot.slane %v3608, %v3612
    %v3614 = vlaneseq
    %v3615 = vshrl.u32 %v3614, 7
    %v3616 = vsub.s32 1, %v3615
    %v3617 = vrot.slane %v3608, %v3616
    %v3618 = vlaneseq
    %v3619 = vshrl.u32 %v3618, 7
    %v3620 = vsub.s32 2, %v3619
    %v3621 = vrot.slane %v3608, %v3620
    %v3622 = vlaneseq
    %v3623 = vshrl.u32 %v3622, 7
    %v3624 = vsub.s32 3, %v3623
    %v3625 = vrot.slane %v3608, %v3624
    %v3626 = vlaneseq
    %v3627 = vshrl.u32 %v3626, 7
    %v3628 = vsub.s32 4, %v3627
    %v3629 = vrot.slane %v3608, %v3628
    %v3630 = vlaneseq
    %v3631 = vshrl.u32 %v3630, 7
    %v3632 = vsub.s32 5, %v3631
    %v3633 = vrot.slane %v3608, %v3632
    %v3634 = vlaneseq
    %v3635 = vshrl.u32 %v3634, 7
    %v3636 = vsub.s32 6, %v3635
    %v3637 = vrot.slane %v3608, %v3636
    %v3638 = vlaneseq
    %v3639 = vshrl.u32 %v3638, 7
    %v3640 = vsub.s32 7, %v3639
    %v3641 = vrot.slane %v3608, %v3640
    %v3650 = vadd.f32 %v3600, %v3613
    %v3651 = vadd.f32 %v3601, %v3617
    %v3652 = vadd.f32 %v3602, %v3621
    %v3653 = vadd.f32 %v3603, %v3625
    %v3654 = vadd.f32 %v3604, %v3629
    %v3655 = vadd.f32 %v3605, %v3633
    %v3656 = vadd.f32 %v3606, %v3637
    %v3657 = vadd.f32 %v3607, %v3641
    %v3658 = vxor.u32 %v3650, 2147483648
    %v3659 = vmul.f32 %v3658, 1.442695
    %v3660 = vpow.pop %v3659
    %v3661 = vadd.f32 %v3660, 1.0
    %v3662 = vrcp.pop %v3661
    %v3663 = vmul.f32 1.0, %v3662
    %v3664 = vxor.u32 %v3651, 2147483648
    %v3665 = vmul.f32 %v3664, 1.442695
    %v3666 = vpow.pop %v3665
    %v3667 = vadd.f32 %v3666, 1.0
    %v3668 = vrcp.pop %v3667
    %v3669 = vmul.f32 1.0, %v3668
    %v3670 = vtanh.pop %v3652
    %v3671 = vxor.u32 %v3653, 2147483648
    %v3672 = vmul.f32 %v3671, 1.442695
    %v3673 = vpow.pop %v3672
    %v3674 = vadd.f32 %v3673, 1.0
    %v3675 = vrcp.pop %v3674
    %v3676 = vmul.f32 1.0, %v3675
    %v3677 = vld [vmem:[%s3] sm:$0xff]
    %v3678 = vmul.f32 %v3669, %v3677
    %v3679 = vmul.f32 %v3663, %v3670
    %v3680 = vadd.f32 %v3678, %v3679
    %v3681 = vtanh.pop %v3680
    %v3682 = vmul.f32 %v3676, %v3681
    %v3683 = vxor.u32 %v3654, 2147483648
    %v3684 = vmul.f32 %v3683, 1.442695
    %v3685 = vpow.pop %v3684
    %v3686 = vadd.f32 %v3685, 1.0
    %v3687 = vrcp.pop %v3686
    %v3688 = vmul.f32 1.0, %v3687
    %v3689 = vxor.u32 %v3655, 2147483648
    %v3690 = vmul.f32 %v3689, 1.442695
    %v3691 = vpow.pop %v3690
    %v3692 = vadd.f32 %v3691, 1.0
    %v3693 = vrcp.pop %v3692
    %v3694 = vmul.f32 1.0, %v3693
    %v3695 = vtanh.pop %v3656
    %v3696 = vxor.u32 %v3657, 2147483648
    %v3697 = vmul.f32 %v3696, 1.442695
    %v3698 = vpow.pop %v3697
    %v3699 = vadd.f32 %v3698, 1.0
    %v3700 = vrcp.pop %v3699
    %v3701 = vmul.f32 1.0, %v3700
    %s3702 = scalar_lea.vmem %s3, 8
    %v3703 = vld [vmem:[%s3702] sm:$0xff]
    %v3704 = vmul.f32 %v3694, %v3703
    %v3705 = vmul.f32 %v3688, %v3695
    %v3706 = vadd.f32 %v3704, %v3705
    %v3707 = vtanh.pop %v3706
    %v3708 = vmul.f32 %v3701, %v3707
    %3709 = vst [vmem:[#allocation21] sm:$0xff] %v3682
    %s3710 = scalar_lea.vmem [#allocation21], 8
    %3711 = vst [vmem:[%s3710] sm:$0xff] %v3708
    %3712 = vst [vmem:[#allocation23] sm:$0xff] %v3680
    %s3713 = scalar_lea.vmem [#allocation23], 8
    %3714 = vst [vmem:[%s3713] sm:$0xff] %v3706
    %v3715 = vpack.c.bf16 %v3682, %v3682
    %v3716 = vpack.c.bf16 %v3708, %v3708
    %v3717 = vld [vmem:[#allocation14] sm:$0xff]
    %v3718 = vld [vmem:[#allocation14 + $0x8] sm:$0xff]
    %v3719 = vld [vmem:[#allocation14 + $0x10] sm:$0xff]
    %v3720 = vld [vmem:[#allocation14 + $0x18] sm:$0xff]
    %v3721 = vld [vmem:[#allocation14 + $0x20] sm:$0xff]
    %v3722 = vld [vmem:[#allocation14 + $0x28] sm:$0xff]
    %v3723 = vld [vmem:[#allocation14 + $0x30] sm:$0xff]
    %v3724 = vld [vmem:[#allocation14 + $0x38] sm:$0xff]
    %v3725 = vld [vmem:[#allocation14 + $0x40] sm:$0xff]
    %v3726 = vld [vmem:[#allocation14 + $0x48] sm:$0xff]
    %v3727 = vld [vmem:[#allocation14 + $0x50] sm:$0xff]
    %v3728 = vld [vmem:[#allocation14 + $0x58] sm:$0xff]
    %v3729 = vld [vmem:[#allocation14 + $0x60] sm:$0xff]
    %v3730 = vld [vmem:[#allocation14 + $0x68] sm:$0xff]
    %v3731 = vld [vmem:[#allocation14 + $0x70] sm:$0xff]
    %v3732 = vld [vmem:[#allocation14 + $0x78] sm:$0xff]
    %v3733 = vld [vmem:[#allocation14 + $0x80] sm:$0xff]
    %v3734 = vld [vmem:[#allocation14 + $0x88] sm:$0xff]
    %v3735 = vld [vmem:[#allocation14 + $0x90] sm:$0xff]
    %v3736 = vld [vmem:[#allocation14 + $0x98] sm:$0xff]
    %v3737 = vld [vmem:[#allocation14 + $0xa0] sm:$0xff]
    %v3738 = vld [vmem:[#allocation14 + $0xa8] sm:$0xff]
    %v3739 = vld [vmem:[#allocation14 + $0xb0] sm:$0xff]
    %v3740 = vld [vmem:[#allocation14 + $0xb8] sm:$0xff]
    %v3741 = vld [vmem:[#allocation14 + $0xc0] sm:$0xff]
    %v3742 = vld [vmem:[#allocation14 + $0xc8] sm:$0xff]
    %v3743 = vld [vmem:[#allocation14 + $0xd0] sm:$0xff]
    %v3744 = vld [vmem:[#allocation14 + $0xd8] sm:$0xff]
    %v3745 = vld [vmem:[#allocation14 + $0xe0] sm:$0xff]
    %v3746 = vld [vmem:[#allocation14 + $0xe8] sm:$0xff]
    %v3747 = vld [vmem:[#allocation14 + $0xf0] sm:$0xff]
    %v3748 = vld [vmem:[#allocation14 + $0xf8] sm:$0xff]
    %v3749 = vld [vmem:[#allocation14 + $0x100] sm:$0xff]
    %v3750 = vld [vmem:[#allocation14 + $0x108] sm:$0xff]
    %v3751 = vld [vmem:[#allocation14 + $0x110] sm:$0xff]
    %v3752 = vld [vmem:[#allocation14 + $0x118] sm:$0xff]
    %v3753 = vld [vmem:[#allocation14 + $0x120] sm:$0xff]
    %v3754 = vld [vmem:[#allocation14 + $0x128] sm:$0xff]
    %v3755 = vld [vmem:[#allocation14 + $0x130] sm:$0xff]
    %v3756 = vld [vmem:[#allocation14 + $0x138] sm:$0xff]
    %v3757 = vld [vmem:[#allocation14 + $0x140] sm:$0xff]
    %v3758 = vld [vmem:[#allocation14 + $0x148] sm:$0xff]
    %v3759 = vld [vmem:[#allocation14 + $0x150] sm:$0xff]
    %v3760 = vld [vmem:[#allocation14 + $0x158] sm:$0xff]
    %v3761 = vld [vmem:[#allocation14 + $0x160] sm:$0xff]
    %v3762 = vld [vmem:[#allocation14 + $0x168] sm:$0xff]
    %v3763 = vld [vmem:[#allocation14 + $0x170] sm:$0xff]
    %v3764 = vld [vmem:[#allocation14 + $0x178] sm:$0xff]
    %v3765 = vld [vmem:[#allocation14 + $0x180] sm:$0xff]
    %v3766 = vld [vmem:[#allocation14 + $0x188] sm:$0xff]
    %v3767 = vld [vmem:[#allocation14 + $0x190] sm:$0xff]
    %v3768 = vld [vmem:[#allocation14 + $0x198] sm:$0xff]
    %v3769 = vld [vmem:[#allocation14 + $0x1a0] sm:$0xff]
    %v3770 = vld [vmem:[#allocation14 + $0x1a8] sm:$0xff]
    %v3771 = vld [vmem:[#allocation14 + $0x1b0] sm:$0xff]
    %v3772 = vld [vmem:[#allocation14 + $0x1b8] sm:$0xff]
    %v3773 = vld [vmem:[#allocation14 + $0x1c0] sm:$0xff]
    %v3774 = vld [vmem:[#allocation14 + $0x1c8] sm:$0xff]
    %v3775 = vld [vmem:[#allocation14 + $0x1d0] sm:$0xff]
    %v3776 = vld [vmem:[#allocation14 + $0x1d8] sm:$0xff]
    %v3777 = vld [vmem:[#allocation14 + $0x1e0] sm:$0xff]
    %v3778 = vld [vmem:[#allocation14 + $0x1e8] sm:$0xff]
    %v3779 = vld [vmem:[#allocation14 + $0x1f0] sm:$0xff]
    %v3780 = vld [vmem:[#allocation14 + $0x1f8] sm:$0xff]
    %v3781 = vld [vmem:[#allocation16] sm:$0xff]
    %v3782 = vld [vmem:[#allocation16 + $0x8] sm:$0xff]
    %v3783 = vld [vmem:[#allocation16 + $0x10] sm:$0xff]
    %v3784 = vld [vmem:[#allocation16 + $0x18] sm:$0xff]
    %v3785 = vld [vmem:[#allocation16 + $0x20] sm:$0xff]
    %v3786 = vld [vmem:[#allocation16 + $0x28] sm:$0xff]
    %v3787 = vld [vmem:[#allocation16 + $0x30] sm:$0xff]
    %v3788 = vld [vmem:[#allocation16 + $0x38] sm:$0xff]
    %v3789 = vld [vmem:[#allocation16 + $0x40] sm:$0xff]
    %v3790 = vld [vmem:[#allocation16 + $0x48] sm:$0xff]
    %v3791 = vld [vmem:[#allocation16 + $0x50] sm:$0xff]
    %v3792 = vld [vmem:[#allocation16 + $0x58] sm:$0xff]
    %v3793 = vld [vmem:[#allocation16 + $0x60] sm:$0xff]
    %v3794 = vld [vmem:[#allocation16 + $0x68] sm:$0xff]
    %v3795 = vld [vmem:[#allocation16 + $0x70] sm:$0xff]
    %v3796 = vld [vmem:[#allocation16 + $0x78] sm:$0xff]
    %v3797 = vld [vmem:[#allocation16 + $0x80] sm:$0xff]
    %v3798 = vld [vmem:[#allocation16 + $0x88] sm:$0xff]
    %v3799 = vld [vmem:[#allocation16 + $0x90] sm:$0xff]
    %v3800 = vld [vmem:[#allocation16 + $0x98] sm:$0xff]
    %v3801 = vld [vmem:[#allocation16 + $0xa0] sm:$0xff]
    %v3802 = vld [vmem:[#allocation16 + $0xa8] sm:$0xff]
    %v3803 = vld [vmem:[#allocation16 + $0xb0] sm:$0xff]
    %v3804 = vld [vmem:[#allocation16 + $0xb8] sm:$0xff]
    %v3805 = vld [vmem:[#allocation16 + $0xc0] sm:$0xff]
    %v3806 = vld [vmem:[#allocation16 + $0xc8] sm:$0xff]
    %v3807 = vld [vmem:[#allocation16 + $0xd0] sm:$0xff]
    %v3808 = vld [vmem:[#allocation16 + $0xd8] sm:$0xff]
    %v3809 = vld [vmem:[#allocation16 + $0xe0] sm:$0xff]
    %v3810 = vld [vmem:[#allocation16 + $0xe8] sm:$0xff]
    %v3811 = vld [vmem:[#allocation16 + $0xf0] sm:$0xff]
    %v3812 = vld [vmem:[#allocation16 + $0xf8] sm:$0xff]
    %v3813 = vld [vmem:[#allocation16 + $0x100] sm:$0xff]
    %v3814 = vld [vmem:[#allocation16 + $0x108] sm:$0xff]
    %v3815 = vld [vmem:[#allocation16 + $0x110] sm:$0xff]
    %v3816 = vld [vmem:[#allocation16 + $0x118] sm:$0xff]
    %v3817 = vld [vmem:[#allocation16 + $0x120] sm:$0xff]
    %v3818 = vld [vmem:[#allocation16 + $0x128] sm:$0xff]
    %v3819 = vld [vmem:[#allocation16 + $0x130] sm:$0xff]
    %v3820 = vld [vmem:[#allocation16 + $0x138] sm:$0xff]
    %v3821 = vld [vmem:[#allocation16 + $0x140] sm:$0xff]
    %v3822 = vld [vmem:[#allocation16 + $0x148] sm:$0xff]
    %v3823 = vld [vmem:[#allocation16 + $0x150] sm:$0xff]
    %v3824 = vld [vmem:[#allocation16 + $0x158] sm:$0xff]
    %v3825 = vld [vmem:[#allocation16 + $0x160] sm:$0xff]
    %v3826 = vld [vmem:[#allocation16 + $0x168] sm:$0xff]
    %v3827 = vld [vmem:[#allocation16 + $0x170] sm:$0xff]
    %v3828 = vld [vmem:[#allocation16 + $0x178] sm:$0xff]
    %v3829 = vld [vmem:[#allocation16 + $0x180] sm:$0xff]
    %v3830 = vld [vmem:[#allocation16 + $0x188] sm:$0xff]
    %v3831 = vld [vmem:[#allocation16 + $0x190] sm:$0xff]
    %v3832 = vld [vmem:[#allocation16 + $0x198] sm:$0xff]
    %v3833 = vld [vmem:[#allocation16 + $0x1a0] sm:$0xff]
    %v3834 = vld [vmem:[#allocation16 + $0x1a8] sm:$0xff]
    %v3835 = vld [vmem:[#allocation16 + $0x1b0] sm:$0xff]
    %v3836 = vld [vmem:[#allocation16 + $0x1b8] sm:$0xff]
    %v3837 = vld [vmem:[#allocation16 + $0x1c0] sm:$0xff]
    %v3838 = vld [vmem:[#allocation16 + $0x1c8] sm:$0xff]
    %v3839 = vld [vmem:[#allocation16 + $0x1d0] sm:$0xff]
    %v3840 = vld [vmem:[#allocation16 + $0x1d8] sm:$0xff]
    %v3841 = vld [vmem:[#allocation16 + $0x1e0] sm:$0xff]
    %v3842 = vld [vmem:[#allocation16 + $0x1e8] sm:$0xff]
    %v3843 = vld [vmem:[#allocation16 + $0x1f0] sm:$0xff]
    %v3844 = vld [vmem:[#allocation16 + $0x1f8] sm:$0xff]
    %v3909 = vunpack.c.l.b16 %v3781
    %v3910 = vunpack.c.h.b16 %v3781
    %v3911 = vunpack.c.l.b16 %v3782
    %v3912 = vunpack.c.h.b16 %v3782
    %v3913 = vunpack.c.l.b16 %v3783
    %v3914 = vunpack.c.h.b16 %v3783
    %v3915 = vunpack.c.l.b16 %v3784
    %v3916 = vunpack.c.h.b16 %v3784
    %v3917 = vunpack.c.l.b16 %v3785
    %v3918 = vunpack.c.h.b16 %v3785
    %v3919 = vunpack.c.l.b16 %v3786
    %v3920 = vunpack.c.h.b16 %v3786
    %v3921 = vunpack.c.l.b16 %v3787
    %v3922 = vunpack.c.h.b16 %v3787
    %v3923 = vunpack.c.l.b16 %v3788
    %v3924 = vunpack.c.h.b16 %v3788
    %v3925 = vunpack.c.l.b16 %v3789
    %v3926 = vunpack.c.h.b16 %v3789
    %v3927 = vunpack.c.l.b16 %v3790
    %v3928 = vunpack.c.h.b16 %v3790
    %v3929 = vunpack.c.l.b16 %v3791
    %v3930 = vunpack.c.h.b16 %v3791
    %v3931 = vunpack.c.l.b16 %v3792
    %v3932 = vunpack.c.h.b16 %v3792
    %v3933 = vunpack.c.l.b16 %v3793
    %v3934 = vunpack.c.h.b16 %v3793
    %v3935 = vunpack.c.l.b16 %v3794
    %v3936 = vunpack.c.h.b16 %v3794
    %v3937 = vunpack.c.l.b16 %v3795
    %v3938 = vunpack.c.h.b16 %v3795
    %v3939 = vunpack.c.l.b16 %v3796
    %v3940 = vunpack.c.h.b16 %v3796
    %v3941 = vunpack.c.l.b16 %v3797
    %v3942 = vunpack.c.h.b16 %v3797
    %v3943 = vunpack.c.l.b16 %v3798
    %v3944 = vunpack.c.h.b16 %v3798
    %v3945 = vunpack.c.l.b16 %v3799
    %v3946 = vunpack.c.h.b16 %v3799
    %v3947 = vunpack.c.l.b16 %v3800
    %v3948 = vunpack.c.h.b16 %v3800
    %v3949 = vunpack.c.l.b16 %v3801
    %v3950 = vunpack.c.h.b16 %v3801
    %v3951 = vunpack.c.l.b16 %v3802
    %v3952 = vunpack.c.h.b16 %v3802
    %v3953 = vunpack.c.l.b16 %v3803
    %v3954 = vunpack.c.h.b16 %v3803
    %v3955 = vunpack.c.l.b16 %v3804
    %v3956 = vunpack.c.h.b16 %v3804
    %v3957 = vunpack.c.l.b16 %v3805
    %v3958 = vunpack.c.h.b16 %v3805
    %v3959 = vunpack.c.l.b16 %v3806
    %v3960 = vunpack.c.h.b16 %v3806
    %v3961 = vunpack.c.l.b16 %v3807
    %v3962 = vunpack.c.h.b16 %v3807
    %v3963 = vunpack.c.l.b16 %v3808
    %v3964 = vunpack.c.h.b16 %v3808
    %v3965 = vunpack.c.l.b16 %v3809
    %v3966 = vunpack.c.h.b16 %v3809
    %v3967 = vunpack.c.l.b16 %v3810
    %v3968 = vunpack.c.h.b16 %v3810
    %v3969 = vunpack.c.l.b16 %v3811
    %v3970 = vunpack.c.h.b16 %v3811
    %v3971 = vunpack.c.l.b16 %v3812
    %v3972 = vunpack.c.h.b16 %v3812
    %v3973 = vunpack.c.l.b16 %v3813
    %v3974 = vunpack.c.h.b16 %v3813
    %v3975 = vunpack.c.l.b16 %v3814
    %v3976 = vunpack.c.h.b16 %v3814
    %v3977 = vunpack.c.l.b16 %v3815
    %v3978 = vunpack.c.h.b16 %v3815
    %v3979 = vunpack.c.l.b16 %v3816
    %v3980 = vunpack.c.h.b16 %v3816
    %v3981 = vunpack.c.l.b16 %v3817
    %v3982 = vunpack.c.h.b16 %v3817
    %v3983 = vunpack.c.l.b16 %v3818
    %v3984 = vunpack.c.h.b16 %v3818
    %v3985 = vunpack.c.l.b16 %v3819
    %v3986 = vunpack.c.h.b16 %v3819
    %v3987 = vunpack.c.l.b16 %v3820
    %v3988 = vunpack.c.h.b16 %v3820
    %v3989 = vunpack.c.l.b16 %v3821
    %v3990 = vunpack.c.h.b16 %v3821
    %v3991 = vunpack.c.l.b16 %v3822
    %v3992 = vunpack.c.h.b16 %v3822
    %v3993 = vunpack.c.l.b16 %v3823
    %v3994 = vunpack.c.h.b16 %v3823
    %v3995 = vunpack.c.l.b16 %v3824
    %v3996 = vunpack.c.h.b16 %v3824
    %v3997 = vunpack.c.l.b16 %v3825
    %v3998 = vunpack.c.h.b16 %v3825
    %v3999 = vunpack.c.l.b16 %v3826
    %v4000 = vunpack.c.h.b16 %v3826
    %v4001 = vunpack.c.l.b16 %v3827
    %v4002 = vunpack.c.h.b16 %v3827
    %v4003 = vunpack.c.l.b16 %v3828
    %v4004 = vunpack.c.h.b16 %v3828
    %v4005 = vunpack.c.l.b16 %v3829
    %v4006 = vunpack.c.h.b16 %v3829
    %v4007 = vunpack.c.l.b16 %v3830
    %v4008 = vunpack.c.h.b16 %v3830
    %v4009 = vunpack.c.l.b16 %v3831
    %v4010 = vunpack.c.h.b16 %v3831
    %v4011 = vunpack.c.l.b16 %v3832
    %v4012 = vunpack.c.h.b16 %v3832
    %v4013 = vunpack.c.l.b16 %v3833
    %v4014 = vunpack.c.h.b16 %v3833
    %v4015 = vunpack.c.l.b16 %v3834
    %v4016 = vunpack.c.h.b16 %v3834
    %v4017 = vunpack.c.l.b16 %v3835
    %v4018 = vunpack.c.h.b16 %v3835
    %v4019 = vunpack.c.l.b16 %v3836
    %v4020 = vunpack.c.h.b16 %v3836
    %v4021 = vunpack.c.l.b16 %v3837
    %v4022 = vunpack.c.h.b16 %v3837
    %v4023 = vunpack.c.l.b16 %v3838
    %v4024 = vunpack.c.h.b16 %v3838
    %v4025 = vunpack.c.l.b16 %v3839
    %v4026 = vunpack.c.h.b16 %v3839
    %v4027 = vunpack.c.l.b16 %v3840
    %v4028 = vunpack.c.h.b16 %v3840
    %v4029 = vunpack.c.l.b16 %v3841
    %v4030 = vunpack.c.h.b16 %v3841
    %v4031 = vunpack.c.l.b16 %v3842
    %v4032 = vunpack.c.h.b16 %v3842
    %v4033 = vunpack.c.l.b16 %v3843
    %v4034 = vunpack.c.h.b16 %v3843
    %v4035 = vunpack.c.l.b16 %v3844
    %v4036 = vunpack.c.h.b16 %v3844
    %v4037 = vpack.c.b16 %v3913, %v3909
    %v4038 = vpack.c.b16 %v3914, %v3910
    %v4039 = vpack.c.b16 %v3915, %v3911
    %v4040 = vpack.c.b16 %v3916, %v3912
    %v4041 = vpack.c.b16 %v3921, %v3917
    %v4042 = vpack.c.b16 %v3922, %v3918
    %v4043 = vpack.c.b16 %v3923, %v3919
    %v4044 = vpack.c.b16 %v3924, %v3920
    %v4045 = vpack.c.b16 %v3929, %v3925
    %v4046 = vpack.c.b16 %v3930, %v3926
    %v4047 = vpack.c.b16 %v3931, %v3927
    %v4048 = vpack.c.b16 %v3932, %v3928
    %v4049 = vpack.c.b16 %v3937, %v3933
    %v4050 = vpack.c.b16 %v3938, %v3934
    %v4051 = vpack.c.b16 %v3939, %v3935
    %v4052 = vpack.c.b16 %v3940, %v3936
    %v4053 = vpack.c.b16 %v3945, %v3941
    %v4054 = vpack.c.b16 %v3946, %v3942
    %v4055 = vpack.c.b16 %v3947, %v3943
    %v4056 = vpack.c.b16 %v3948, %v3944
    %v4057 = vpack.c.b16 %v3953, %v3949
    %v4058 = vpack.c.b16 %v3954, %v3950
    %v4059 = vpack.c.b16 %v3955, %v3951
    %v4060 = vpack.c.b16 %v3956, %v3952
    %v4061 = vpack.c.b16 %v3961, %v3957
    %v4062 = vpack.c.b16 %v3962, %v3958
    %v4063 = vpack.c.b16 %v3963, %v3959
    %v4064 = vpack.c.b16 %v3964, %v3960
    %v4065 = vpack.c.b16 %v3969, %v3965
    %v4066 = vpack.c.b16 %v3970, %v3966
    %v4067 = vpack.c.b16 %v3971, %v3967
    %v4068 = vpack.c.b16 %v3972, %v3968
    %v4069 = vpack.c.b16 %v3977, %v3973
    %v4070 = vpack.c.b16 %v3978, %v3974
    %v4071 = vpack.c.b16 %v3979, %v3975
    %v4072 = vpack.c.b16 %v3980, %v3976
    %v4073 = vpack.c.b16 %v3985, %v3981
    %v4074 = vpack.c.b16 %v3986, %v3982
    %v4075 = vpack.c.b16 %v3987, %v3983
    %v4076 = vpack.c.b16 %v3988, %v3984
    %v4077 = vpack.c.b16 %v3993, %v3989
    %v4078 = vpack.c.b16 %v3994, %v3990
    %v4079 = vpack.c.b16 %v3995, %v3991
    %v4080 = vpack.c.b16 %v3996, %v3992
    %v4081 = vpack.c.b16 %v4001, %v3997
    %v4082 = vpack.c.b16 %v4002, %v3998
    %v4083 = vpack.c.b16 %v4003, %v3999
    %v4084 = vpack.c.b16 %v4004, %v4000
    %v4085 = vpack.c.b16 %v4009, %v4005
    %v4086 = vpack.c.b16 %v4010, %v4006
    %v4087 = vpack.c.b16 %v4011, %v4007
    %v4088 = vpack.c.b16 %v4012, %v4008
    %v4089 = vpack.c.b16 %v4017, %v4013
    %v4090 = vpack.c.b16 %v4018, %v4014
    %v4091 = vpack.c.b16 %v4019, %v4015
    %v4092 = vpack.c.b16 %v4020, %v4016
    %v4093 = vpack.c.b16 %v4025, %v4021
    %v4094 = vpack.c.b16 %v4026, %v4022
    %v4095 = vpack.c.b16 %v4027, %v4023
    %v4096 = vpack.c.b16 %v4028, %v4024
    %v4097 = vpack.c.b16 %v4033, %v4029
    %v4098 = vpack.c.b16 %v4034, %v4030
    %v4099 = vpack.c.b16 %v4035, %v4031
    %v4100 = vpack.c.b16 %v4036, %v4032
    %4165 = vmatprep.subr.bf16.mxu0 %v4066
    %4166 = vmatpush1.bf16.msra.mxu0 %v4065
    %4167 = vmatprep.subr.bf16.mxu0 %v4062
    %4168 = vmatpush1.bf16.msra.mxu0 %v4061
    %4169 = vmatprep.subr.bf16.mxu0 %v4058
    %4170 = vmatpush1.bf16.msra.mxu0 %v4057
    %4171 = vmatprep.subr.bf16.mxu0 %v4054
    %4172 = vmatpush1.bf16.msra.mxu0 %v4053
    %4173 = vmatprep.subr.bf16.mxu0 %v4050
    %4174 = vmatpush1.bf16.msra.mxu0 %v4049
    %4175 = vmatprep.subr.bf16.mxu0 %v4046
    %4176 = vmatpush1.bf16.msra.mxu0 %v4045
    %4177 = vmatprep.subr.bf16.mxu0 %v4042
    %4178 = vmatpush1.bf16.msra.mxu0 %v4041
    %4179 = vmatprep.subr.bf16.mxu0 %v4038
    %4180 = vmatpush1.bf16.msra.mxu0 %v4037
    %4181 = vmatprep.subr.bf16.mxu0 %v4098
    %4182 = vmatpush2.bf16.msra.mxu0 %v4097
    %4183 = vmatprep.subr.bf16.mxu0 %v4094
    %4184 = vmatpush2.bf16.msra.mxu0 %v4093
    %4185 = vmatprep.subr.bf16.mxu0 %v4090
    %4186 = vmatpush2.bf16.msra.mxu0 %v4089
    %4187 = vmatprep.subr.bf16.mxu0 %v4086
    %4188 = vmatpush2.bf16.msra.mxu0 %v4085
    %4189 = vmatprep.subr.bf16.mxu0 %v4082
    %4190 = vmatpush2.bf16.msra.mxu0 %v4081
    %4191 = vmatprep.subr.bf16.mxu0 %v4078
    %4192 = vmatpush2.bf16.msra.mxu0 %v4077
    %4193 = vmatprep.subr.bf16.mxu0 %v4074
    %4194 = vmatpush2.bf16.msra.mxu0 %v4073
    %4195 = vmatprep.subr.bf16.mxu0 %v4070
    %4196 = vmatpush2.bf16.msra.mxu0 %v4069
    %4197 = vmatprep.mubr.bf16.mxu0 %v1375
    %4198 = vmatmul.mubr.bf16.gmra.mxu0 %v1374
    %v4199 = vpop.f32.mrf.mxu0
    %v4200 = vadd.f32 0.0, %v4199
    %v4201 = vpop.f32.mrf.mxu0
    %v4202 = vadd.f32 0.0, %v4201
    %v4203 = vpop.f32.mrf.mxu0
    %v4204 = vpop.f32.mrf.mxu0
    %4205 = vdwg.mxu0
    %4206 = vmatprep.subr.bf16.mxu0 %v4068
    %4207 = vmatpush1.bf16.msra.mxu0 %v4067
    %4208 = vmatprep.subr.bf16.mxu0 %v4064
    %4209 = vmatpush1.bf16.msra.mxu0 %v4063
    %4210 = vmatprep.subr.bf16.mxu0 %v4060
    %4211 = vmatpush1.bf16.msra.mxu0 %v4059
    %4212 = vmatprep.subr.bf16.mxu0 %v4056
    %4213 = vmatpush1.bf16.msra.mxu0 %v4055
    %4214 = vmatprep.subr.bf16.mxu0 %v4052
    %4215 = vmatpush1.bf16.msra.mxu0 %v4051
    %4216 = vmatprep.subr.bf16.mxu0 %v4048
    %4217 = vmatpush1.bf16.msra.mxu0 %v4047
    %4218 = vmatprep.subr.bf16.mxu0 %v4044
    %4219 = vmatpush1.bf16.msra.mxu0 %v4043
    %4220 = vmatprep.subr.bf16.mxu0 %v4040
    %4221 = vmatpush1.bf16.msra.mxu0 %v4039
    %4222 = vmatprep.subr.bf16.mxu0 %v4100
    %4223 = vmatpush2.bf16.msra.mxu0 %v4099
    %4224 = vmatprep.subr.bf16.mxu0 %v4096
    %4225 = vmatpush2.bf16.msra.mxu0 %v4095
    %4226 = vmatprep.subr.bf16.mxu0 %v4092
    %4227 = vmatpush2.bf16.msra.mxu0 %v4091
    %4228 = vmatprep.subr.bf16.mxu0 %v4088
    %4229 = vmatpush2.bf16.msra.mxu0 %v4087
    %4230 = vmatprep.subr.bf16.mxu0 %v4084
    %4231 = vmatpush2.bf16.msra.mxu0 %v4083
    %4232 = vmatprep.subr.bf16.mxu0 %v4080
    %4233 = vmatpush2.bf16.msra.mxu0 %v4079
    %4234 = vmatprep.subr.bf16.mxu0 %v4076
    %4235 = vmatpush2.bf16.msra.mxu0 %v4075
    %4236 = vmatprep.subr.bf16.mxu0 %v4072
    %4237 = vmatpush2.bf16.msra.mxu0 %v4071
    %4238 = vmatprep.mubr.bf16.mxu0 %v1375
    %4239 = vmatmul.mubr.bf16.gmra.mxu0 %v1374
    %v4240 = vpop.f32.mrf.mxu0
    %v4241 = vadd.f32 0.0, %v4240
    %v4242 = vpop.f32.mrf.mxu0
    %v4243 = vadd.f32 0.0, %v4242
    %v4244 = vpop.f32.mrf.mxu0
    %v4245 = vpop.f32.mrf.mxu0
    %4246 = vdwg.mxu0
    %v4311 = vunpack.c.l.b16 %v3717
    %v4312 = vunpack.c.h.b16 %v3717
    %v4313 = vunpack.c.l.b16 %v3718
    %v4314 = vunpack.c.h.b16 %v3718
    %v4315 = vunpack.c.l.b16 %v3719
    %v4316 = vunpack.c.h.b16 %v3719
    %v4317 = vunpack.c.l.b16 %v3720
    %v4318 = vunpack.c.h.b16 %v3720
    %v4319 = vunpack.c.l.b16 %v3721
    %v4320 = vunpack.c.h.b16 %v3721
    %v4321 = vunpack.c.l.b16 %v3722
    %v4322 = vunpack.c.h.b16 %v3722
    %v4323 = vunpack.c.l.b16 %v3723
    %v4324 = vunpack.c.h.b16 %v3723
    %v4325 = vunpack.c.l.b16 %v3724
    %v4326 = vunpack.c.h.b16 %v3724
    %v4327 = vunpack.c.l.b16 %v3725
    %v4328 = vunpack.c.h.b16 %v3725
    %v4329 = vunpack.c.l.b16 %v3726
    %v4330 = vunpack.c.h.b16 %v3726
    %v4331 = vunpack.c.l.b16 %v3727
    %v4332 = vunpack.c.h.b16 %v3727
    %v4333 = vunpack.c.l.b16 %v3728
    %v4334 = vunpack.c.h.b16 %v3728
    %v4335 = vunpack.c.l.b16 %v3729
    %v4336 = vunpack.c.h.b16 %v3729
    %v4337 = vunpack.c.l.b16 %v3730
    %v4338 = vunpack.c.h.b16 %v3730
    %v4339 = vunpack.c.l.b16 %v3731
    %v4340 = vunpack.c.h.b16 %v3731
    %v4341 = vunpack.c.l.b16 %v3732
    %v4342 = vunpack.c.h.b16 %v3732
    %v4343 = vunpack.c.l.b16 %v3733
    %v4344 = vunpack.c.h.b16 %v3733
    %v4345 = vunpack.c.l.b16 %v3734
    %v4346 = vunpack.c.h.b16 %v3734
    %v4347 = vunpack.c.l.b16 %v3735
    %v4348 = vunpack.c.h.b16 %v3735
    %v4349 = vunpack.c.l.b16 %v3736
    %v4350 = vunpack.c.h.b16 %v3736
    %v4351 = vunpack.c.l.b16 %v3737
    %v4352 = vunpack.c.h.b16 %v3737
    %v4353 = vunpack.c.l.b16 %v3738
    %v4354 = vunpack.c.h.b16 %v3738
    %v4355 = vunpack.c.l.b16 %v3739
    %v4356 = vunpack.c.h.b16 %v3739
    %v4357 = vunpack.c.l.b16 %v3740
    %v4358 = vunpack.c.h.b16 %v3740
    %v4359 = vunpack.c.l.b16 %v3741
    %v4360 = vunpack.c.h.b16 %v3741
    %v4361 = vunpack.c.l.b16 %v3742
    %v4362 = vunpack.c.h.b16 %v3742
    %v4363 = vunpack.c.l.b16 %v3743
    %v4364 = vunpack.c.h.b16 %v3743
    %v4365 = vunpack.c.l.b16 %v3744
    %v4366 = vunpack.c.h.b16 %v3744
    %v4367 = vunpack.c.l.b16 %v3745
    %v4368 = vunpack.c.h.b16 %v3745
    %v4369 = vunpack.c.l.b16 %v3746
    %v4370 = vunpack.c.h.b16 %v3746
    %v4371 = vunpack.c.l.b16 %v3747
    %v4372 = vunpack.c.h.b16 %v3747
    %v4373 = vunpack.c.l.b16 %v3748
    %v4374 = vunpack.c.h.b16 %v3748
    %v4375 = vunpack.c.l.b16 %v3749
    %v4376 = vunpack.c.h.b16 %v3749
    %v4377 = vunpack.c.l.b16 %v3750
    %v4378 = vunpack.c.h.b16 %v3750
    %v4379 = vunpack.c.l.b16 %v3751
    %v4380 = vunpack.c.h.b16 %v3751
    %v4381 = vunpack.c.l.b16 %v3752
    %v4382 = vunpack.c.h.b16 %v3752
    %v4383 = vunpack.c.l.b16 %v3753
    %v4384 = vunpack.c.h.b16 %v3753
    %v4385 = vunpack.c.l.b16 %v3754
    %v4386 = vunpack.c.h.b16 %v3754
    %v4387 = vunpack.c.l.b16 %v3755
    %v4388 = vunpack.c.h.b16 %v3755
    %v4389 = vunpack.c.l.b16 %v3756
    %v4390 = vunpack.c.h.b16 %v3756
    %v4391 = vunpack.c.l.b16 %v3757
    %v4392 = vunpack.c.h.b16 %v3757
    %v4393 = vunpack.c.l.b16 %v3758
    %v4394 = vunpack.c.h.b16 %v3758
    %v4395 = vunpack.c.l.b16 %v3759
    %v4396 = vunpack.c.h.b16 %v3759
    %v4397 = vunpack.c.l.b16 %v3760
    %v4398 = vunpack.c.h.b16 %v3760
    %v4399 = vunpack.c.l.b16 %v3761
    %v4400 = vunpack.c.h.b16 %v3761
    %v4401 = vunpack.c.l.b16 %v3762
    %v4402 = vunpack.c.h.b16 %v3762
    %v4403 = vunpack.c.l.b16 %v3763
    %v4404 = vunpack.c.h.b16 %v3763
    %v4405 = vunpack.c.l.b16 %v3764
    %v4406 = vunpack.c.h.b16 %v3764
    %v4407 = vunpack.c.l.b16 %v3765
    %v4408 = vunpack.c.h.b16 %v3765
    %v4409 = vunpack.c.l.b16 %v3766
    %v4410 = vunpack.c.h.b16 %v3766
    %v4411 = vunpack.c.l.b16 %v3767
    %v4412 = vunpack.c.h.b16 %v3767
    %v4413 = vunpack.c.l.b16 %v3768
    %v4414 = vunpack.c.h.b16 %v3768
    %v4415 = vunpack.c.l.b16 %v3769
    %v4416 = vunpack.c.h.b16 %v3769
    %v4417 = vunpack.c.l.b16 %v3770
    %v4418 = vunpack.c.h.b16 %v3770
    %v4419 = vunpack.c.l.b16 %v3771
    %v4420 = vunpack.c.h.b16 %v3771
    %v4421 = vunpack.c.l.b16 %v3772
    %v4422 = vunpack.c.h.b16 %v3772
    %v4423 = vunpack.c.l.b16 %v3773
    %v4424 = vunpack.c.h.b16 %v3773
    %v4425 = vunpack.c.l.b16 %v3774
    %v4426 = vunpack.c.h.b16 %v3774
    %v4427 = vunpack.c.l.b16 %v3775
    %v4428 = vunpack.c.h.b16 %v3775
    %v4429 = vunpack.c.l.b16 %v3776
    %v4430 = vunpack.c.h.b16 %v3776
    %v4431 = vunpack.c.l.b16 %v3777
    %v4432 = vunpack.c.h.b16 %v3777
    %v4433 = vunpack.c.l.b16 %v3778
    %v4434 = vunpack.c.h.b16 %v3778
    %v4435 = vunpack.c.l.b16 %v3779
    %v4436 = vunpack.c.h.b16 %v3779
    %v4437 = vunpack.c.l.b16 %v3780
    %v4438 = vunpack.c.h.b16 %v3780
    %v4439 = vpack.c.b16 %v4315, %v4311
    %v4440 = vpack.c.b16 %v4316, %v4312
    %v4441 = vpack.c.b16 %v4317, %v4313
    %v4442 = vpack.c.b16 %v4318, %v4314
    %v4443 = vpack.c.b16 %v4323, %v4319
    %v4444 = vpack.c.b16 %v4324, %v4320
    %v4445 = vpack.c.b16 %v4325, %v4321
    %v4446 = vpack.c.b16 %v4326, %v4322
    %v4447 = vpack.c.b16 %v4331, %v4327
    %v4448 = vpack.c.b16 %v4332, %v4328
    %v4449 = vpack.c.b16 %v4333, %v4329
    %v4450 = vpack.c.b16 %v4334, %v4330
    %v4451 = vpack.c.b16 %v4339, %v4335
    %v4452 = vpack.c.b16 %v4340, %v4336
    %v4453 = vpack.c.b16 %v4341, %v4337
    %v4454 = vpack.c.b16 %v4342, %v4338
    %v4455 = vpack.c.b16 %v4347, %v4343
    %v4456 = vpack.c.b16 %v4348, %v4344
    %v4457 = vpack.c.b16 %v4349, %v4345
    %v4458 = vpack.c.b16 %v4350, %v4346
    %v4459 = vpack.c.b16 %v4355, %v4351
    %v4460 = vpack.c.b16 %v4356, %v4352
    %v4461 = vpack.c.b16 %v4357, %v4353
    %v4462 = vpack.c.b16 %v4358, %v4354
    %v4463 = vpack.c.b16 %v4363, %v4359
    %v4464 = vpack.c.b16 %v4364, %v4360
    %v4465 = vpack.c.b16 %v4365, %v4361
    %v4466 = vpack.c.b16 %v4366, %v4362
    %v4467 = vpack.c.b16 %v4371, %v4367
    %v4468 = vpack.c.b16 %v4372, %v4368
    %v4469 = vpack.c.b16 %v4373, %v4369
    %v4470 = vpack.c.b16 %v4374, %v4370
    %v4471 = vpack.c.b16 %v4379, %v4375
    %v4472 = vpack.c.b16 %v4380, %v4376
    %v4473 = vpack.c.b16 %v4381, %v4377
    %v4474 = vpack.c.b16 %v4382, %v4378
    %v4475 = vpack.c.b16 %v4387, %v4383
    %v4476 = vpack.c.b16 %v4388, %v4384
    %v4477 = vpack.c.b16 %v4389, %v4385
    %v4478 = vpack.c.b16 %v4390, %v4386
    %v4479 = vpack.c.b16 %v4395, %v4391
    %v4480 = vpack.c.b16 %v4396, %v4392
    %v4481 = vpack.c.b16 %v4397, %v4393
    %v4482 = vpack.c.b16 %v4398, %v4394
    %v4483 = vpack.c.b16 %v4403, %v4399
    %v4484 = vpack.c.b16 %v4404, %v4400
    %v4485 = vpack.c.b16 %v4405, %v4401
    %v4486 = vpack.c.b16 %v4406, %v4402
    %v4487 = vpack.c.b16 %v4411, %v4407
    %v4488 = vpack.c.b16 %v4412, %v4408
    %v4489 = vpack.c.b16 %v4413, %v4409
    %v4490 = vpack.c.b16 %v4414, %v4410
    %v4491 = vpack.c.b16 %v4419, %v4415
    %v4492 = vpack.c.b16 %v4420, %v4416
    %v4493 = vpack.c.b16 %v4421, %v4417
    %v4494 = vpack.c.b16 %v4422, %v4418
    %v4495 = vpack.c.b16 %v4427, %v4423
    %v4496 = vpack.c.b16 %v4428, %v4424
    %v4497 = vpack.c.b16 %v4429, %v4425
    %v4498 = vpack.c.b16 %v4430, %v4426
    %v4499 = vpack.c.b16 %v4435, %v4431
    %v4500 = vpack.c.b16 %v4436, %v4432
    %v4501 = vpack.c.b16 %v4437, %v4433
    %v4502 = vpack.c.b16 %v4438, %v4434
    %4567 = vmatprep.subr.bf16.mxu0 %v4468
    %4568 = vmatpush1.bf16.msra.mxu0 %v4467
    %4569 = vmatprep.subr.bf16.mxu0 %v4464
    %4570 = vmatpush1.bf16.msra.mxu0 %v4463
    %4571 = vmatprep.subr.bf16.mxu0 %v4460
    %4572 = vmatpush1.bf16.msra.mxu0 %v4459
    %4573 = vmatprep.subr.bf16.mxu0 %v4456
    %4574 = vmatpush1.bf16.msra.mxu0 %v4455
    %4575 = vmatprep.subr.bf16.mxu0 %v4452
    %4576 = vmatpush1.bf16.msra.mxu0 %v4451
    %4577 = vmatprep.subr.bf16.mxu0 %v4448
    %4578 = vmatpush1.bf16.msra.mxu0 %v4447
    %4579 = vmatprep.subr.bf16.mxu0 %v4444
    %4580 = vmatpush1.bf16.msra.mxu0 %v4443
    %4581 = vmatprep.subr.bf16.mxu0 %v4440
    %4582 = vmatpush1.bf16.msra.mxu0 %v4439
    %4583 = vmatprep.subr.bf16.mxu0 %v4500
    %4584 = vmatpush2.bf16.msra.mxu0 %v4499
    %4585 = vmatprep.subr.bf16.mxu0 %v4496
    %4586 = vmatpush2.bf16.msra.mxu0 %v4495
    %4587 = vmatprep.subr.bf16.mxu0 %v4492
    %4588 = vmatpush2.bf16.msra.mxu0 %v4491
    %4589 = vmatprep.subr.bf16.mxu0 %v4488
    %4590 = vmatpush2.bf16.msra.mxu0 %v4487
    %4591 = vmatprep.subr.bf16.mxu0 %v4484
    %4592 = vmatpush2.bf16.msra.mxu0 %v4483
    %4593 = vmatprep.subr.bf16.mxu0 %v4480
    %4594 = vmatpush2.bf16.msra.mxu0 %v4479
    %4595 = vmatprep.subr.bf16.mxu0 %v4476
    %4596 = vmatpush2.bf16.msra.mxu0 %v4475
    %4597 = vmatprep.subr.bf16.mxu0 %v4472
    %4598 = vmatpush2.bf16.msra.mxu0 %v4471
    %4599 = vmatprep.mubr.bf16.mxu0 %v3716
    %4600 = vmatmul.mubr.bf16.gmra.mxu0 %v3715
    %v4601 = vpop.f32.mrf.mxu0
    %v4602 = vadd.f32 %v4200, %v4601
    %v4603 = vpop.f32.mrf.mxu0
    %v4604 = vadd.f32 %v4202, %v4603
    %v4605 = vpop.f32.mrf.mxu0
    %v4606 = vpop.f32.mrf.mxu0
    %4607 = vdwg.mxu0
    %4608 = vmatprep.subr.bf16.mxu0 %v4470
    %4609 = vmatpush1.bf16.msra.mxu0 %v4469
    %4610 = vmatprep.subr.bf16.mxu0 %v4466
    %4611 = vmatpush1.bf16.msra.mxu0 %v4465
    %4612 = vmatprep.subr.bf16.mxu0 %v4462
    %4613 = vmatpush1.bf16.msra.mxu0 %v4461
    %4614 = vmatprep.subr.bf16.mxu0 %v4458
    %4615 = vmatpush1.bf16.msra.mxu0 %v4457
    %4616 = vmatprep.subr.bf16.mxu0 %v4454
    %4617 = vmatpush1.bf16.msra.mxu0 %v4453
    %4618 = vmatprep.subr.bf16.mxu0 %v4450
    %4619 = vmatpush1.bf16.msra.mxu0 %v4449
    %4620 = vmatprep.subr.bf16.mxu0 %v4446
    %4621 = vmatpush1.bf16.msra.mxu0 %v4445
    %4622 = vmatprep.subr.bf16.mxu0 %v4442
    %4623 = vmatpush1.bf16.msra.mxu0 %v4441
    %4624 = vmatprep.subr.bf16.mxu0 %v4502
    %4625 = vmatpush2.bf16.msra.mxu0 %v4501
    %4626 = vmatprep.subr.bf16.mxu0 %v4498
    %4627 = vmatpush2.bf16.msra.mxu0 %v4497
    %4628 = vmatprep.subr.bf16.mxu0 %v4494
    %4629 = vmatpush2.bf16.msra.mxu0 %v4493
    %4630 = vmatprep.subr.bf16.mxu0 %v4490
    %4631 = vmatpush2.bf16.msra.mxu0 %v4489
    %4632 = vmatprep.subr.bf16.mxu0 %v4486
    %4633 = vmatpush2.bf16.msra.mxu0 %v4485
    %4634 = vmatprep.subr.bf16.mxu0 %v4482
    %4635 = vmatpush2.bf16.msra.mxu0 %v4481
    %4636 = vmatprep.subr.bf16.mxu0 %v4478
    %4637 = vmatpush2.bf16.msra.mxu0 %v4477
    %4638 = vmatprep.subr.bf16.mxu0 %v4474
    %4639 = vmatpush2.bf16.msra.mxu0 %v4473
    %4640 = vmatprep.mubr.bf16.mxu0 %v3716
    %4641 = vmatmul.mubr.bf16.gmra.mxu0 %v3715
    %v4642 = vpop.f32.mrf.mxu0
    %v4643 = vadd.f32 %v4241, %v4642
    %v4644 = vpop.f32.mrf.mxu0
    %v4645 = vadd.f32 %v4243, %v4644
    %v4646 = vpop.f32.mrf.mxu0
    %v4647 = vpop.f32.mrf.mxu0
    %4648 = vdwg.mxu0
    %v4649 = vld [vmem:[#allocation17] sm:$0xff]
    %v4650 = vld [vmem:[#allocation17 + $0x8] sm:$0xff]
    %v4651 = vld [vmem:[#allocation17 + $0x10] sm:$0xff]
    %v4652 = vld [vmem:[#allocation17 + $0x18] sm:$0xff]
    %v4653 = vld [vmem:[#allocation17 + $0x20] sm:$0xff]
    %v4654 = vld [vmem:[#allocation17 + $0x28] sm:$0xff]
    %v4655 = vld [vmem:[#allocation17 + $0x30] sm:$0xff]
    %v4656 = vld [vmem:[#allocation17 + $0x38] sm:$0xff]
    %v4657 = vld [vmem:[#allocation17 + $0x40] sm:$0xff]
    %v4658 = vld [vmem:[#allocation17 + $0x48] sm:$0xff]
    %v4659 = vld [vmem:[#allocation17 + $0x50] sm:$0xff]
    %v4660 = vld [vmem:[#allocation17 + $0x58] sm:$0xff]
    %v4661 = vld [vmem:[#allocation17 + $0x60] sm:$0xff]
    %v4662 = vld [vmem:[#allocation17 + $0x68] sm:$0xff]
    %v4663 = vld [vmem:[#allocation17 + $0x70] sm:$0xff]
    %v4664 = vld [vmem:[#allocation17 + $0x78] sm:$0xff]
    %v4665 = vld [vmem:[#allocation17 + $0x80] sm:$0xff]
    %v4666 = vld [vmem:[#allocation17 + $0x88] sm:$0xff]
    %v4667 = vld [vmem:[#allocation17 + $0x90] sm:$0xff]
    %v4668 = vld [vmem:[#allocation17 + $0x98] sm:$0xff]
    %v4669 = vld [vmem:[#allocation17 + $0xa0] sm:$0xff]
    %v4670 = vld [vmem:[#allocation17 + $0xa8] sm:$0xff]
    %v4671 = vld [vmem:[#allocation17 + $0xb0] sm:$0xff]
    %v4672 = vld [vmem:[#allocation17 + $0xb8] sm:$0xff]
    %v4673 = vld [vmem:[#allocation17 + $0xc0] sm:$0xff]
    %v4674 = vld [vmem:[#allocation17 + $0xc8] sm:$0xff]
    %v4675 = vld [vmem:[#allocation17 + $0xd0] sm:$0xff]
    %v4676 = vld [vmem:[#allocation17 + $0xd8] sm:$0xff]
    %v4677 = vld [vmem:[#allocation17 + $0xe0] sm:$0xff]
    %v4678 = vld [vmem:[#allocation17 + $0xe8] sm:$0xff]
    %v4679 = vld [vmem:[#allocation17 + $0xf0] sm:$0xff]
    %v4680 = vld [vmem:[#allocation17 + $0xf8] sm:$0xff]
    %v4713 = vunpack.c.l.b16 %v4649
    %v4714 = vunpack.c.h.b16 %v4649
    %v4715 = vunpack.c.l.b16 %v4650
    %v4716 = vunpack.c.h.b16 %v4650
    %v4717 = vunpack.c.l.b16 %v4651
    %v4718 = vunpack.c.h.b16 %v4651
    %v4719 = vunpack.c.l.b16 %v4652
    %v4720 = vunpack.c.h.b16 %v4652
    %v4721 = vunpack.c.l.b16 %v4653
    %v4722 = vunpack.c.h.b16 %v4653
    %v4723 = vunpack.c.l.b16 %v4654
    %v4724 = vunpack.c.h.b16 %v4654
    %v4725 = vunpack.c.l.b16 %v4655
    %v4726 = vunpack.c.h.b16 %v4655
    %v4727 = vunpack.c.l.b16 %v4656
    %v4728 = vunpack.c.h.b16 %v4656
    %v4729 = vunpack.c.l.b16 %v4657
    %v4730 = vunpack.c.h.b16 %v4657
    %v4731 = vunpack.c.l.b16 %v4658
    %v4732 = vunpack.c.h.b16 %v4658
    %v4733 = vunpack.c.l.b16 %v4659
    %v4734 = vunpack.c.h.b16 %v4659
    %v4735 = vunpack.c.l.b16 %v4660
    %v4736 = vunpack.c.h.b16 %v4660
    %v4737 = vunpack.c.l.b16 %v4661
    %v4738 = vunpack.c.h.b16 %v4661
    %v4739 = vunpack.c.l.b16 %v4662
    %v4740 = vunpack.c.h.b16 %v4662
    %v4741 = vunpack.c.l.b16 %v4663
    %v4742 = vunpack.c.h.b16 %v4663
    %v4743 = vunpack.c.l.b16 %v4664
    %v4744 = vunpack.c.h.b16 %v4664
    %v4745 = vunpack.c.l.b16 %v4665
    %v4746 = vunpack.c.h.b16 %v4665
    %v4747 = vunpack.c.l.b16 %v4666
    %v4748 = vunpack.c.h.b16 %v4666
    %v4749 = vunpack.c.l.b16 %v4667
    %v4750 = vunpack.c.h.b16 %v4667
    %v4751 = vunpack.c.l.b16 %v4668
    %v4752 = vunpack.c.h.b16 %v4668
    %v4753 = vunpack.c.l.b16 %v4669
    %v4754 = vunpack.c.h.b16 %v4669
    %v4755 = vunpack.c.l.b16 %v4670
    %v4756 = vunpack.c.h.b16 %v4670
    %v4757 = vunpack.c.l.b16 %v4671
    %v4758 = vunpack.c.h.b16 %v4671
    %v4759 = vunpack.c.l.b16 %v4672
    %v4760 = vunpack.c.h.b16 %v4672
    %v4761 = vunpack.c.l.b16 %v4673
    %v4762 = vunpack.c.h.b16 %v4673
    %v4763 = vunpack.c.l.b16 %v4674
    %v4764 = vunpack.c.h.b16 %v4674
    %v4765 = vunpack.c.l.b16 %v4675
    %v4766 = vunpack.c.h.b16 %v4675
    %v4767 = vunpack.c.l.b16 %v4676
    %v4768 = vunpack.c.h.b16 %v4676
    %v4769 = vunpack.c.l.b16 %v4677
    %v4770 = vunpack.c.h.b16 %v4677
    %v4771 = vunpack.c.l.b16 %v4678
    %v4772 = vunpack.c.h.b16 %v4678
    %v4773 = vunpack.c.l.b16 %v4679
    %v4774 = vunpack.c.h.b16 %v4679
    %v4775 = vunpack.c.l.b16 %v4680
    %v4776 = vunpack.c.h.b16 %v4680
    %v4777 = vpack.c.b16 %v4717, %v4713
    %v4778 = vpack.c.b16 %v4718, %v4714
    %v4779 = vpack.c.b16 %v4719, %v4715
    %v4780 = vpack.c.b16 %v4720, %v4716
    %v4781 = vpack.c.b16 %v4725, %v4721
    %v4782 = vpack.c.b16 %v4726, %v4722
    %v4783 = vpack.c.b16 %v4727, %v4723
    %v4784 = vpack.c.b16 %v4728, %v4724
    %v4785 = vpack.c.b16 %v4733, %v4729
    %v4786 = vpack.c.b16 %v4734, %v4730
    %v4787 = vpack.c.b16 %v4735, %v4731
    %v4788 = vpack.c.b16 %v4736, %v4732
    %v4789 = vpack.c.b16 %v4741, %v4737
    %v4790 = vpack.c.b16 %v4742, %v4738
    %v4791 = vpack.c.b16 %v4743, %v4739
    %v4792 = vpack.c.b16 %v4744, %v4740
    %v4793 = vpack.c.b16 %v4749, %v4745
    %v4794 = vpack.c.b16 %v4750, %v4746
    %v4795 = vpack.c.b16 %v4751, %v4747
    %v4796 = vpack.c.b16 %v4752, %v4748
    %v4797 = vpack.c.b16 %v4757, %v4753
    %v4798 = vpack.c.b16 %v4758, %v4754
    %v4799 = vpack.c.b16 %v4759, %v4755
    %v4800 = vpack.c.b16 %v4760, %v4756
    %v4801 = vpack.c.b16 %v4765, %v4761
    %v4802 = vpack.c.b16 %v4766, %v4762
    %v4803 = vpack.c.b16 %v4767, %v4763
    %v4804 = vpack.c.b16 %v4768, %v4764
    %v4805 = vpack.c.b16 %v4773, %v4769
    %v4806 = vpack.c.b16 %v4774, %v4770
    %v4807 = vpack.c.b16 %v4775, %v4771
    %v4808 = vpack.c.b16 %v4776, %v4772
    %4841 = vmatprep.subr.bf16.mxu0 %v4806
    %4842 = vmatpush1.bf16.msra.mxu0 %v4805
    %4843 = vmatprep.subr.bf16.mxu0 %v4802
    %4844 = vmatpush1.bf16.msra.mxu0 %v4801
    %4845 = vmatprep.subr.bf16.mxu0 %v4798
    %4846 = vmatpush1.bf16.msra.mxu0 %v4797
    %4847 = vmatprep.subr.bf16.mxu0 %v4794
    %4848 = vmatpush1.bf16.msra.mxu0 %v4793
    %4849 = vmatprep.subr.bf16.mxu0 %v4790
    %4850 = vmatpush1.bf16.msra.mxu0 %v4789
    %4851 = vmatprep.subr.bf16.mxu0 %v4786
    %4852 = vmatpush1.bf16.msra.mxu0 %v4785
    %4853 = vmatprep.subr.bf16.mxu0 %v4782
    %4854 = vmatpush1.bf16.msra.mxu0 %v4781
    %4855 = vmatprep.subr.bf16.mxu0 %v4778
    %4856 = vmatpush1.bf16.msra.mxu0 %v4777
    %4857 = vmatprep.subr.bf16.mxu0 0
    %4858 = vmatpush2.bf16.msra.mxu0 0
    %4859 = vmatprep.subr.bf16.mxu0 0
    %4860 = vmatpush2.bf16.msra.mxu0 0
    %4861 = vmatprep.subr.bf16.mxu0 0
    %4862 = vmatpush2.bf16.msra.mxu0 0
    %4863 = vmatprep.subr.bf16.mxu0 0
    %4864 = vmatpush2.bf16.msra.mxu0 0
    %4865 = vmatprep.subr.bf16.mxu0 0
    %4866 = vmatpush2.bf16.msra.mxu0 0
    %4867 = vmatprep.subr.bf16.mxu0 0
    %4868 = vmatpush2.bf16.msra.mxu0 0
    %4869 = vmatprep.subr.bf16.mxu0 0
    %4870 = vmatpush2.bf16.msra.mxu0 0
    %4871 = vmatprep.subr.bf16.mxu0 0
    %4872 = vmatpush2.bf16.msra.mxu0 0
    %4873 = vmatprep.mubr.bf16.mxu0 0
    %4874 = vmatmul.mubr.bf16.gmra.mxu0 %v1119
    %v4875 = vpop.f32.mrf.mxu0
    %v4876 = vadd.f32 0.0, %v4875
    %v4877 = vpop.f32.mrf.mxu0
    %v4878 = vadd.f32 0.0, %v4877
    %v4879 = vpop.f32.mrf.mxu0
    %v4880 = vpop.f32.mrf.mxu0
    %4881 = vdwg.mxu0
    %4882 = vmatprep.subr.bf16.mxu0 %v4808
    %4883 = vmatpush1.bf16.msra.mxu0 %v4807
    %4884 = vmatprep.subr.bf16.mxu0 %v4804
    %4885 = vmatpush1.bf16.msra.mxu0 %v4803
    %4886 = vmatprep.subr.bf16.mxu0 %v4800
    %4887 = vmatpush1.bf16.msra.mxu0 %v4799
    %4888 = vmatprep.subr.bf16.mxu0 %v4796
    %4889 = vmatpush1.bf16.msra.mxu0 %v4795
    %4890 = vmatprep.subr.bf16.mxu0 %v4792
    %4891 = vmatpush1.bf16.msra.mxu0 %v4791
    %4892 = vmatprep.subr.bf16.mxu0 %v4788
    %4893 = vmatpush1.bf16.msra.mxu0 %v4787
    %4894 = vmatprep.subr.bf16.mxu0 %v4784
    %4895 = vmatpush1.bf16.msra.mxu0 %v4783
    %4896 = vmatprep.subr.bf16.mxu0 %v4780
    %4897 = vmatpush1.bf16.msra.mxu0 %v4779
    %4898 = vmatprep.subr.bf16.mxu0 0
    %4899 = vmatpush2.bf16.msra.mxu0 0
    %4900 = vmatprep.subr.bf16.mxu0 0
    %4901 = vmatpush2.bf16.msra.mxu0 0
    %4902 = vmatprep.subr.bf16.mxu0 0
    %4903 = vmatpush2.bf16.msra.mxu0 0
    %4904 = vmatprep.subr.bf16.mxu0 0
    %4905 = vmatpush2.bf16.msra.mxu0 0
    %4906 = vmatprep.subr.bf16.mxu0 0
    %4907 = vmatpush2.bf16.msra.mxu0 0
    %4908 = vmatprep.subr.bf16.mxu0 0
    %4909 = vmatpush2.bf16.msra.mxu0 0
    %4910 = vmatprep.subr.bf16.mxu0 0
    %4911 = vmatpush2.bf16.msra.mxu0 0
    %4912 = vmatprep.subr.bf16.mxu0 0
    %4913 = vmatpush2.bf16.msra.mxu0 0
    %4914 = vmatprep.mubr.bf16.mxu0 0
    %4915 = vmatmul.mubr.bf16.gmra.mxu0 %v1119
    %v4916 = vpop.f32.mrf.mxu0
    %v4917 = vadd.f32 0.0, %v4916
    %v4918 = vpop.f32.mrf.mxu0
    %v4919 = vadd.f32 0.0, %v4918
    %v4920 = vpop.f32.mrf.mxu0
    %v4921 = vpop.f32.mrf.mxu0
    %4922 = vdwg.mxu0
    %v4923 = vadd.f32 %v4602, %v4876
    %v4924 = vadd.f32 %v4604, %v4878
    %v4925 = vadd.f32 %v4643, %v4917
    %v4926 = vadd.f32 %v4645, %v4919
    %v4927 = vld [vmem:[#allocation19] sm:$0xf]
    %v4929 = vlaneseq
    %v4930 = vshrl.u32 %v4929, 7
    %v4931 = vsub.s32 0, %v4930
    %v4932 = vrot.slane %v4927, %v4931
    %v4933 = vlaneseq
    %v4934 = vshrl.u32 %v4933, 7
    %v4935 = vsub.s32 1, %v4934
    %v4936 = vrot.slane %v4927, %v4935
    %v4937 = vlaneseq
    %v4938 = vshrl.u32 %v4937, 7
    %v4939 = vsub.s32 2, %v4938
    %v4940 = vrot.slane %v4927, %v4939
    %v4941 = vlaneseq
    %v4942 = vshrl.u32 %v4941, 7
    %v4943 = vsub.s32 3, %v4942
    %v4944 = vrot.slane %v4927, %v4943
    %v4949 = vadd.f32 %v4923, %v4932
    %v4950 = vadd.f32 %v4924, %v4936
    %v4951 = vadd.f32 %v4925, %v4940
    %v4952 = vadd.f32 %v4926, %v4944
    %4953 = vst [vmem:[#allocation20] sm:$0xff] %v4949
    %4954 = vst [vmem:[#allocation20 + $0x8] sm:$0xff] %v4950
    %4955 = vst [vmem:[#allocation20 + $0x10] sm:$0xff] %v4951
    %4956 = vst [vmem:[#allocation20 + $0x18] sm:$0xff] %v4952
    // Predicated region
    $region110: #{decoder_forward.1} parent=1 // pred_check
      _
    $region111: #{decoder_forward.1} parent=1 // pred_check_branch
      %4958 = sbr.rel (0) target = $region113
    $region112: #{decoder_forward.1} parent=1 // pred_region
      %s4960 = ssub.s32 512, 512
      %4961 = vsyncadd [#allocation4], %s4960
      %s4963 = sshll.u32 [#allocation20], 4
      %s4964 = int_to_ptr.vmem [resolvable:$true] %s4963
      %4966 = dma.vmem_to_hbm [thread:$0]  %s4964, 512, %s16, [#allocation4]
    $region113: #{decoder_forward.1} parent=1 // pred_fallthru
      _
    // Predicated region
    $region114: #{decoder_forward.1} parent=1 // pred_check
      _
    $region115: #{decoder_forward.1} parent=1 // pred_check_branch
      %4968 = sbr.rel (0) target = $region117
    $region116: #{decoder_forward.1} parent=1 // pred_region
      %s4970 = ssub.s32 256, 256
      %4971 = vsyncadd [#allocation22], %s4970
      %s4972 = sshll.u32 [#allocation21], 4
      %s4973 = int_to_ptr.vmem [resolvable:$true] %s4972
      %4978 = dma.vmem_to_hbm [thread:$0]  %s4973, 256, %s17, [#allocation22], 128, 128, 8
    $region117: #{decoder_forward.1} parent=1 // pred_fallthru
      _
    // Predicated region
    $region118: #{decoder_forward.1} parent=1 // pred_check
      _
    $region119: #{decoder_forward.1} parent=1 // pred_check_branch
      %4980 = sbr.rel (0) target = $region121
    $region120: #{decoder_forward.1} parent=1 // pred_region
      %s4982 = ssub.s32 256, 256
      %4983 = vsyncadd [#allocation22], %s4982
      %s4984 = sshll.u32 [#allocation23], 4
      %s4985 = int_to_ptr.vmem [resolvable:$true] %s4984
      %4990 = dma.vmem_to_hbm [thread:$0]  %s4985, 256, %s18, [#allocation22], 128, 128, 8
    $region121: #{decoder_forward.1} parent=1 // pred_fallthru
      _
    // Predicated region
    $region122: #{decoder_forward.1} parent=1 // pred_check
      _
    $region123: #{decoder_forward.1} parent=1 // pred_check_branch
      %4992 = sbr.rel (0) target = $region125
    $region124: #{decoder_forward.1} parent=1 // pred_region
      %s4994 = ssub.s32 128, 128
      %4995 = vsyncadd [#allocation25], %s4994
      %s4997 = sshll.u32 [#allocation24], 4
      %s4998 = int_to_ptr.vmem [resolvable:$true] %s4997
      %5000 = dma.vmem_to_hbm [thread:$0]  %s4998, 128, %s19, [#allocation25]
    $region125: #{decoder_forward.1} parent=1 // pred_fallthru
      _
    // Predicated region
    $region126: #{decoder_forward.1} parent=1 // pred_check
      _
    $region127: #{decoder_forward.1} parent=1 // pred_check_branch
      %5002 = sbr.rel (0) target = $region129
    $region128: #{decoder_forward.1} parent=1 // pred_region
      %5003 = dma.done [#allocation4], 512
    $region129: #{decoder_forward.1} parent=1 // pred_fallthru
      _
    // Predicated region
    $region130: #{decoder_forward.1} parent=1 // pred_check
      _
    $region131: #{decoder_forward.1} parent=1 // pred_check_branch
      %5005 = sbr.rel (0) target = $region133
    $region132: #{decoder_forward.1} parent=1 // pred_region
      %5006 = dma.done [#allocation22], 256
    $region133: #{decoder_forward.1} parent=1 // pred_fallthru
      _
    // Predicated region
    $region134: #{decoder_forward.1} parent=1 // pred_check
      _
    $region135: #{decoder_forward.1} parent=1 // pred_check_branch
      %5008 = sbr.rel (0) target = $region137
    $region136: #{decoder_forward.1} parent=1 // pred_region
      %5009 = dma.done [#allocation22], 256
    $region137: #{decoder_forward.1} parent=1 // pred_fallthru
      _
    // Predicated region
    $region138: #{decoder_forward.1} parent=1 // pred_check
      _
    $region139: #{decoder_forward.1} parent=1 // pred_check_branch
      %5011 = sbr.rel (0) target = $region141
    $region140: #{decoder_forward.1} parent=1 // pred_region
      %5012 = dma.done [#allocation25], 128
    $region141: #{decoder_forward.1} parent=1 // pred_fallthru
      _
    %5013 = vsyncpa [#allocation3], 1
    %5014 = vsyncpa [#allocation6], 1
    %5015 = vsyncpa [#allocation9], 1
    %5016 = vsyncpa [#allocation12], 1
    %5017 = vsyncpa [#allocation15], 1
    %5018 = vsyncpa [#allocation18], 1
    %5019 = vsyncpa [#allocation4], 1
    %5020 = vsyncpa [#allocation22], 1
    %5021 = vsyncpa [#allocation25], 1

</llo_original>
